<compile_context>
chip_gen: v5e
topology: v5e:2x2
jax: 0.10.0
libtpu: 0.0.40
codegen_flags: <defaults>
</compile_context>

<pallas_src>
import functools

import jax
import jax.numpy as jnp
import numpy as np
from jax.experimental import pallas as pl
from jax.experimental.pallas import tpu as pltpu

EPS = 1e-12  # matches torch.nn.functional.normalize default eps


def _l2norm(x, axis=-1):
    # x / max(||x||, eps)  ==  x * rsqrt(max(||x||^2, eps^2))   (EUP rsqrt)
    ss = jnp.sum(x * x, axis=axis, keepdims=True)
    return x * jax.lax.rsqrt(jnp.maximum(ss, EPS * EPS))


def _mm(a, b):
    # bf16 MXU operands, f32 accumulation -- the kernel's precision policy;
    # the reference uses the same helper so the correctness check is tight.
    return jnp.dot(a.astype(jnp.bfloat16), b.astype(jnp.bfloat16),
                   preferred_element_type=jnp.float32)


def _round_up(x, m):
    return ((x + m - 1) // m) * m


# ----------------------------------------------------------------------------
# Fused Pallas kernel.
#   grid = (batch_blocks, depth); b-axis "parallel", layer-axis "arbitrary".
#   One grid step = one transformer layer applied to BT images' tokens,
#   flattened to an (M, D) slab with M = BT * num_patches.  Layer 0 also does
#   the patch embedding; the last layer also does mean-pool + classifier head.
#   The token slab lives in a VMEM scratch carried across the layer axis.
# ----------------------------------------------------------------------------

def nvit_fused_kernel(patch_ref, w_embed_ref, pos_ref,
                      wqkv_ref, qsc_ref, ksc_ref, woa_ref, aa_ref,
                      whg_ref, hgsc_ref, wof_ref, fa_ref,
                      pool_ref, wp_ref, ls_ref,
                      out_ref, tok_ref,
                      *, heads, dim_head, tokens_per_image, images_per_block,
                      ff_inner_padded):
    f32, bf16 = jnp.float32, jnp.bfloat16
    H, Dh = heads, dim_head
    E = H * Dh
    N, BT = tokens_per_image, images_per_block
    Dip = ff_inner_padded
    l = pl.program_id(1)
    last = pl.num_programs(1) - 1

    # --- patch embedding (first layer step only) -------------------------------
    @pl.when(l == 0)
    def _():
        emb = jnp.dot(patch_ref[...], w_embed_ref[...],
                      preferred_element_type=f32)                    # (M, D)
        tok_ref[...] = _l2norm(emb + pos_ref[...])

    tok = tok_ref[...]                                               # (M, D) f32

    # --- attention --------------------------------------------------------------
    t16 = tok.astype(bf16)
    # Fused QKV projection: one (M, D) @ (D, 3E) matmul; q/k/v + heads are
    # static lane slices of the result.
    qkv = jnp.dot(t16, wqkv_ref[0], preferred_element_type=f32)      # (M, 3E)
    qs, ks = qsc_ref[0], ksc_ref[0]                                  # (1, E)
    head_outs = []
    for h in range(H):                                               # static unroll
        lo, hi = h * Dh, (h + 1) * Dh
        q = _l2norm(qkv[:, lo:hi]) * qs[:, lo:hi]
        k = _l2norm(qkv[:, E + lo:E + hi]) * ks[:, lo:hi]
        v = qkv[:, 2 * E + lo:2 * E + hi]
        qb = q.astype(bf16).reshape(BT, N, Dh)
        kb = k.astype(bf16).reshape(BT, N, Dh)
        vb = v.astype(bf16).reshape(BT, N, Dh)
        s = jnp.einsum("bnd,bmd->bnm", qb, kb,
                       preferred_element_type=f32)                   # (BT, N, N)
        # max-subtraction: safe for arbitrary (learned) q/k scales
        s = s - jnp.max(s, axis=-1, keepdims=True)
        p = jnp.exp(s)
        p = p * pl.reciprocal(jnp.sum(p, axis=-1, keepdims=True), approx=True)
        o = jnp.einsum("bnm,bmd->bnd", p.astype(bf16), vb,
                       preferred_element_type=f32)                   # (BT, N, Dh)
        head_outs.append(o.reshape(BT * N, Dh).astype(bf16))
    # Fused head-output projection: one (M, E) @ (E, D) matmul.
    o_slab = jnp.concatenate(head_outs, axis=-1)                     # (M, E) bf16
    attn = _l2norm(jnp.dot(o_slab, woa_ref[0], preferred_element_type=f32))
    tok = _l2norm(tok + aa_ref[0] * (attn - tok))                    # lerp + l2norm

    # --- feed-forward (SwiGLU), fused hidden|gate projection --------------------
    t16 = tok.astype(bf16)
    hg = jnp.dot(t16, whg_ref[0], preferred_element_type=f32) * hgsc_ref[0]  # (M, 2*Dip)
    hid, gate = hg[:, :Dip], hg[:, Dip:]                 # gate scale has sqrt(D) folded in
    act = (gate * jax.nn.sigmoid(gate) * hid).astype(bf16)           # silu(gate)*hidden
    ffo = _l2norm(jnp.dot(act, wof_ref[0], preferred_element_type=f32))
    tok = _l2norm(tok + fa_ref[0] * (ffo - tok))
    tok_ref[...] = tok

    # --- mean pool (as MXU matmul) + classifier head (last layer step only) -----
    @pl.when(l == last)
    def _():
        pooled = jnp.dot(pool_ref[...], tok, preferred_element_type=f32)   # (BT, D) f32
        logits = jnp.dot(pooled.astype(bf16), wp_ref[...],
                         preferred_element_type=f32)                        # (BT, Cp)
        out_ref[...] = logits * ls_ref[...]                # logit_scale*sqrt(D) folded in


# ----------------------------------------------------------------------------
# pallas_call wrapper
# ----------------------------------------------------------------------------

def extract_patches(images, patch_size):
    # 'b c (h p1) (w p2) -> b (h w) (c p1 p2)'
    B, C, Hh, Ww = images.shape
    p = patch_size
    h, w = Hh // p, Ww // p
    x = images.reshape(B, C, h, p, w, p)
    x = x.transpose(0, 2, 4, 1, 3, 5)
    return x.reshape(B, h * w, C * p * p)


def nvit_forward(images, kp, cfg, *, images_per_block=8):
    patches = extract_patches(images, cfg["patch_size"])            # (B, N, P) f32
    B, N, P = patches.shape
    D, L = cfg["dim"], cfg["depth"]
    H, Dh = cfg["heads"], cfg["dim_head"]
    E = H * Dh
    Dip = kp["whg_T"].shape[-1] // 2
    Cp = kp["w_pred_T"].shape[-1]

    BT = min(images_per_block, B)
    assert B % BT == 0, "batch must be divisible by images_per_block"
    n_blocks = B // BT
    M = BT * N                                                       # token rows / grid step

    patches_flat = patches.reshape(B * N, P).astype(jnp.bfloat16)    # pre-cast: halve DMA
    pos_tiled = jnp.tile(kp["pos_emb"], (BT, 1))                     # (M, D) f32
    # Block-diagonal mean-pool matrix: pooled = pool_mat @ tokens  (MXU, not XLU)
    pool_mat = jnp.kron(jnp.eye(BT, dtype=jnp.float32),
                        jnp.full((1, N), 1.0 / N, jnp.float32))      # (BT, M) f32

    def rep(shape):
        # grid-invariant block with constant index_map -> stays VMEM-resident
        zeros = (0,) * len(shape)
        return pl.BlockSpec(shape, lambda b, l: zeros)

    def per_layer(shape):
        # per-layer weight: streamed / double-buffered along the "arbitrary" axis
        zeros = (0,) * len(shape)
        return pl.BlockSpec((1,) + tuple(shape), lambda b, l: (l,) + zeros)

    kern = functools.partial(
        nvit_fused_kernel, heads=H, dim_head=Dh, tokens_per_image=N,
        images_per_block=BT, ff_inner_padded=Dip)

    out = pl.pallas_call(
        kern,
        out_shape=jax.ShapeDtypeStruct((B, Cp), jnp.float32),
        grid_spec=pltpu.PrefetchScalarGridSpec(
            num_scalar_prefetch=0,
            grid=(n_blocks, L),
            in_specs=[
                pl.BlockSpec((M, P), lambda b, l: (b, 0)),  # flattened patch tokens (bf16)
                rep((P, D)),                 # w_embed_T            bf16
                rep((M, D)),                 # pos_emb (tiled)      f32
                per_layer((D, 3 * E)),       # [wq|wk|wv]_T         bf16
                per_layer((1, E)),           # q_scale (lane vec)   f32
                per_layer((1, E)),           # k_scale (lane vec)   f32
                per_layer((E, D)),           # wo_attn_T            bf16
                per_layer((1, D)),           # attn lerp alpha      f32
                per_layer((D, 2 * Dip)),     # [wh|wg]_T (padded)   bf16
                per_layer((1, 2 * Dip)),     # [hid|gate*sqrtD] sc  f32
                per_layer((Dip, D)),         # wo_ff_T (padded)     bf16
                per_layer((1, D)),           # ff lerp alpha        f32
                rep((BT, M)),                # mean-pool matrix     f32
                rep((D, Cp)),                # w_pred_T (padded)    bf16
                rep((1, Cp)),                # logit_scale*sqrtD    f32
            ],
            out_specs=pl.BlockSpec((BT, Cp), lambda b, l: (b, 0)),
            scratch_shapes=[pltpu.VMEM((M, D), jnp.float32)],        # token slab carry
        ),
        compiler_params=pltpu.CompilerParams(
            dimension_semantics=("parallel", "arbitrary"),
            vmem_limit_bytes=32 * 1024 * 1024),
    )(patches_flat, kp["w_embed_T"], pos_tiled,
      kp["wqkv_T"], kp["q_scale"], kp["k_scale"], kp["wo_attn_T"],
      kp["attn_alpha"], kp["whg_T"], kp["hg_scale"], kp["wo_ff_T"],
      kp["ff_alpha"], pool_mat, kp["w_pred_T"], kp["logit_scale_p"])
    return out[:, :cfg["num_classes"]]


# ----------------------------------------------------------------------------
# Parameters (torch-layout, NormLinear parametrization applied) + kernel pack
# ----------------------------------------------------------------------------

def init_params(key, cfg):
    C, P = cfg["channels"], cfg["patch_size"]
    D, depth = cfg["dim"], cfg["depth"]
    H, Dh = cfg["heads"], cfg["dim_head"]
    E = H * Dh
    patch_dim = C * P * P
    num_patches = (cfg["image_size"] // P) ** 2
    ff_inner = int(cfg["mlp_dim"] * 2 / 3)
    num_classes = cfg["num_classes"]

    keys = iter(jax.random.split(key, 3 + depth * 7))

    def nrm(shape, axis):
        w = jax.random.normal(next(keys), shape, dtype=jnp.float32)
        return _l2norm(w, axis=axis)        # NormLinear parametrization

    params = {
        "w_embed": nrm((D, patch_dim), 0),          # norm_dim_in=False -> axis 0
        "pos_emb": nrm((num_patches, D), -1),       # abs_pos_emb.weight (normed)
        "w_pred": nrm((num_classes, D), -1),
        "logit_scale": jnp.ones((num_classes,), jnp.float32),
        "layers": [],
    }
    # (init / scale) * scale == init == 1/depth  (effective lerp factor stored)
    alpha = jnp.full((D,), 1.0 / depth, jnp.float32)
    for _ in range(depth):
        params["layers"].append({
            "wq": nrm((E, D), -1),
            "wk": nrm((E, D), -1),
            "wv": nrm((E, D), -1),
            "q_scale": jnp.full((H, 1, Dh), Dh ** 0.25, jnp.float32),
            "k_scale": jnp.full((H, 1, Dh), Dh ** 0.25, jnp.float32),
            "wo_attn": nrm((D, E), 0),
            "wh": nrm((ff_inner, D), -1),
            "wg": nrm((ff_inner, D), -1),
            "hidden_scale": jnp.ones((ff_inner,), jnp.float32),
            "gate_scale": jnp.ones((ff_inner,), jnp.float32),
            "wo_ff": nrm((D, ff_inner), 0),
            "attn_alpha": alpha,
            "ff_alpha": alpha,
        })
    return params


def pack_for_kernel(params, cfg):
    """Host-side layout plumbing: transpose / fuse / zero-pad / fold scalars / bf16."""
    bf16 = jnp.bfloat16
    D, L = cfg["dim"], cfg["depth"]
    H, Dh = cfg["heads"], cfg["dim_head"]
    E = H * Dh
    C = cfg["num_classes"]
    scale = float(D) ** 0.5
    Di = params["layers"][0]["wh"].shape[0]
    Dip = _round_up(Di, 64)     # 42 -> 64 : lane-friendly, zero-padded (exact)
    Cp = _round_up(C, 128)      # 10 -> 128: lane-dense kernel output

    def stack(name):
        return jnp.stack([lyr[name] for lyr in params["layers"]])

    def pad_last(x, tgt):
        return jnp.pad(x, [(0, 0)] * (x.ndim - 1) + [(0, tgt - x.shape[-1])])

    # fused QKV: x @ [wq.T | wk.T | wv.T]; within each block column order is (h d)
    wq_T = stack("wq").transpose(0, 2, 1)                             # (L, D, E)
    wk_T = stack("wk").transpose(0, 2, 1)
    wv_T = stack("wv").transpose(0, 2, 1)
    wqkv_T = jnp.concatenate([wq_T, wk_T, wv_T], axis=-1).astype(bf16)  # (L, D, 3E)

    q_scale = stack("q_scale").reshape(L, 1, E)                       # lane order (h d)
    k_scale = stack("k_scale").reshape(L, 1, E)

    wo_attn_T = stack("wo_attn").transpose(0, 2, 1).astype(bf16)      # (L, E, D)

    # fused SwiGLU hidden|gate projection, zero-padded to Dip lanes each
    wh_T = pad_last(stack("wh").transpose(0, 2, 1), Dip)              # (L, D, Dip)
    wg_T = pad_last(stack("wg").transpose(0, 2, 1), Dip)
    whg_T = jnp.concatenate([wh_T, wg_T], axis=-1).astype(bf16)       # (L, D, 2*Dip)
    hs = pad_last(stack("hidden_scale"), Dip)                         # (L, Dip)
    gs = pad_last(stack("gate_scale") * scale, Dip)                   # fold sqrt(D)
    hg_scale = jnp.concatenate([hs, gs], axis=-1)[:, None, :]         # (L, 1, 2*Dip)

    wo_ff_T = stack("wo_ff").transpose(0, 2, 1)                       # (L, Di, D)
    wo_ff_T = jnp.pad(wo_ff_T, ((0, 0), (0, Dip - Di), (0, 0))).astype(bf16)

    w_pred_T = pad_last(params["w_pred"].T, Cp).astype(bf16)          # (D, Cp)
    logit_scale_p = pad_last(params["logit_scale"][None, :] * scale, Cp)  # fold sqrt(D)

    # Padding correctness: padded scale lanes MUST be exactly zero (review item).
    assert float(jnp.abs(hg_scale[..., Di:Dip]).max()) == 0.0
    assert float(jnp.abs(hg_scale[..., Dip + Di:]).max()) == 0.0
    assert float(jnp.abs(logit_scale_p[..., C:]).max()) == 0.0

    return dict(
        w_embed_T=params["w_embed"].T.astype(bf16),                   # (P, D)
        pos_emb=params["pos_emb"],                                    # (N, D) f32
        wqkv_T=wqkv_T, q_scale=q_scale, k_scale=k_scale,
        wo_attn_T=wo_attn_T,
        attn_alpha=stack("attn_alpha")[:, None, :],                   # (L, 1, D)
        whg_T=whg_T, hg_scale=hg_scale, wo_ff_T=wo_ff_T,
        ff_alpha=stack("ff_alpha")[:, None, :],
        w_pred_T=w_pred_T, logit_scale_p=logit_scale_p,
    )


# ----------------------------------------------------------------------------
# Pure-JAX reference (mirrors the PyTorch forward; same bf16 matmul policy)
# ----------------------------------------------------------------------------

def reference_forward(images, params, cfg):
    B = images.shape[0]
    H, Dh = cfg["heads"], cfg["dim_head"]
    scale = float(cfg["dim"]) ** 0.5
    patches = extract_patches(images, cfg["patch_size"])
    tokens = _l2norm(_mm(patches, params["w_embed"].T) + params["pos_emb"])
    for layer in params["layers"]:
        t = tokens
        q = _mm(t, layer["wq"].T)
        k = _mm(t, layer["wk"].T)
        v = _mm(t, layer["wv"].T)

        def split(x):
            return x.reshape(B, -1, H, Dh).transpose(0, 2, 1, 3)

        q, k, v = split(q), split(k), split(v)
        q = _l2norm(q) * layer["q_scale"][None]
        k = _l2norm(k) * layer["k_scale"][None]
        s = jnp.einsum("bhnd,bhmd->bhnm",
                       q.astype(jnp.bfloat16), k.astype(jnp.bfloat16),
                       preferred_element_type=jnp.float32)
        p = jax.nn.softmax(s, axis=-1)
        o = jnp.einsum("bhnm,bhmd->bhnd",
                       p.astype(jnp.bfloat16), v.astype(jnp.bfloat16),
                       preferred_element_type=jnp.float32)
        o = o.transpose(0, 2, 1, 3).reshape(B, -1, H * Dh)
        attn_out = _l2norm(_mm(o, layer["wo_attn"].T))
        tokens = _l2norm(t + layer["attn_alpha"] * (attn_out - t))

        t = tokens
        hid = _mm(t, layer["wh"].T) * layer["hidden_scale"]
        gate = _mm(t, layer["wg"].T) * layer["gate_scale"] * scale
        hid = jax.nn.silu(gate) * hid
        ff_out = _l2norm(_mm(hid, layer["wo_ff"].T))
        tokens = _l2norm(t + layer["ff_alpha"] * (ff_out - t))
    pooled = tokens.mean(axis=1)
    logits = _mm(pooled, params["w_pred"].T) * params["logit_scale"] * scale
    return logits


if __name__ == "__main__":
    cfg = dict(
        image_size=16,
        patch_size=4,
        num_classes=10,
        dim=32,
        depth=2,
        heads=2,
        dim_head=16,
        mlp_dim=64,
        channels=3,
    )
    key = jax.random.PRNGKey(0)
    k_img, k_par = jax.random.split(key)
    B = 16            # 2 batch blocks of 8 images -> 128 token rows per grid step
    images = jax.random.normal(
        k_img, (B, cfg["channels"], cfg["image_size"], cfg["image_size"]),
        dtype=jnp.float32)
    params = init_params(k_par, cfg)
    kparams = pack_for_kernel(params, cfg)

    fwd = jax.jit(lambda imgs: nvit_forward(imgs, kparams, cfg, images_per_block=8))
    logits = jax.block_until_ready(fwd(images))

    ref = jax.block_until_ready(reference_forward(images, params, cfg))
    assert logits.shape == (B, cfg["num_classes"])
    assert bool(jnp.all(jnp.isfinite(logits)))
    # Tolerance accounts for the EUP approx reciprocal (softmax) and rsqrt
    # (l2norm) inside the kernel; matmul precision matches the reference.
    np.testing.assert_allclose(np.asarray(logits), np.asarray(ref),
                               rtol=1e-2, atol=1e-2)
    print("KERNEL_OK")
</pallas_src>

<mosaic_0001>
module attributes {stable_mosaic.version = 11 : i64} {
  func.func @nvit_fused_kernel(%arg0: i32, %arg1: i32, %arg2: memref<128x48xbf16, #tpu.memory_space<vmem>>, %arg3: memref<48x32xbf16, #tpu.memory_space<vmem>>, %arg4: memref<128x32xf32, #tpu.memory_space<vmem>>, %arg5: memref<1x32x96xbf16, #tpu.memory_space<vmem>>, %arg6: memref<1x1x32xf32, #tpu.memory_space<vmem>>, %arg7: memref<1x1x32xf32, #tpu.memory_space<vmem>>, %arg8: memref<1x32x32xbf16, #tpu.memory_space<vmem>>, %arg9: memref<1x1x32xf32, #tpu.memory_space<vmem>>, %arg10: memref<1x32x128xbf16, #tpu.memory_space<vmem>>, %arg11: memref<1x1x128xf32, #tpu.memory_space<vmem>>, %arg12: memref<1x64x32xbf16, #tpu.memory_space<vmem>>, %arg13: memref<1x1x32xf32, #tpu.memory_space<vmem>>, %arg14: memref<8x128xf32, #tpu.memory_space<vmem>>, %arg15: memref<32x128xbf16, #tpu.memory_space<vmem>>, %arg16: memref<1x128xf32, #tpu.memory_space<vmem>>, %arg17: memref<8x128xf32, #tpu.memory_space<vmem>>, %arg18: memref<128x32xf32, #tpu.memory_space<vmem>>) attributes {dimension_semantics = [#tpu.dimension_semantics<parallel>, #tpu.dimension_semantics<arbitrary>], iteration_bounds = array<i64: 2, 2>, scalar_prefetch = 0 : i64, scratch_operands = 1 : i64, tpu.core_type = #tpu.core_type<tc>, window_params = [{transform_indices = @transform_0, window_bounds = array<i64: 128, 48>}, {pipeline_mode = #tpu.pipeline_mode<synchronous>, transform_indices = @transform_1, window_bounds = array<i64: 48, 32>}, {pipeline_mode = #tpu.pipeline_mode<synchronous>, transform_indices = @transform_2, window_bounds = array<i64: 128, 32>}, {transform_indices = @transform_3, window_bounds = array<i64: 1, 32, 96>}, {transform_indices = @transform_4, window_bounds = array<i64: 1, 1, 32>}, {transform_indices = @transform_5, window_bounds = array<i64: 1, 1, 32>}, {transform_indices = @transform_6, window_bounds = array<i64: 1, 32, 32>}, {transform_indices = @transform_7, window_bounds = array<i64: 1, 1, 32>}, {transform_indices = @transform_8, window_bounds = array<i64: 1, 32, 128>}, {transform_indices = @transform_9, window_bounds = array<i64: 1, 1, 128>}, {transform_indices = @transform_10, window_bounds = array<i64: 1, 64, 32>}, {transform_indices = @transform_11, window_bounds = array<i64: 1, 1, 32>}, {pipeline_mode = #tpu.pipeline_mode<synchronous>, transform_indices = @transform_12, window_bounds = array<i64: 8, 128>}, {pipeline_mode = #tpu.pipeline_mode<synchronous>, transform_indices = @transform_13, window_bounds = array<i64: 32, 128>}, {pipeline_mode = #tpu.pipeline_mode<synchronous>, transform_indices = @transform_14, window_bounds = array<i64: 1, 128>}, {transform_indices = @transform_15, window_bounds = array<i64: 8, 128>}]} {
    %c0_i32 = arith.constant 0 : i32
    %0 = arith.cmpi eq, %arg1, %c0_i32 : i32
    %1 = arith.extui %0 : i1 to i32
    %c0_i32_0 = arith.constant 0 : i32
    %2 = arith.cmpi ne, %1, %c0_i32_0 : i32
    scf.if %2 {
      %c0_60 = arith.constant 0 : index
      %c0_61 = arith.constant 0 : index
      %177 = vector.load %arg2[%c0_60, %c0_61] : memref<128x48xbf16, #tpu.memory_space<vmem>>, vector<128x48xbf16>
      %c0_62 = arith.constant 0 : index
      %c0_63 = arith.constant 0 : index
      %178 = vector.load %arg3[%c0_62, %c0_63] : memref<48x32xbf16, #tpu.memory_space<vmem>>, vector<48x32xbf16>
      %cst_64 = arith.constant dense<0.000000e+00> : vector<128x32xf32>
      %179 = tpu.matmul %177, %178, %cst_64 {dimension_numbers = #tpu.dot_dimension_numbers<[1], [0], [0], [1], [0, 0, 1, 1], [], []>} : vector<128x48xbf16>, vector<48x32xbf16>, vector<128x32xf32> -> vector<128x32xf32>
      %c0_65 = arith.constant 0 : index
      %c0_66 = arith.constant 0 : index
      %180 = vector.load %arg4[%c0_65, %c0_66] : memref<128x32xf32, #tpu.memory_space<vmem>>, vector<128x32xf32>
      %181 = arith.addf %179, %180 : vector<128x32xf32>
      %182 = arith.mulf %181, %181 : vector<128x32xf32>
      %cst_67 = arith.constant dense<0.000000e+00> : vector<128xf32>
      %183 = vector.multi_reduction <add>, %182, %cst_67 [1] : vector<128x32xf32> to vector<128xf32>
      %184 = vector.shape_cast %183 : vector<128xf32> to vector<128x1xf32>
      %cst_68 = arith.constant 1.000000e-24 : f32
      %185 = vector.broadcast %cst_68 : f32 to vector<128x1xf32>
      %186 = arith.maximumf %184, %185 : vector<128x1xf32>
      %187 = math.rsqrt %186 : vector<128x1xf32>
      %188 = vector.broadcast %187 : vector<128x1xf32> to vector<128x32xf32>
      %189 = arith.mulf %181, %188 : vector<128x32xf32>
      %c0_69 = arith.constant 0 : index
      %c0_70 = arith.constant 0 : index
      %190 = vector.load %arg18[%c0_69, %c0_70] : memref<128x32xf32, #tpu.memory_space<vmem>>, vector<128x32xf32>
      tpu.vector_store %arg18[%c0_69, %c0_70], %189 {strides = array<i32>} : memref<128x32xf32, #tpu.memory_space<vmem>>, vector<128x32xf32>,
    } else {
    }
    %c0 = arith.constant 0 : index
    %c0_1 = arith.constant 0 : index
    %3 = vector.load %arg18[%c0, %c0_1] : memref<128x32xf32, #tpu.memory_space<vmem>>, vector<128x32xf32>
    %4 = arith.truncf %3 : vector<128x32xf32> to vector<128x32xbf16>
    %c0_2 = arith.constant 0 : index
    %c0_3 = arith.constant 0 : index
    %c0_4 = arith.constant 0 : index
    %5 = vector.load %arg5[%c0_2, %c0_3, %c0_4] : memref<1x32x96xbf16, #tpu.memory_space<vmem>>, vector<1x32x96xbf16>
    %6 = vector.shape_cast %5 : vector<1x32x96xbf16> to vector<32x96xbf16>
    %cst = arith.constant dense<0.000000e+00> : vector<128x96xf32>
    %7 = tpu.matmul %4, %6, %cst {dimension_numbers = #tpu.dot_dimension_numbers<[1], [0], [0], [1], [0, 0, 1, 1], [], []>} : vector<128x32xbf16>, vector<32x96xbf16>, vector<128x96xf32> -> vector<128x96xf32>
    %c0_5 = arith.constant 0 : index
    %c0_6 = arith.constant 0 : index
    %c0_7 = arith.constant 0 : index
    %8 = vector.load %arg6[%c0_5, %c0_6, %c0_7] : memref<1x1x32xf32, #tpu.memory_space<vmem>>, vector<1x1x32xf32>
    %9 = vector.shape_cast %8 : vector<1x1x32xf32> to vector<1x32xf32>
    %c0_8 = arith.constant 0 : index
    %c0_9 = arith.constant 0 : index
    %c0_10 = arith.constant 0 : index
    %10 = vector.load %arg7[%c0_8, %c0_9, %c0_10] : memref<1x1x32xf32, #tpu.memory_space<vmem>>, vector<1x1x32xf32>
    %11 = vector.shape_cast %10 : vector<1x1x32xf32> to vector<1x32xf32>
    %12 = vector.extract_strided_slice %7 {offsets = [0, 0], sizes = [128, 16], strides = [1, 1]} : vector<128x96xf32> to vector<128x16xf32>
    %13 = arith.mulf %12, %12 : vector<128x16xf32>
    %cst_11 = arith.constant dense<0.000000e+00> : vector<128xf32>
    %14 = vector.multi_reduction <add>, %13, %cst_11 [1] : vector<128x16xf32> to vector<128xf32>
    %15 = vector.shape_cast %14 : vector<128xf32> to vector<128x1xf32>
    %cst_12 = arith.constant 1.000000e-24 : f32
    %16 = vector.broadcast %cst_12 : f32 to vector<128x1xf32>
    %17 = arith.maximumf %15, %16 : vector<128x1xf32>
    %18 = math.rsqrt %17 : vector<128x1xf32>
    %19 = vector.broadcast %18 : vector<128x1xf32> to vector<128x16xf32>
    %20 = arith.mulf %12, %19 : vector<128x16xf32>
    %21 = vector.extract_strided_slice %9 {offsets = [0, 0], sizes = [1, 16], strides = [1, 1]} : vector<1x32xf32> to vector<1x16xf32>
    %22 = vector.broadcast %21 : vector<1x16xf32> to vector<128x16xf32>
    %23 = arith.mulf %20, %22 : vector<128x16xf32>
    %24 = vector.extract_strided_slice %7 {offsets = [0, 32], sizes = [128, 16], strides = [1, 1]} : vector<128x96xf32> to vector<128x16xf32>
    %25 = arith.mulf %24, %24 : vector<128x16xf32>
    %cst_13 = arith.constant dense<0.000000e+00> : vector<128xf32>
    %26 = vector.multi_reduction <add>, %25, %cst_13 [1] : vector<128x16xf32> to vector<128xf32>
    %27 = vector.shape_cast %26 : vector<128xf32> to vector<128x1xf32>
    %cst_14 = arith.constant 1.000000e-24 : f32
    %28 = vector.broadcast %cst_14 : f32 to vector<128x1xf32>
    %29 = arith.maximumf %27, %28 : vector<128x1xf32>
    %30 = math.rsqrt %29 : vector<128x1xf32>
    %31 = vector.broadcast %30 : vector<128x1xf32> to vector<128x16xf32>
    %32 = arith.mulf %24, %31 : vector<128x16xf32>
    %33 = vector.extract_strided_slice %11 {offsets = [0, 0], sizes = [1, 16], strides = [1, 1]} : vector<1x32xf32> to vector<1x16xf32>
    %34 = vector.broadcast %33 : vector<1x16xf32> to vector<128x16xf32>
    %35 = arith.mulf %32, %34 : vector<128x16xf32>
    %36 = vector.extract_strided_slice %7 {offsets = [0, 64], sizes = [128, 16], strides = [1, 1]} : vector<128x96xf32> to vector<128x16xf32>
    %37 = arith.truncf %23 : vector<128x16xf32> to vector<128x16xbf16>
    %38 = vector.shape_cast %37 : vector<128x16xbf16> to vector<8x16x16xbf16>
    %39 = arith.truncf %35 : vector<128x16xf32> to vector<128x16xbf16>
    %40 = vector.shape_cast %39 : vector<128x16xbf16> to vector<8x16x16xbf16>
    %41 = arith.truncf %36 : vector<128x16xf32> to vector<128x16xbf16>
    %42 = vector.shape_cast %41 : vector<128x16xbf16> to vector<8x16x16xbf16>
    "tpu.trace_start"() <{level = 10 : i32, message = "bnd,bmd->bnm"}> : () -> ()
    %cst_15 = arith.constant dense<0.000000e+00> : vector<8x16x16xf32>
    %43 = tpu.matmul %38, %40, %cst_15 {dimension_numbers = #tpu.dot_dimension_numbers<[2], [2], [1], [1], [0, 0, 0, 1, 1, 1], [0], [0]>} : vector<8x16x16xbf16>, vector<8x16x16xbf16>, vector<8x16x16xf32> -> vector<8x16x16xf32>
    "tpu.trace_stop"() : () -> ()
    %cst_16 = arith.constant dense<0xFF800000> : vector<8x16xf32>
    %44 = vector.multi_reduction <maximumf>, %43, %cst_16 [2] : vector<8x16x16xf32> to vector<8x16xf32>
    %45 = vector.shape_cast %44 : vector<8x16xf32> to vector<8x16x1xf32>
    %46 = vector.broadcast %45 : vector<8x16x1xf32> to vector<8x16x16xf32>
    %47 = arith.subf %43, %46 : vector<8x16x16xf32>
    %48 = math.exp %47 : vector<8x16x16xf32>
    %cst_17 = arith.constant dense<0.000000e+00> : vector<8x16xf32>
    %49 = vector.multi_reduction <add>, %48, %cst_17 [2] : vector<8x16x16xf32> to vector<8x16xf32>
    %50 = vector.shape_cast %49 : vector<8x16xf32> to vector<8x16x1xf32>
    %51 = tpu.reciprocal %50 {approx = true} : vector<8x16x1xf32> -> vector<8x16x1xf32>
    %52 = vector.broadcast %51 : vector<8x16x1xf32> to vector<8x16x16xf32>
    %53 = arith.mulf %48, %52 : vector<8x16x16xf32>
    %54 = arith.truncf %53 : vector<8x16x16xf32> to vector<8x16x16xbf16>
    "tpu.trace_start"() <{level = 10 : i32, message = "bnm,bmd->bnd"}> : () -> ()
    %cst_18 = arith.constant dense<0.000000e+00> : vector<8x16x16xf32>
    %55 = tpu.matmul %54, %42, %cst_18 {dimension_numbers = #tpu.dot_dimension_numbers<[2], [1], [1], [2], [0, 0, 0, 1, 1, 2], [0], [0]>} : vector<8x16x16xbf16>, vector<8x16x16xbf16>, vector<8x16x16xf32> -> vector<8x16x16xf32>
    "tpu.trace_stop"() : () -> ()
    %56 = vector.shape_cast %55 : vector<8x16x16xf32> to vector<128x16xf32>
    %57 = arith.truncf %56 : vector<128x16xf32> to vector<128x16xbf16>
    %58 = vector.extract_strided_slice %7 {offsets = [0, 16], sizes = [128, 16], strides = [1, 1]} : vector<128x96xf32> to vector<128x16xf32>
    %59 = arith.mulf %58, %58 : vector<128x16xf32>
    %cst_19 = arith.constant dense<0.000000e+00> : vector<128xf32>
    %60 = vector.multi_reduction <add>, %59, %cst_19 [1] : vector<128x16xf32> to vector<128xf32>
    %61 = vector.shape_cast %60 : vector<128xf32> to vector<128x1xf32>
    %cst_20 = arith.constant 1.000000e-24 : f32
    %62 = vector.broadcast %cst_20 : f32 to vector<128x1xf32>
    %63 = arith.maximumf %61, %62 : vector<128x1xf32>
    %64 = math.rsqrt %63 : vector<128x1xf32>
    %65 = vector.broadcast %64 : vector<128x1xf32> to vector<128x16xf32>
    %66 = arith.mulf %58, %65 : vector<128x16xf32>
    %67 = vector.extract_strided_slice %9 {offsets = [0, 16], sizes = [1, 16], strides = [1, 1]} : vector<1x32xf32> to vector<1x16xf32>
    %68 = vector.broadcast %67 : vector<1x16xf32> to vector<128x16xf32>
    %69 = arith.mulf %66, %68 : vector<128x16xf32>
    %70 = vector.extract_strided_slice %7 {offsets = [0, 48], sizes = [128, 16], strides = [1, 1]} : vector<128x96xf32> to vector<128x16xf32>
    %71 = arith.mulf %70, %70 : vector<128x16xf32>
    %cst_21 = arith.constant dense<0.000000e+00> : vector<128xf32>
    %72 = vector.multi_reduction <add>, %71, %cst_21 [1] : vector<128x16xf32> to vector<128xf32>
    %73 = vector.shape_cast %72 : vector<128xf32> to vector<128x1xf32>
    %cst_22 = arith.constant 1.000000e-24 : f32
    %74 = vector.broadcast %cst_22 : f32 to vector<128x1xf32>
    %75 = arith.maximumf %73, %74 : vector<128x1xf32>
    %76 = math.rsqrt %75 : vector<128x1xf32>
    %77 = vector.broadcast %76 : vector<128x1xf32> to vector<128x16xf32>
    %78 = arith.mulf %70, %77 : vector<128x16xf32>
    %79 = vector.extract_strided_slice %11 {offsets = [0, 16], sizes = [1, 16], strides = [1, 1]} : vector<1x32xf32> to vector<1x16xf32>
    %80 = vector.broadcast %79 : vector<1x16xf32> to vector<128x16xf32>
    %81 = arith.mulf %78, %80 : vector<128x16xf32>
    %82 = vector.extract_strided_slice %7 {offsets = [0, 80], sizes = [128, 16], strides = [1, 1]} : vector<128x96xf32> to vector<128x16xf32>
    %83 = arith.truncf %69 : vector<128x16xf32> to vector<128x16xbf16>
    %84 = vector.shape_cast %83 : vector<128x16xbf16> to vector<8x16x16xbf16>
    %85 = arith.truncf %81 : vector<128x16xf32> to vector<128x16xbf16>
    %86 = vector.shape_cast %85 : vector<128x16xbf16> to vector<8x16x16xbf16>
    %87 = arith.truncf %82 : vector<128x16xf32> to vector<128x16xbf16>
    %88 = vector.shape_cast %87 : vector<128x16xbf16> to vector<8x16x16xbf16>
    "tpu.trace_start"() <{level = 10 : i32, message = "bnd,bmd->bnm"}> : () -> ()
    %cst_23 = arith.constant dense<0.000000e+00> : vector<8x16x16xf32>
    %89 = tpu.matmul %84, %86, %cst_23 {dimension_numbers = #tpu.dot_dimension_numbers<[2], [2], [1], [1], [0, 0, 0, 1, 1, 1], [0], [0]>} : vector<8x16x16xbf16>, vector<8x16x16xbf16>, vector<8x16x16xf32> -> vector<8x16x16xf32>
    "tpu.trace_stop"() : () -> ()
    %cst_24 = arith.constant dense<0xFF800000> : vector<8x16xf32>
    %90 = vector.multi_reduction <maximumf>, %89, %cst_24 [2] : vector<8x16x16xf32> to vector<8x16xf32>
    %91 = vector.shape_cast %90 : vector<8x16xf32> to vector<8x16x1xf32>
    %92 = vector.broadcast %91 : vector<8x16x1xf32> to vector<8x16x16xf32>
    %93 = arith.subf %89, %92 : vector<8x16x16xf32>
    %94 = math.exp %93 : vector<8x16x16xf32>
    %cst_25 = arith.constant dense<0.000000e+00> : vector<8x16xf32>
    %95 = vector.multi_reduction <add>, %94, %cst_25 [2] : vector<8x16x16xf32> to vector<8x16xf32>
    %96 = vector.shape_cast %95 : vector<8x16xf32> to vector<8x16x1xf32>
    %97 = tpu.reciprocal %96 {approx = true} : vector<8x16x1xf32> -> vector<8x16x1xf32>
    %98 = vector.broadcast %97 : vector<8x16x1xf32> to vector<8x16x16xf32>
    %99 = arith.mulf %94, %98 : vector<8x16x16xf32>
    %100 = arith.truncf %99 : vector<8x16x16xf32> to vector<8x16x16xbf16>
    "tpu.trace_start"() <{level = 10 : i32, message = "bnm,bmd->bnd"}> : () -> ()
    %cst_26 = arith.constant dense<0.000000e+00> : vector<8x16x16xf32>
    %101 = tpu.matmul %100, %88, %cst_26 {dimension_numbers = #tpu.dot_dimension_numbers<[2], [1], [1], [2], [0, 0, 0, 1, 1, 2], [0], [0]>} : vector<8x16x16xbf16>, vector<8x16x16xbf16>, vector<8x16x16xf32> -> vector<8x16x16xf32>
    "tpu.trace_stop"() : () -> ()
    %102 = vector.shape_cast %101 : vector<8x16x16xf32> to vector<128x16xf32>
    %103 = arith.truncf %102 : vector<128x16xf32> to vector<128x16xbf16>
    %104 = tpu.concatenate %57, %103 in 1 : vector<128x16xbf16>, vector<128x16xbf16> -> vector<128x32xbf16>
    %c0_27 = arith.constant 0 : index
    %c0_28 = arith.constant 0 : index
    %c0_29 = arith.constant 0 : index
    %105 = vector.load %arg8[%c0_27, %c0_28, %c0_29] : memref<1x32x32xbf16, #tpu.memory_space<vmem>>, vector<1x32x32xbf16>
    %106 = vector.shape_cast %105 : vector<1x32x32xbf16> to vector<32x32xbf16>
    %cst_30 = arith.constant dense<0.000000e+00> : vector<128x32xf32>
    %107 = tpu.matmul %104, %106, %cst_30 {dimension_numbers = #tpu.dot_dimension_numbers<[1], [0], [0], [1], [0, 0, 1, 1], [], []>} : vector<128x32xbf16>, vector<32x32xbf16>, vector<128x32xf32> -> vector<128x32xf32>
    %108 = arith.mulf %107, %107 : vector<128x32xf32>
    %cst_31 = arith.constant dense<0.000000e+00> : vector<128xf32>
    %109 = vector.multi_reduction <add>, %108, %cst_31 [1] : vector<128x32xf32> to vector<128xf32>
    %110 = vector.shape_cast %109 : vector<128xf32> to vector<128x1xf32>
    %cst_32 = arith.constant 1.000000e-24 : f32
    %111 = vector.broadcast %cst_32 : f32 to vector<128x1xf32>
    %112 = arith.maximumf %110, %111 : vector<128x1xf32>
    %113 = math.rsqrt %112 : vector<128x1xf32>
    %114 = vector.broadcast %113 : vector<128x1xf32> to vector<128x32xf32>
    %115 = arith.mulf %107, %114 : vector<128x32xf32>
    %c0_33 = arith.constant 0 : index
    %c0_34 = arith.constant 0 : index
    %c0_35 = arith.constant 0 : index
    %116 = vector.load %arg9[%c0_33, %c0_34, %c0_35] : memref<1x1x32xf32, #tpu.memory_space<vmem>>, vector<1x1x32xf32>
    %117 = vector.shape_cast %116 : vector<1x1x32xf32> to vector<1x32xf32>
    %118 = arith.subf %115, %3 : vector<128x32xf32>
    %119 = vector.broadcast %117 : vector<1x32xf32> to vector<128x32xf32>
    %120 = arith.mulf %119, %118 : vector<128x32xf32>
    %121 = arith.addf %3, %120 : vector<128x32xf32>
    %122 = arith.mulf %121, %121 : vector<128x32xf32>
    %cst_36 = arith.constant dense<0.000000e+00> : vector<128xf32>
    %123 = vector.multi_reduction <add>, %122, %cst_36 [1] : vector<128x32xf32> to vector<128xf32>
    %124 = vector.shape_cast %123 : vector<128xf32> to vector<128x1xf32>
    %cst_37 = arith.constant 1.000000e-24 : f32
    %125 = vector.broadcast %cst_37 : f32 to vector<128x1xf32>
    %126 = arith.maximumf %124, %125 : vector<128x1xf32>
    %127 = math.rsqrt %126 : vector<128x1xf32>
    %128 = vector.broadcast %127 : vector<128x1xf32> to vector<128x32xf32>
    %129 = arith.mulf %121, %128 : vector<128x32xf32>
    %130 = arith.truncf %129 : vector<128x32xf32> to vector<128x32xbf16>
    %c0_38 = arith.constant 0 : index
    %c0_39 = arith.constant 0 : index
    %c0_40 = arith.constant 0 : index
    %131 = vector.load %arg10[%c0_38, %c0_39, %c0_40] : memref<1x32x128xbf16, #tpu.memory_space<vmem>>, vector<1x32x128xbf16>
    %132 = vector.shape_cast %131 : vector<1x32x128xbf16> to vector<32x128xbf16>
    %cst_41 = arith.constant dense<0.000000e+00> : vector<128x128xf32>
    %133 = tpu.matmul %130, %132, %cst_41 {dimension_numbers = #tpu.dot_dimension_numbers<[1], [0], [0], [1], [0, 0, 1, 1], [], []>} : vector<128x32xbf16>, vector<32x128xbf16>, vector<128x128xf32> -> vector<128x128xf32>
    %c0_42 = arith.constant 0 : index
    %c0_43 = arith.constant 0 : index
    %c0_44 = arith.constant 0 : index
    %134 = vector.load %arg11[%c0_42, %c0_43, %c0_44] : memref<1x1x128xf32, #tpu.memory_space<vmem>>, vector<1x1x128xf32>
    %135 = vector.shape_cast %134 : vector<1x1x128xf32> to vector<1x128xf32>
    %136 = vector.broadcast %135 : vector<1x128xf32> to vector<128x128xf32>
    %137 = arith.mulf %133, %136 : vector<128x128xf32>
    %138 = vector.extract_strided_slice %137 {offsets = [0, 0], sizes = [128, 64], strides = [1, 1]} : vector<128x128xf32> to vector<128x64xf32>
    %139 = vector.extract_strided_slice %137 {offsets = [0, 64], sizes = [128, 64], strides = [1, 1]} : vector<128x128xf32> to vector<128x64xf32>
    %140 = arith.negf %139 : vector<128x64xf32>
    %141 = math.exp %140 : vector<128x64xf32>
    %cst_45 = arith.constant 1.000000e+00 : f32
    %142 = vector.broadcast %cst_45 : f32 to vector<128x64xf32>
    %143 = arith.addf %142, %141 : vector<128x64xf32>
    %144 = arith.divf %142, %143 : vector<128x64xf32>
    %145 = arith.mulf %139, %144 : vector<128x64xf32>
    %146 = arith.mulf %145, %138 : vector<128x64xf32>
    %147 = arith.truncf %146 : vector<128x64xf32> to vector<128x64xbf16>
    %c0_46 = arith.constant 0 : index
    %c0_47 = arith.constant 0 : index
    %c0_48 = arith.constant 0 : index
    %148 = vector.load %arg12[%c0_46, %c0_47, %c0_48] : memref<1x64x32xbf16, #tpu.memory_space<vmem>>, vector<1x64x32xbf16>
    %149 = vector.shape_cast %148 : vector<1x64x32xbf16> to vector<64x32xbf16>
    %cst_49 = arith.constant dense<0.000000e+00> : vector<128x32xf32>
    %150 = tpu.matmul %147, %149, %cst_49 {dimension_numbers = #tpu.dot_dimension_numbers<[1], [0], [0], [1], [0, 0, 1, 1], [], []>} : vector<128x64xbf16>, vector<64x32xbf16>, vector<128x32xf32> -> vector<128x32xf32>
    %151 = arith.mulf %150, %150 : vector<128x32xf32>
    %cst_50 = arith.constant dense<0.000000e+00> : vector<128xf32>
    %152 = vector.multi_reduction <add>, %151, %cst_50 [1] : vector<128x32xf32> to vector<128xf32>
    %153 = vector.shape_cast %152 : vector<128xf32> to vector<128x1xf32>
    %cst_51 = arith.constant 1.000000e-24 : f32
    %154 = vector.broadcast %cst_51 : f32 to vector<128x1xf32>
    %155 = arith.maximumf %153, %154 : vector<128x1xf32>
    %156 = math.rsqrt %155 : vector<128x1xf32>
    %157 = vector.broadcast %156 : vector<128x1xf32> to vector<128x32xf32>
    %158 = arith.mulf %150, %157 : vector<128x32xf32>
    %c0_52 = arith.constant 0 : index
    %c0_53 = arith.constant 0 : index
    %c0_54 = arith.constant 0 : index
    %159 = vector.load %arg13[%c0_52, %c0_53, %c0_54] : memref<1x1x32xf32, #tpu.memory_space<vmem>>, vector<1x1x32xf32>
    %160 = vector.shape_cast %159 : vector<1x1x32xf32> to vector<1x32xf32>
    %161 = arith.subf %158, %129 : vector<128x32xf32>
    %162 = vector.broadcast %160 : vector<1x32xf32> to vector<128x32xf32>
    %163 = arith.mulf %162, %161 : vector<128x32xf32>
    %164 = arith.addf %129, %163 : vector<128x32xf32>
    %165 = arith.mulf %164, %164 : vector<128x32xf32>
    %cst_55 = arith.constant dense<0.000000e+00> : vector<128xf32>
    %166 = vector.multi_reduction <add>, %165, %cst_55 [1] : vector<128x32xf32> to vector<128xf32>
    %167 = vector.shape_cast %166 : vector<128xf32> to vector<128x1xf32>
    %cst_56 = arith.constant 1.000000e-24 : f32
    %168 = vector.broadcast %cst_56 : f32 to vector<128x1xf32>
    %169 = arith.maximumf %167, %168 : vector<128x1xf32>
    %170 = math.rsqrt %169 : vector<128x1xf32>
    %171 = vector.broadcast %170 : vector<128x1xf32> to vector<128x32xf32>
    %172 = arith.mulf %164, %171 : vector<128x32xf32>
    %c0_57 = arith.constant 0 : index
    %c0_58 = arith.constant 0 : index
    %173 = vector.load %arg18[%c0_57, %c0_58] : memref<128x32xf32, #tpu.memory_space<vmem>>, vector<128x32xf32>
    tpu.vector_store %arg18[%c0_57, %c0_58], %172 {strides = array<i32>} : memref<128x32xf32, #tpu.memory_space<vmem>>, vector<128x32xf32>,
    %c1_i32 = arith.constant 1 : i32
    %174 = arith.cmpi eq, %arg1, %c1_i32 : i32
    %175 = arith.extui %174 : i1 to i32
    %c0_i32_59 = arith.constant 0 : i32
    %176 = arith.cmpi ne, %175, %c0_i32_59 : i32
    scf.if %176 {
      %c0_60 = arith.constant 0 : index
      %c0_61 = arith.constant 0 : index
      %177 = vector.load %arg14[%c0_60, %c0_61] : memref<8x128xf32, #tpu.memory_space<vmem>>, vector<8x128xf32>
      %cst_62 = arith.constant dense<0.000000e+00> : vector<8x32xf32>
      %178 = tpu.matmul %177, %172, %cst_62 {dimension_numbers = #tpu.dot_dimension_numbers<[1], [0], [0], [1], [0, 0, 1, 1], [], []>} : vector<8x128xf32>, vector<128x32xf32>, vector<8x32xf32> -> vector<8x32xf32>
      %179 = arith.truncf %178 : vector<8x32xf32> to vector<8x32xbf16>
      %c0_63 = arith.constant 0 : index
      %c0_64 = arith.constant 0 : index
      %180 = vector.load %arg15[%c0_63, %c0_64] : memref<32x128xbf16, #tpu.memory_space<vmem>>, vector<32x128xbf16>
      %cst_65 = arith.constant dense<0.000000e+00> : vector<8x128xf32>
      %181 = tpu.matmul %179, %180, %cst_65 {dimension_numbers = #tpu.dot_dimension_numbers<[1], [0], [0], [1], [0, 0, 1, 1], [], []>} : vector<8x32xbf16>, vector<32x128xbf16>, vector<8x128xf32> -> vector<8x128xf32>
      %c0_66 = arith.constant 0 : index
      %c0_67 = arith.constant 0 : index
      %182 = vector.load %arg16[%c0_66, %c0_67] : memref<1x128xf32, #tpu.memory_space<vmem>>, vector<1x128xf32>
      %183 = vector.broadcast %182 : vector<1x128xf32> to vector<8x128xf32>
      %184 = arith.mulf %181, %183 : vector<8x128xf32>
      %c0_68 = arith.constant 0 : index
      %c0_69 = arith.constant 0 : index
      %185 = vector.load %arg17[%c0_68, %c0_69] : memref<8x128xf32, #tpu.memory_space<vmem>>, vector<8x128xf32>
      tpu.vector_store %arg17[%c0_68, %c0_69], %184 {strides = array<i32>} : memref<8x128xf32, #tpu.memory_space<vmem>>, vector<8x128xf32>,
    } else {
    }
    return
  }
  func.func @transform_0(%arg0: i32, %arg1: i32) -> (i32, i32) {
    %c0_i32 = arith.constant 0 : i32
    %c0_i32_0 = arith.constant 0 : i32
    return %arg0, %c0_i32 : i32, i32
  }
  func.func @transform_1(%arg0: i32, %arg1: i32) -> (i32, i32) {
    %c0_i32 = arith.constant 0 : i32
    %c0_i32_0 = arith.constant 0 : i32
    %c0_i32_1 = arith.constant 0 : i32
    return %c0_i32, %c0_i32_0 : i32, i32
  }
  func.func @transform_2(%arg0: i32, %arg1: i32) -> (i32, i32) {
    %c0_i32 = arith.constant 0 : i32
    %c0_i32_0 = arith.constant 0 : i32
    %c0_i32_1 = arith.constant 0 : i32
    return %c0_i32, %c0_i32_0 : i32, i32
  }
  func.func @transform_3(%arg0: i32, %arg1: i32) -> (i32, i32, i32) {
    %c0_i32 = arith.constant 0 : i32
    %c0_i32_0 = arith.constant 0 : i32
    %c0_i32_1 = arith.constant 0 : i32
    return %arg1, %c0_i32, %c0_i32_0 : i32, i32, i32
  }
  func.func @transform_4(%arg0: i32, %arg1: i32) -> (i32, i32, i32) {
    %c0_i32 = arith.constant 0 : i32
    %c0_i32_0 = arith.constant 0 : i32
    %c0_i32_1 = arith.constant 0 : i32
    return %arg1, %c0_i32, %c0_i32_0 : i32, i32, i32
  }
  func.func @transform_5(%arg0: i32, %arg1: i32) -> (i32, i32, i32) {
    %c0_i32 = arith.constant 0 : i32
    %c0_i32_0 = arith.constant 0 : i32
    %c0_i32_1 = arith.constant 0 : i32
    return %arg1, %c0_i32, %c0_i32_0 : i32, i32, i32
  }
  func.func @transform_6(%arg0: i32, %arg1: i32) -> (i32, i32, i32) {
    %c0_i32 = arith.constant 0 : i32
    %c0_i32_0 = arith.constant 0 : i32
    %c0_i32_1 = arith.constant 0 : i32
    return %arg1, %c0_i32, %c0_i32_0 : i32, i32, i32
  }
  func.func @transform_7(%arg0: i32, %arg1: i32) -> (i32, i32, i32) {
    %c0_i32 = arith.constant 0 : i32
    %c0_i32_0 = arith.constant 0 : i32
    %c0_i32_1 = arith.constant 0 : i32
    return %arg1, %c0_i32, %c0_i32_0 : i32, i32, i32
  }
  func.func @transform_8(%arg0: i32, %arg1: i32) -> (i32, i32, i32) {
    %c0_i32 = arith.constant 0 : i32
    %c0_i32_0 = arith.constant 0 : i32
    %c0_i32_1 = arith.constant 0 : i32
    return %arg1, %c0_i32, %c0_i32_0 : i32, i32, i32
  }
  func.func @transform_9(%arg0: i32, %arg1: i32) -> (i32, i32, i32) {
    %c0_i32 = arith.constant 0 : i32
    %c0_i32_0 = arith.constant 0 : i32
    %c0_i32_1 = arith.constant 0 : i32
    return %arg1, %c0_i32, %c0_i32_0 : i32, i32, i32
  }
  func.func @transform_10(%arg0: i32, %arg1: i32) -> (i32, i32, i32) {
    %c0_i32 = arith.constant 0 : i32
    %c0_i32_0 = arith.constant 0 : i32
    %c0_i32_1 = arith.constant 0 : i32
    return %arg1, %c0_i32, %c0_i32_0 : i32, i32, i32
  }
  func.func @transform_11(%arg0: i32, %arg1: i32) -> (i32, i32, i32) {
    %c0_i32 = arith.constant 0 : i32
    %c0_i32_0 = arith.constant 0 : i32
    %c0_i32_1 = arith.constant 0 : i32
    return %arg1, %c0_i32, %c0_i32_0 : i32, i32, i32
  }
  func.func @transform_12(%arg0: i32, %arg1: i32) -> (i32, i32) {
    %c0_i32 = arith.constant 0 : i32
    %c0_i32_0 = arith.constant 0 : i32
    %c0_i32_1 = arith.constant 0 : i32
    return %c0_i32, %c0_i32_0 : i32, i32
  }
  func.func @transform_13(%arg0: i32, %arg1: i32) -> (i32, i32) {
    %c0_i32 = arith.constant 0 : i32
    %c0_i32_0 = arith.constant 0 : i32
    %c0_i32_1 = arith.constant 0 : i32
    return %c0_i32, %c0_i32_0 : i32, i32
  }
  func.func @transform_14(%arg0: i32, %arg1: i32) -> (i32, i32) {
    %c0_i32 = arith.constant 0 : i32
    %c0_i32_0 = arith.constant 0 : i32
    %c0_i32_1 = arith.constant 0 : i32
    return %c0_i32, %c0_i32_0 : i32, i32
  }
  func.func @transform_15(%arg0: i32, %arg1: i32) -> (i32, i32) {
    %c0_i32 = arith.constant 0 : i32
    %c0_i32_0 = arith.constant 0 : i32
    return %arg0, %c0_i32 : i32, i32
  }
}

</mosaic_0001>

<llo_original>
// kernel: _lambda_.1
$region0: #{_lambda_.1}
  #allocation0 [shape = 'u32[]', space=smem, size = 0x4, offset = 0x4, fixed_abs, tag = 'smem constant byte address 0x4 - core index']
  #allocation1 [shape = 'u32[72,128]{1,0:T(1,128)}', space=vmem, size = 0x9000, scoped, tag = 'internal scratch']
  #allocation2 [shape = 'f32[128,32]{1,0:T(8,128)}', space=vmem, size = 0x10000, scoped, tag = 'scratch operand']
  %s0 = inlined_call_operand.vmem [shape: bf16[256,48], index: 0, kind: input, shape index: {}]
  %s1 = inlined_call_operand.vmem [shape: bf16[48,32], index: 1, kind: input, shape index: {}]
  %s2 = inlined_call_operand.vmem [shape: f32[128,32], index: 2, kind: input, shape index: {}]
  %s3 = inlined_call_operand.vmem [shape: bf16[2,32,96], index: 3, kind: input, shape index: {}]
  %s4 = inlined_call_operand.vmem [shape: f32[2,1,32], index: 4, kind: input, shape index: {}, may-alias: {4,5}]
  %s5 = inlined_call_operand.vmem [shape: f32[2,1,32], index: 5, kind: input, shape index: {}, may-alias: {4,5}]
  %s6 = inlined_call_operand.vmem [shape: bf16[2,32,32], index: 6, kind: input, shape index: {}]
  %s7 = inlined_call_operand.vmem [shape: f32[2,1,32], index: 7, kind: input, shape index: {}, may-alias: {7,11}]
  %s8 = inlined_call_operand.vmem [shape: bf16[2,32,128], index: 8, kind: input, shape index: {}]
  %s9 = inlined_call_operand.vmem [shape: f32[2,1,128], index: 9, kind: input, shape index: {}]
  %s10 = inlined_call_operand.vmem [shape: bf16[2,64,32], index: 10, kind: input, shape index: {}]
  %s11 = inlined_call_operand.vmem [shape: f32[2,1,32], index: 11, kind: input, shape index: {}, may-alias: {7,11}]
  %s12 = inlined_call_operand.vmem [shape: f32[8,128], index: 12, kind: input, shape index: {}]
  %s13 = inlined_call_operand.vmem [shape: bf16[32,128], index: 13, kind: input, shape index: {}]
  %s14 = inlined_call_operand.vmem [shape: f32[1,128], index: 14, kind: input, shape index: {}]
  %s15 = inlined_call_operand.hbm [shape: f32[16,128], index: 15, kind: output, shape index: {}]
  %s16 = sld [smem:[#allocation0]]
  $region101: #{_lambda_.1} parent=0
    _
  %s18 = ssub.s32 1, %s16
  %s19 = scalar_select 0, %s18, %s16
  $region1: #{_lambda_.1} parent=0
    #allocation3 [shape = 'u8[8192]{0}', space=vmem, size = 0x2000, scoped, tag = 'output window, operand 0']
    #allocation4 [shape = 's32[2]{0}', space=sflag, size = 0x8, scoped, tag = 'scoped memory for _lambda_.1']
    %20 = vsyncpa [#allocation4], 0
    %s21 = scalar_lea.sflag [#allocation4], 1
    %22 = vsyncpa %s21, 0
    loop: start=0, step=1, limit=6
    $region2: #{_lambda_.1} parent=1 // loop_pre_header
      _
    $region3: #{_lambda_.1} parent=1 // loop_header
      %s24 = sphi 0, %s28
      %p25 = scmp.ge.s32.totalorder %s24, 6
      %s31 = sphi 0, %s43
      %s32 = sphi 0, %s39
      %s33 = sphi 0, %s31
      %s34 = sphi 0, %s32
      %s35 = sphi 0, %s33
      %s36 = sphi 0, %s34
      %s46 = sphi 0, %s48
      %s49 = sphi 0, %s46
      %s50 = sphi 0, %s49
      %s66 = sphi 0, %s50
      %s70 = sphi 0, %s70
      %s72 = sphi 0, %s70
      %s73 = sphi 0, %s72
      %s87 = sphi 0, %s73
      %s91 = sphi 0, %s91
      %s93 = sphi 0, %s91
      %s94 = sphi 0, %s93
      %s108 = sphi 0, %s94
      %s114 = sphi 0, %s116
      %s117 = sphi 0, %s114
      %s118 = sphi 0, %s117
      %s134 = sphi 0, %s118
      %s140 = sphi 0, %s142
      %s143 = sphi 0, %s140
      %s144 = sphi 0, %s143
      %s160 = sphi 0, %s144
      %s166 = sphi 0, %s168
      %s169 = sphi 0, %s166
      %s170 = sphi 0, %s169
      %s186 = sphi 0, %s170
      %s192 = sphi 0, %s194
      %s195 = sphi 0, %s192
      %s196 = sphi 0, %s195
      %s212 = sphi 0, %s196
      %s218 = sphi 0, %s220
      %s221 = sphi 0, %s218
      %s222 = sphi 0, %s221
      %s238 = sphi 0, %s222
      %s244 = sphi 0, %s246
      %s247 = sphi 0, %s244
      %s248 = sphi 0, %s247
      %s264 = sphi 0, %s248
      %s270 = sphi 0, %s272
      %s273 = sphi 0, %s270
      %s274 = sphi 0, %s273
      %s290 = sphi 0, %s274
      %s296 = sphi 0, %s298
      %s299 = sphi 0, %s296
      %s300 = sphi 0, %s299
      %s316 = sphi 0, %s300
      %s322 = sphi 0, %s324
      %s325 = sphi 0, %s322
      %s326 = sphi 0, %s325
      %s342 = sphi 0, %s326
      %s346 = sphi 0, %s346
      %s348 = sphi 0, %s346
      %s349 = sphi 0, %s348
      %s363 = sphi 0, %s349
      %s367 = sphi 0, %s367
      %s369 = sphi 0, %s367
      %s370 = sphi 0, %s369
      %s384 = sphi 0, %s370
      %s388 = sphi 0, %s388
      %s390 = sphi 0, %s388
      %s391 = sphi 0, %s390
      %s405 = sphi 0, %s391
      %s411 = sphi 0, %s413
      %s414 = sphi 0, %s411
      %s415 = sphi 0, %s414
      %s431 = sphi 0, %s415
    $region4: #{_lambda_.1} parent=1 // loop_header_branch
      %27 = sbr.rel (%p25) target = $region8
    $region5: #{_lambda_.1} parent=1 // loop_body
      %s29 = ssub.s32 %s24, 1
      %s30 = ssub.s32 %s24, 2
      %s37 = sadd.s32 1, %s32
      %p38 = scmp.ge.s32.totalorder %s37, 2
      %s39 = scalar_select %p38, 0, %s37
      %s40 = sadd.s32 1, %s31
      %s41 = scalar_select %p38, %s40, %s31
      %p42 = scmp.ge.s32.totalorder %s41, 2
      %s43 = scalar_select %p42, 0, %s41
      %s44 = ssub.s32 %s31, %s43
      %p45 = scmp.eq.s32.totalorder %s44, 0
      %s47 = sadd.s32 %s46, 1
      %s48 = scalar_select %p45, %s46, %s47
      %p51 = pneg %p45
      %p52 = scmp.eq.s32.totalorder %s24, 3
      %p53 = por %p51, %p52
      %p54 = scmp.ne.s32.totalorder %s46, %s49
      %p55 = scmp.eq.s32.totalorder %s24, 0
      %p56 = por %p54, %p55
      %p57 = scmp.ne.s32.totalorder %s46, %s49
      %p58 = scmp.eq.s32.totalorder %s29, 3
      %p59 = por %p57, %p58
      %p60 = scmp.ne.s32.totalorder %s49, %s50
      %p61 = scmp.eq.s32.totalorder %s29, 0
      %p62 = por %p60, %p61
      %p63 = scmp.ne.s32.totalorder %s49, %s50
      %p64 = scmp.eq.s32.totalorder %s30, 3
      %p65 = por %p63, %p64
      %p67 = scmp.ne.s32.totalorder %s50, %s66
      %p68 = scmp.eq.s32.totalorder %s30, 0
      %p69 = por %p67, %p68
      %s71 = sadd.s32 %s70, 1
      %p74 = scmp.eq.s32.totalorder %s24, 3
      %p75 = scmp.ne.s32.totalorder %s70, %s72
      %p76 = scmp.eq.s32.totalorder %s24, 0
      %p77 = por %p75, %p76
      %p78 = scmp.ne.s32.totalorder %s70, %s72
      %p79 = scmp.eq.s32.totalorder %s29, 3
      %p80 = por %p78, %p79
      %p81 = scmp.ne.s32.totalorder %s72, %s73
      %p82 = scmp.eq.s32.totalorder %s29, 0
      %p83 = por %p81, %p82
      %p84 = scmp.ne.s32.totalorder %s72, %s73
      %p85 = scmp.eq.s32.totalorder %s30, 3
      %p86 = por %p84, %p85
      %p88 = scmp.ne.s32.totalorder %s73, %s87
      %p89 = scmp.eq.s32.totalorder %s30, 0
      %p90 = por %p88, %p89
      %s92 = sadd.s32 %s91, 1
      %p95 = scmp.eq.s32.totalorder %s24, 3
      %p96 = scmp.ne.s32.totalorder %s91, %s93
      %p97 = scmp.eq.s32.totalorder %s24, 0
      %p98 = por %p96, %p97
      %p99 = scmp.ne.s32.totalorder %s91, %s93
      %p100 = scmp.eq.s32.totalorder %s29, 3
      %p101 = por %p99, %p100
      %p102 = scmp.ne.s32.totalorder %s93, %s94
      %p103 = scmp.eq.s32.totalorder %s29, 0
      %p104 = por %p102, %p103
      %p105 = scmp.ne.s32.totalorder %s93, %s94
      %p106 = scmp.eq.s32.totalorder %s30, 3
      %p107 = por %p105, %p106
      %p109 = scmp.ne.s32.totalorder %s94, %s108
      %p110 = scmp.eq.s32.totalorder %s30, 0
      %p111 = por %p109, %p110
      %s112 = ssub.s32 %s32, %s39
      %p113 = scmp.eq.s32.totalorder %s112, 0
      %s115 = sadd.s32 %s114, 1
      %s116 = scalar_select %p113, %s114, %s115
      %p119 = pneg %p113
      %p120 = scmp.eq.s32.totalorder %s24, 3
      %p121 = por %p119, %p120
      %p122 = scmp.ne.s32.totalorder %s114, %s117
      %p123 = scmp.eq.s32.totalorder %s24, 0
      %p124 = por %p122, %p123
      %p125 = scmp.ne.s32.totalorder %s114, %s117
      %p126 = scmp.eq.s32.totalorder %s29, 3
      %p127 = por %p125, %p126
      %p128 = scmp.ne.s32.totalorder %s117, %s118
      %p129 = scmp.eq.s32.totalorder %s29, 0
      %p130 = por %p128, %p129
      %p131 = scmp.ne.s32.totalorder %s117, %s118
      %p132 = scmp.eq.s32.totalorder %s30, 3
      %p133 = por %p131, %p132
      %p135 = scmp.ne.s32.totalorder %s118, %s134
      %p136 = scmp.eq.s32.totalorder %s30, 0
      %p137 = por %p135, %p136
      %s138 = ssub.s32 %s32, %s39
      %p139 = scmp.eq.s32.totalorder %s138, 0
      %s141 = sadd.s32 %s140, 1
      %s142 = scalar_select %p139, %s140, %s141
      %p145 = pneg %p139
      %p146 = scmp.eq.s32.totalorder %s24, 3
      %p147 = por %p145, %p146
      %p148 = scmp.ne.s32.totalorder %s140, %s143
      %p149 = scmp.eq.s32.totalorder %s24, 0
      %p150 = por %p148, %p149
      %p151 = scmp.ne.s32.totalorder %s140, %s143
      %p152 = scmp.eq.s32.totalorder %s29, 3
      %p153 = por %p151, %p152
      %p154 = scmp.ne.s32.totalorder %s143, %s144
      %p155 = scmp.eq.s32.totalorder %s29, 0
      %p156 = por %p154, %p155
      %p157 = scmp.ne.s32.totalorder %s143, %s144
      %p158 = scmp.eq.s32.totalorder %s30, 3
      %p159 = por %p157, %p158
      %p161 = scmp.ne.s32.totalorder %s144, %s160
      %p162 = scmp.eq.s32.totalorder %s30, 0
      %p163 = por %p161, %p162
      %s164 = ssub.s32 %s32, %s39
      %p165 = scmp.eq.s32.totalorder %s164, 0
      %s167 = sadd.s32 %s166, 1
      %s168 = scalar_select %p165, %s166, %s167
      %p171 = pneg %p165
      %p172 = scmp.eq.s32.totalorder %s24, 3
      %p173 = por %p171, %p172
      %p174 = scmp.ne.s32.totalorder %s166, %s169
      %p175 = scmp.eq.s32.totalorder %s24, 0
      %p176 = por %p174, %p175
      %p177 = scmp.ne.s32.totalorder %s166, %s169
      %p178 = scmp.eq.s32.totalorder %s29, 3
      %p179 = por %p177, %p178
      %p180 = scmp.ne.s32.totalorder %s169, %s170
      %p181 = scmp.eq.s32.totalorder %s29, 0
      %p182 = por %p180, %p181
      %p183 = scmp.ne.s32.totalorder %s169, %s170
      %p184 = scmp.eq.s32.totalorder %s30, 3
      %p185 = por %p183, %p184
      %p187 = scmp.ne.s32.totalorder %s170, %s186
      %p188 = scmp.eq.s32.totalorder %s30, 0
      %p189 = por %p187, %p188
      %s190 = ssub.s32 %s32, %s39
      %p191 = scmp.eq.s32.totalorder %s190, 0
      %s193 = sadd.s32 %s192, 1
      %s194 = scalar_select %p191, %s192, %s193
      %p197 = pneg %p191
      %p198 = scmp.eq.s32.totalorder %s24, 3
      %p199 = por %p197, %p198
      %p200 = scmp.ne.s32.totalorder %s192, %s195
      %p201 = scmp.eq.s32.totalorder %s24, 0
      %p202 = por %p200, %p201
      %p203 = scmp.ne.s32.totalorder %s192, %s195
      %p204 = scmp.eq.s32.totalorder %s29, 3
      %p205 = por %p203, %p204
      %p206 = scmp.ne.s32.totalorder %s195, %s196
      %p207 = scmp.eq.s32.totalorder %s29, 0
      %p208 = por %p206, %p207
      %p209 = scmp.ne.s32.totalorder %s195, %s196
      %p210 = scmp.eq.s32.totalorder %s30, 3
      %p211 = por %p209, %p210
      %p213 = scmp.ne.s32.totalorder %s196, %s212
      %p214 = scmp.eq.s32.totalorder %s30, 0
      %p215 = por %p213, %p214
      %s216 = ssub.s32 %s32, %s39
      %p217 = scmp.eq.s32.totalorder %s216, 0
      %s219 = sadd.s32 %s218, 1
      %s220 = scalar_select %p217, %s218, %s219
      %p223 = pneg %p217
      %p224 = scmp.eq.s32.totalorder %s24, 3
      %p225 = por %p223, %p224
      %p226 = scmp.ne.s32.totalorder %s218, %s221
      %p227 = scmp.eq.s32.totalorder %s24, 0
      %p228 = por %p226, %p227
      %p229 = scmp.ne.s32.totalorder %s218, %s221
      %p230 = scmp.eq.s32.totalorder %s29, 3
      %p231 = por %p229, %p230
      %p232 = scmp.ne.s32.totalorder %s221, %s222
      %p233 = scmp.eq.s32.totalorder %s29, 0
      %p234 = por %p232, %p233
      %p235 = scmp.ne.s32.totalorder %s221, %s222
      %p236 = scmp.eq.s32.totalorder %s30, 3
      %p237 = por %p235, %p236
      %p239 = scmp.ne.s32.totalorder %s222, %s238
      %p240 = scmp.eq.s32.totalorder %s30, 0
      %p241 = por %p239, %p240
      %s242 = ssub.s32 %s32, %s39
      %p243 = scmp.eq.s32.totalorder %s242, 0
      %s245 = sadd.s32 %s244, 1
      %s246 = scalar_select %p243, %s244, %s245
      %p249 = pneg %p243
      %p250 = scmp.eq.s32.totalorder %s24, 3
      %p251 = por %p249, %p250
      %p252 = scmp.ne.s32.totalorder %s244, %s247
      %p253 = scmp.eq.s32.totalorder %s24, 0
      %p254 = por %p252, %p253
      %p255 = scmp.ne.s32.totalorder %s244, %s247
      %p256 = scmp.eq.s32.totalorder %s29, 3
      %p257 = por %p255, %p256
      %p258 = scmp.ne.s32.totalorder %s247, %s248
      %p259 = scmp.eq.s32.totalorder %s29, 0
      %p260 = por %p258, %p259
      %p261 = scmp.ne.s32.totalorder %s247, %s248
      %p262 = scmp.eq.s32.totalorder %s30, 3
      %p263 = por %p261, %p262
      %p265 = scmp.ne.s32.totalorder %s248, %s264
      %p266 = scmp.eq.s32.totalorder %s30, 0
      %p267 = por %p265, %p266
      %s268 = ssub.s32 %s32, %s39
      %p269 = scmp.eq.s32.totalorder %s268, 0
      %s271 = sadd.s32 %s270, 1
      %s272 = scalar_select %p269, %s270, %s271
      %p275 = pneg %p269
      %p276 = scmp.eq.s32.totalorder %s24, 3
      %p277 = por %p275, %p276
      %p278 = scmp.ne.s32.totalorder %s270, %s273
      %p279 = scmp.eq.s32.totalorder %s24, 0
      %p280 = por %p278, %p279
      %p281 = scmp.ne.s32.totalorder %s270, %s273
      %p282 = scmp.eq.s32.totalorder %s29, 3
      %p283 = por %p281, %p282
      %p284 = scmp.ne.s32.totalorder %s273, %s274
      %p285 = scmp.eq.s32.totalorder %s29, 0
      %p286 = por %p284, %p285
      %p287 = scmp.ne.s32.totalorder %s273, %s274
      %p288 = scmp.eq.s32.totalorder %s30, 3
      %p289 = por %p287, %p288
      %p291 = scmp.ne.s32.totalorder %s274, %s290
      %p292 = scmp.eq.s32.totalorder %s30, 0
      %p293 = por %p291, %p292
      %s294 = ssub.s32 %s32, %s39
      %p295 = scmp.eq.s32.totalorder %s294, 0
      %s297 = sadd.s32 %s296, 1
      %s298 = scalar_select %p295, %s296, %s297
      %p301 = pneg %p295
      %p302 = scmp.eq.s32.totalorder %s24, 3
      %p303 = por %p301, %p302
      %p304 = scmp.ne.s32.totalorder %s296, %s299
      %p305 = scmp.eq.s32.totalorder %s24, 0
      %p306 = por %p304, %p305
      %p307 = scmp.ne.s32.totalorder %s296, %s299
      %p308 = scmp.eq.s32.totalorder %s29, 3
      %p309 = por %p307, %p308
      %p310 = scmp.ne.s32.totalorder %s299, %s300
      %p311 = scmp.eq.s32.totalorder %s29, 0
      %p312 = por %p310, %p311
      %p313 = scmp.ne.s32.totalorder %s299, %s300
      %p314 = scmp.eq.s32.totalorder %s30, 3
      %p315 = por %p313, %p314
      %p317 = scmp.ne.s32.totalorder %s300, %s316
      %p318 = scmp.eq.s32.totalorder %s30, 0
      %p319 = por %p317, %p318
      %s320 = ssub.s32 %s32, %s39
      %p321 = scmp.eq.s32.totalorder %s320, 0
      %s323 = sadd.s32 %s322, 1
      %s324 = scalar_select %p321, %s322, %s323
      %p327 = pneg %p321
      %p328 = scmp.eq.s32.totalorder %s24, 3
      %p329 = por %p327, %p328
      %p330 = scmp.ne.s32.totalorder %s322, %s325
      %p331 = scmp.eq.s32.totalorder %s24, 0
      %p332 = por %p330, %p331
      %p333 = scmp.ne.s32.totalorder %s322, %s325
      %p334 = scmp.eq.s32.totalorder %s29, 3
      %p335 = por %p333, %p334
      %p336 = scmp.ne.s32.totalorder %s325, %s326
      %p337 = scmp.eq.s32.totalorder %s29, 0
      %p338 = por %p336, %p337
      %p339 = scmp.ne.s32.totalorder %s325, %s326
      %p340 = scmp.eq.s32.totalorder %s30, 3
      %p341 = por %p339, %p340
      %p343 = scmp.ne.s32.totalorder %s326, %s342
      %p344 = scmp.eq.s32.totalorder %s30, 0
      %p345 = por %p343, %p344
      %s347 = sadd.s32 %s346, 1
      %p350 = scmp.eq.s32.totalorder %s24, 3
      %p351 = scmp.ne.s32.totalorder %s346, %s348
      %p352 = scmp.eq.s32.totalorder %s24, 0
      %p353 = por %p351, %p352
      %p354 = scmp.ne.s32.totalorder %s346, %s348
      %p355 = scmp.eq.s32.totalorder %s29, 3
      %p356 = por %p354, %p355
      %p357 = scmp.ne.s32.totalorder %s348, %s349
      %p358 = scmp.eq.s32.totalorder %s29, 0
      %p359 = por %p357, %p358
      %p360 = scmp.ne.s32.totalorder %s348, %s349
      %p361 = scmp.eq.s32.totalorder %s30, 3
      %p362 = por %p360, %p361
      %p364 = scmp.ne.s32.totalorder %s349, %s363
      %p365 = scmp.eq.s32.totalorder %s30, 0
      %p366 = por %p364, %p365
      %s368 = sadd.s32 %s367, 1
      %p371 = scmp.eq.s32.totalorder %s24, 3
      %p372 = scmp.ne.s32.totalorder %s367, %s369
      %p373 = scmp.eq.s32.totalorder %s24, 0
      %p374 = por %p372, %p373
      %p375 = scmp.ne.s32.totalorder %s367, %s369
      %p376 = scmp.eq.s32.totalorder %s29, 3
      %p377 = por %p375, %p376
      %p378 = scmp.ne.s32.totalorder %s369, %s370
      %p379 = scmp.eq.s32.totalorder %s29, 0
      %p380 = por %p378, %p379
      %p381 = scmp.ne.s32.totalorder %s369, %s370
      %p382 = scmp.eq.s32.totalorder %s30, 3
      %p383 = por %p381, %p382
      %p385 = scmp.ne.s32.totalorder %s370, %s384
      %p386 = scmp.eq.s32.totalorder %s30, 0
      %p387 = por %p385, %p386
      %s389 = sadd.s32 %s388, 1
      %p392 = scmp.eq.s32.totalorder %s24, 3
      %p393 = scmp.ne.s32.totalorder %s388, %s390
      %p394 = scmp.eq.s32.totalorder %s24, 0
      %p395 = por %p393, %p394
      %p396 = scmp.ne.s32.totalorder %s388, %s390
      %p397 = scmp.eq.s32.totalorder %s29, 3
      %p398 = por %p396, %p397
      %p399 = scmp.ne.s32.totalorder %s390, %s391
      %p400 = scmp.eq.s32.totalorder %s29, 0
      %p401 = por %p399, %p400
      %p402 = scmp.ne.s32.totalorder %s390, %s391
      %p403 = scmp.eq.s32.totalorder %s30, 3
      %p404 = por %p402, %p403
      %p406 = scmp.ne.s32.totalorder %s391, %s405
      %p407 = scmp.eq.s32.totalorder %s30, 0
      %p408 = por %p406, %p407
      %s409 = ssub.s32 %s31, %s43
      %p410 = scmp.eq.s32.totalorder %s409, 0
      %s412 = sadd.s32 %s411, 1
      %s413 = scalar_select %p410, %s411, %s412
      %p416 = pneg %p410
      %p417 = scmp.eq.s32.totalorder %s24, 3
      %p418 = por %p416, %p417
      %p419 = scmp.ne.s32.totalorder %s411, %s414
      %p420 = scmp.eq.s32.totalorder %s24, 0
      %p421 = por %p419, %p420
      %p422 = scmp.ne.s32.totalorder %s411, %s414
      %p423 = scmp.eq.s32.totalorder %s29, 3
      %p424 = por %p422, %p423
      %p425 = scmp.ne.s32.totalorder %s414, %s415
      %p426 = scmp.eq.s32.totalorder %s29, 0
      %p427 = por %p425, %p426
      %p428 = scmp.ne.s32.totalorder %s414, %s415
      %p429 = scmp.eq.s32.totalorder %s30, 3
      %p430 = por %p428, %p429
      %p432 = scmp.ne.s32.totalorder %s415, %s431
      %p433 = scmp.eq.s32.totalorder %s30, 0
      %p434 = por %p432, %p433
      %p435 = scmp.le.s32.totalorder 1, %s24
      %p436 = scmp.lt.s32.totalorder %s24, 5
      %p437 = pnand %p435, %p436
      %p438 = pneg %p437
      // Predicated region
      $region9: #{_lambda_.1} parent=5 // pred_check
        _
      $region10: #{_lambda_.1} parent=5 // pred_check_branch
        %440 = sbr.rel (%p437) target = $region12
      $region11: #{_lambda_.1} parent=5 // pred_region
        %s441 = ssub.s32 %s24, 1
        // Predicated region
        $region13: #{_lambda_.1} parent=11 // pred_check
          %p442 = pneg %p83
        $region14: #{_lambda_.1} parent=11 // pred_check_branch
          %444 = sbr.rel (%p442) target = $region16
        $region15: #{_lambda_.1} parent=11 // pred_region
          _
        $region16: #{_lambda_.1} parent=11 // pred_fallthru
          _
        // Predicated region
        $region17: #{_lambda_.1} parent=11 // pred_check
          %p445 = pneg %p104
        $region18: #{_lambda_.1} parent=11 // pred_check_branch
          %447 = sbr.rel (%p445) target = $region20
        $region19: #{_lambda_.1} parent=11 // pred_region
          _
        $region20: #{_lambda_.1} parent=11 // pred_fallthru
          _
        // Predicated region
        $region21: #{_lambda_.1} parent=11 // pred_check
          %p448 = pneg %p359
        $region22: #{_lambda_.1} parent=11 // pred_check_branch
          %450 = sbr.rel (%p448) target = $region24
        $region23: #{_lambda_.1} parent=11 // pred_region
          _
        $region24: #{_lambda_.1} parent=11 // pred_fallthru
          _
        // Predicated region
        $region25: #{_lambda_.1} parent=11 // pred_check
          %p451 = pneg %p380
        $region26: #{_lambda_.1} parent=11 // pred_check_branch
          %453 = sbr.rel (%p451) target = $region28
        $region27: #{_lambda_.1} parent=11 // pred_region
          _
        $region28: #{_lambda_.1} parent=11 // pred_fallthru
          _
        // Predicated region
        $region29: #{_lambda_.1} parent=11 // pred_check
          %p454 = pneg %p401
        $region30: #{_lambda_.1} parent=11 // pred_check_branch
          %456 = sbr.rel (%p454) target = $region32
        $region31: #{_lambda_.1} parent=11 // pred_region
          _
        $region32: #{_lambda_.1} parent=11 // pred_fallthru
          _
      $region12: #{_lambda_.1} parent=5 // pred_fallthru
        _
      %p457 = scmp.lt.s32.totalorder %s24, 4
      // Predicated region
      $region33: #{_lambda_.1} parent=5 // pred_check
        %p458 = pneg %p457
      $region34: #{_lambda_.1} parent=5 // pred_check_branch
        %460 = sbr.rel (%p458) target = $region36
      $region35: #{_lambda_.1} parent=5 // pred_region
        // Predicated region
        $region37: #{_lambda_.1} parent=35 // pred_check
          %p461 = pneg %p56
        $region38: #{_lambda_.1} parent=35 // pred_check_branch
          %463 = sbr.rel (%p461) target = $region40
        $region39: #{_lambda_.1} parent=35 // pred_region
          %s464 = smul.u32 16, %s31
          %p465 = scmp.lt.s32.totalorder %s464, 31
          %s466 = scalar_select %p465, %s464, 31
          %s467 = smul.addr %s466, 4
          %s468 = scalar_lea.vmem %s0, %s467
          %s469 = smul.u32 16, %s31
        $region40: #{_lambda_.1} parent=35 // pred_fallthru
          _
        // Predicated region
        $region41: #{_lambda_.1} parent=35 // pred_check
          %p470 = pneg %p124
        $region42: #{_lambda_.1} parent=35 // pred_check_branch
          %472 = sbr.rel (%p470) target = $region44
        $region43: #{_lambda_.1} parent=35 // pred_region
          %p473 = scmp.lt.s32.totalorder %s32, 1
          %s474 = scalar_select %p473, %s32, 1
          %s475 = smul.addr %s474, 4
          %s476 = smul.addr %s475, 4
          %s477 = scalar_lea.vmem %s3, %s476
        $region44: #{_lambda_.1} parent=35 // pred_fallthru
          _
        // Predicated region
        $region45: #{_lambda_.1} parent=35 // pred_check
          %p478 = pneg %p150
        $region46: #{_lambda_.1} parent=35 // pred_check_branch
          %480 = sbr.rel (%p478) target = $region48
        $region47: #{_lambda_.1} parent=35 // pred_region
          %p481 = scmp.lt.s32.totalorder %s32, 1
          %s482 = scalar_select %p481, %s32, 1
          %s483 = scalar_lea.vmem %s4, %s482
        $region48: #{_lambda_.1} parent=35 // pred_fallthru
          _
        // Predicated region
        $region49: #{_lambda_.1} parent=35 // pred_check
          %p484 = pneg %p176
        $region50: #{_lambda_.1} parent=35 // pred_check_branch
          %486 = sbr.rel (%p484) target = $region52
        $region51: #{_lambda_.1} parent=35 // pred_region
          %p487 = scmp.lt.s32.totalorder %s32, 1
          %s488 = scalar_select %p487, %s32, 1
          %s489 = scalar_lea.vmem %s5, %s488
        $region52: #{_lambda_.1} parent=35 // pred_fallthru
          _
        // Predicated region
        $region53: #{_lambda_.1} parent=35 // pred_check
          %p490 = pneg %p202
        $region54: #{_lambda_.1} parent=35 // pred_check_branch
          %492 = sbr.rel (%p490) target = $region56
        $region55: #{_lambda_.1} parent=35 // pred_region
          %p493 = scmp.lt.s32.totalorder %s32, 1
          %s494 = scalar_select %p493, %s32, 1
          %s495 = smul.addr %s494, 4
          %s496 = smul.addr %s495, 4
          %s497 = scalar_lea.vmem %s6, %s496
        $region56: #{_lambda_.1} parent=35 // pred_fallthru
          _
        // Predicated region
        $region57: #{_lambda_.1} parent=35 // pred_check
          %p498 = pneg %p228
        $region58: #{_lambda_.1} parent=35 // pred_check_branch
          %500 = sbr.rel (%p498) target = $region60
        $region59: #{_lambda_.1} parent=35 // pred_region
          %p501 = scmp.lt.s32.totalorder %s32, 1
          %s502 = scalar_select %p501, %s32, 1
          %s503 = scalar_lea.vmem %s7, %s502
        $region60: #{_lambda_.1} parent=35 // pred_fallthru
          _
        // Predicated region
        $region61: #{_lambda_.1} parent=35 // pred_check
          %p504 = pneg %p254
        $region62: #{_lambda_.1} parent=35 // pred_check_branch
          %506 = sbr.rel (%p504) target = $region64
        $region63: #{_lambda_.1} parent=35 // pred_region
          %p507 = scmp.lt.s32.totalorder %s32, 1
          %s508 = scalar_select %p507, %s32, 1
          %s509 = smul.addr %s508, 4
          %s510 = smul.addr %s509, 4
          %s511 = scalar_lea.vmem %s8, %s510
        $region64: #{_lambda_.1} parent=35 // pred_fallthru
          _
        // Predicated region
        $region65: #{_lambda_.1} parent=35 // pred_check
          %p512 = pneg %p280
        $region66: #{_lambda_.1} parent=35 // pred_check_branch
          %514 = sbr.rel (%p512) target = $region68
        $region67: #{_lambda_.1} parent=35 // pred_region
          %p515 = scmp.lt.s32.totalorder %s32, 1
          %s516 = scalar_select %p515, %s32, 1
          %s517 = scalar_lea.vmem %s9, %s516
        $region68: #{_lambda_.1} parent=35 // pred_fallthru
          _
        // Predicated region
        $region69: #{_lambda_.1} parent=35 // pred_check
          %p518 = pneg %p306
        $region70: #{_lambda_.1} parent=35 // pred_check_branch
          %520 = sbr.rel (%p518) target = $region72
        $region71: #{_lambda_.1} parent=35 // pred_region
          %p521 = scmp.lt.s32.totalorder %s32, 1
          %s522 = scalar_select %p521, %s32, 1
          %s523 = smul.addr %s522, 8
          %s524 = smul.addr %s523, 4
          %s525 = scalar_lea.vmem %s10, %s524
        $region72: #{_lambda_.1} parent=35 // pred_fallthru
          _
        // Predicated region
        $region73: #{_lambda_.1} parent=35 // pred_check
          %p526 = pneg %p332
        $region74: #{_lambda_.1} parent=35 // pred_check_branch
          %528 = sbr.rel (%p526) target = $region76
        $region75: #{_lambda_.1} parent=35 // pred_region
          %p529 = scmp.lt.s32.totalorder %s32, 1
          %s530 = scalar_select %p529, %s32, 1
          %s531 = scalar_lea.vmem %s11, %s530
        $region76: #{_lambda_.1} parent=35 // pred_fallthru
          _
      $region36: #{_lambda_.1} parent=5 // pred_fallthru
        _
      %p532 = scmp.le.s32.totalorder 1, %s24
      %p533 = scmp.lt.s32.totalorder %s24, 5
      %p534 = pnand %p532, %p533
      %p535 = pneg %p534
      // Predicated region
      $region77: #{_lambda_.1} parent=5 // pred_check
        _
      $region78: #{_lambda_.1} parent=5 // pred_check_branch
        %537 = sbr.rel (%p534) target = $region80
      $region79: #{_lambda_.1} parent=5 // pred_region
        %s538 = ssub.s32 %s24, 1
        %s539 = smul.u32 16, %s33
        %p540 = scmp.lt.s32.totalorder %s539, 31
        %s541 = scalar_select %p540, %s539, 31
        %s542 = smul.addr %s541, 4
        %s543 = scalar_lea.vmem %s0, %s542
        %p544 = pneg %p62
        %p545 = pneg %p59
        %p546 = pneg %p83
        %p547 = pneg %p80
        %p548 = pneg %p104
        %p549 = pneg %p101
        %p550 = scmp.lt.s32.totalorder %s34, 1
        %s551 = scalar_select %p550, %s34, 1
        %s552 = smul.addr %s551, 4
        %s553 = smul.addr %s552, 4
        %s554 = scalar_lea.vmem %s3, %s553
        %p555 = pneg %p130
        %p556 = pneg %p127
        %p557 = scmp.lt.s32.totalorder %s34, 1
        %s558 = scalar_select %p557, %s34, 1
        %s559 = scalar_lea.vmem %s4, %s558
        %p560 = pneg %p156
        %p561 = pneg %p153
        %p562 = scmp.lt.s32.totalorder %s34, 1
        %s563 = scalar_select %p562, %s34, 1
        %s564 = scalar_lea.vmem %s5, %s563
        %p565 = pneg %p182
        %p566 = pneg %p179
        %p567 = scmp.lt.s32.totalorder %s34, 1
        %s568 = scalar_select %p567, %s34, 1
        %s569 = smul.addr %s568, 4
        %s570 = smul.addr %s569, 4
        %s571 = scalar_lea.vmem %s6, %s570
        %p572 = pneg %p208
        %p573 = pneg %p205
        %p574 = scmp.lt.s32.totalorder %s34, 1
        %s575 = scalar_select %p574, %s34, 1
        %s576 = scalar_lea.vmem %s7, %s575
        %p577 = pneg %p234
        %p578 = pneg %p231
        %p579 = scmp.lt.s32.totalorder %s34, 1
        %s580 = scalar_select %p579, %s34, 1
        %s581 = smul.addr %s580, 4
        %s582 = smul.addr %s581, 4
        %s583 = scalar_lea.vmem %s8, %s582
        %p584 = pneg %p260
        %p585 = pneg %p257
        %p586 = scmp.lt.s32.totalorder %s34, 1
        %s587 = scalar_select %p586, %s34, 1
        %s588 = scalar_lea.vmem %s9, %s587
        %p589 = pneg %p286
        %p590 = pneg %p283
        %p591 = scmp.lt.s32.totalorder %s34, 1
        %s592 = scalar_select %p591, %s34, 1
        %s593 = smul.addr %s592, 8
        %s594 = smul.addr %s593, 4
        %s595 = scalar_lea.vmem %s10, %s594
        %p596 = pneg %p312
        %p597 = pneg %p309
        %p598 = scmp.lt.s32.totalorder %s34, 1
        %s599 = scalar_select %p598, %s34, 1
        %s600 = scalar_lea.vmem %s11, %s599
        %p601 = pneg %p338
        %p602 = pneg %p335
        %p603 = pneg %p359
        %p604 = pneg %p356
        %p605 = pneg %p380
        %p606 = pneg %p377
        %p607 = pneg %p401
        %p608 = pneg %p398
        %p609 = pneg %p427
        %p610 = pneg %p424
        %s611 = sand.u32 %s414, 1
        %s612 = scalar_lea.sflag [#allocation4], %s611
        %s613 = sand.u32 %s414, 1
        %s614 = smul.addr %s613, 8
        %s615 = scalar_lea.vmem [#allocation3], %s614
        %s616 = smul.u32 16, %s33
        %p617 = scmp.lt.s32.totalorder %s616, 31
        %s618 = scalar_select %p617, %s616, 31
        %s619 = smul.addr %s618, 4
        %s620 = scalar_lea.vmem %s0, %s619
        %s621 = smul.u32 16, %s33
        %p622 = scmp.lt.s32.totalorder %s34, 1
        %s623 = scalar_select %p622, %s34, 1
        %s624 = smul.addr %s623, 4
        %s625 = smul.addr %s624, 4
        %s626 = scalar_lea.vmem %s3, %s625
        %p627 = scmp.lt.s32.totalorder %s34, 1
        %s628 = scalar_select %p627, %s34, 1
        %s629 = scalar_lea.vmem %s4, %s628
        %p630 = scmp.lt.s32.totalorder %s34, 1
        %s631 = scalar_select %p630, %s34, 1
        %s632 = scalar_lea.vmem %s5, %s631
        %p633 = scmp.lt.s32.totalorder %s34, 1
        %s634 = scalar_select %p633, %s34, 1
        %s635 = smul.addr %s634, 4
        %s636 = smul.addr %s635, 4
        %s637 = scalar_lea.vmem %s6, %s636
        %p638 = scmp.lt.s32.totalorder %s34, 1
        %s639 = scalar_select %p638, %s34, 1
        %s640 = scalar_lea.vmem %s7, %s639
        %p641 = scmp.lt.s32.totalorder %s34, 1
        %s642 = scalar_select %p641, %s34, 1
        %s643 = smul.addr %s642, 4
        %s644 = smul.addr %s643, 4
        %s645 = scalar_lea.vmem %s8, %s644
        %p646 = scmp.lt.s32.totalorder %s34, 1
        %s647 = scalar_select %p646, %s34, 1
        %s648 = scalar_lea.vmem %s9, %s647
        %p649 = scmp.lt.s32.totalorder %s34, 1
        %s650 = scalar_select %p649, %s34, 1
        %s651 = smul.addr %s650, 8
        %s652 = smul.addr %s651, 4
        %s653 = scalar_lea.vmem %s10, %s652
        %p654 = scmp.lt.s32.totalorder %s34, 1
        %s655 = scalar_select %p654, %s34, 1
        %s656 = scalar_lea.vmem %s11, %s655
        %p658 = scmp.eq.s32.totalorder %s34, 0
        // Predicated region
        $region81: #{_lambda_.1} parent=79 // pred_check
          %p659 = pneg %p658
        $region82: #{_lambda_.1} parent=79 // pred_check_branch
          %661 = sbr.rel (%p659) target = $region84
        $region83: #{_lambda_.1} parent=79 // pred_region
          %v662 = vld [vmem:[%s620] sm:$0xf]
          %v663 = vld [vmem:[%s620 + $0x4] sm:$0xf]
          %v664 = vld [vmem:[%s620 + $0x8] sm:$0xf]
          %v665 = vld [vmem:[%s620 + $0xc] sm:$0xf]
          %v666 = vld [vmem:[%s620 + $0x10] sm:$0xf]
          %v667 = vld [vmem:[%s620 + $0x14] sm:$0xf]
          %v668 = vld [vmem:[%s620 + $0x18] sm:$0xf]
          %v669 = vld [vmem:[%s620 + $0x1c] sm:$0xf]
          %v670 = vld [vmem:[%s620 + $0x20] sm:$0xf]
          %v671 = vld [vmem:[%s620 + $0x24] sm:$0xf]
          %v672 = vld [vmem:[%s620 + $0x28] sm:$0xf]
          %v673 = vld [vmem:[%s620 + $0x2c] sm:$0xf]
          %v674 = vld [vmem:[%s620 + $0x30] sm:$0xf]
          %v675 = vld [vmem:[%s620 + $0x34] sm:$0xf]
          %v676 = vld [vmem:[%s620 + $0x38] sm:$0xf]
          %v677 = vld [vmem:[%s620 + $0x3c] sm:$0xf]
          %v678 = vld [vmem:[%s1] sm:$0xf]
          %v679 = vld [vmem:[%s1 + $0x4] sm:$0xf]
          %v680 = vld [vmem:[%s1 + $0x8] sm:$0xf]
          %v681 = vld [vmem:[%s1 + $0xc] sm:$0xf]
          %v682 = vld [vmem:[%s1 + $0x10] sm:$0xf]
          %v683 = vld [vmem:[%s1 + $0x14] sm:$0xf]
          %v684 = vld [vmem:[%s2] sm:$0xff]
          %v685 = vld [vmem:[%s2 + $0x8] sm:$0xff]
          %v686 = vld [vmem:[%s2 + $0x10] sm:$0xff]
          %v687 = vld [vmem:[%s2 + $0x18] sm:$0xff]
          %v688 = vld [vmem:[%s2 + $0x20] sm:$0xff]
          %v689 = vld [vmem:[%s2 + $0x28] sm:$0xff]
          %v690 = vld [vmem:[%s2 + $0x30] sm:$0xff]
          %v691 = vld [vmem:[%s2 + $0x38] sm:$0xff]
          %v692 = vld [vmem:[%s2 + $0x40] sm:$0xff]
          %v693 = vld [vmem:[%s2 + $0x48] sm:$0xff]
          %v694 = vld [vmem:[%s2 + $0x50] sm:$0xff]
          %v695 = vld [vmem:[%s2 + $0x58] sm:$0xff]
          %v696 = vld [vmem:[%s2 + $0x60] sm:$0xff]
          %v697 = vld [vmem:[%s2 + $0x68] sm:$0xff]
          %v698 = vld [vmem:[%s2 + $0x70] sm:$0xff]
          %v699 = vld [vmem:[%s2 + $0x78] sm:$0xff]
          %v716 = vunpack.c.l.b16 %v662
          %v717 = vunpack.c.l.b16 %v663
          %v718 = vunpack.c.l.b16 %v664
          %v719 = vunpack.c.l.b16 %v665
          %v720 = vunpack.c.l.b16 %v666
          %v721 = vunpack.c.l.b16 %v667
          %v722 = vunpack.c.l.b16 %v668
          %v723 = vunpack.c.l.b16 %v669
          %v724 = vunpack.c.l.b16 %v670
          %v725 = vunpack.c.l.b16 %v671
          %v726 = vunpack.c.l.b16 %v672
          %v727 = vunpack.c.l.b16 %v673
          %v728 = vunpack.c.l.b16 %v674
          %v729 = vunpack.c.l.b16 %v675
          %v730 = vunpack.c.l.b16 %v676
          %v731 = vunpack.c.l.b16 %v677
          %v732 = vpack.c.b16 %v717, %v716
          %v733 = vpack.c.b16 %v719, %v718
          %v734 = vpack.c.b16 %v721, %v720
          %v735 = vpack.c.b16 %v723, %v722
          %v736 = vpack.c.b16 %v725, %v724
          %v737 = vpack.c.b16 %v727, %v726
          %v738 = vpack.c.b16 %v729, %v728
          %v739 = vpack.c.b16 %v731, %v730
          %v746 = vunpack.c.l.b16 %v678
          %v747 = vunpack.c.l.b16 %v679
          %v748 = vunpack.c.l.b16 %v680
          %v749 = vunpack.c.l.b16 %v681
          %v750 = vunpack.c.l.b16 %v682
          %v751 = vunpack.c.l.b16 %v683
          %v752 = vpack.c.b16 %v747, %v746
          %v753 = vpack.c.b16 %v749, %v748
          %v754 = vpack.c.b16 %v751, %v750
          %vm758 = vcmask 392192
          %v760 = vsel %vm758, %v732, 0
          %v763 = vsel %vm758, %v733, 0
          %v766 = vsel %vm758, %v734, 0
          %v769 = vsel %vm758, %v735, 0
          %v772 = vsel %vm758, %v736, 0
          %v775 = vsel %vm758, %v737, 0
          %v778 = vsel %vm758, %v738, 0
          %v781 = vsel %vm758, %v739, 0
          %783 = vmatpush.bf16.msra.mxu0 0
          %784 = vmatpush.bf16.msra.mxu0 0
          %785 = vmatpush.bf16.msra.mxu0 0
          %786 = vmatpush.bf16.msra.mxu0 0
          %787 = vmatpush.bf16.msra.mxu0 0
          %788 = vmatpush.bf16.msra.mxu0 %v754
          %789 = vmatpush.bf16.msra.mxu0 %v753
          %790 = vmatpush.bf16.msra.mxu0 %v752
          %791 = vmatmul.bf16.gmra.mxu0 %v760
          %v792 = vpop.f32.mrf.mxu0
          %v793 = vadd.f32 %v684, %v792
          %v794 = vpop.f32.mrf.mxu0
          %v795 = vadd.f32 %v685, %v794
          %796 = vmatmul.bf16.gmra.mxu0 %v763
          %v797 = vpop.f32.mrf.mxu0
          %v798 = vadd.f32 %v686, %v797
          %v799 = vpop.f32.mrf.mxu0
          %v800 = vadd.f32 %v687, %v799
          %801 = vmatmul.bf16.gmra.mxu0 %v766
          %v802 = vpop.f32.mrf.mxu0
          %v803 = vadd.f32 %v688, %v802
          %v804 = vpop.f32.mrf.mxu0
          %v805 = vadd.f32 %v689, %v804
          %806 = vmatmul.bf16.gmra.mxu0 %v769
          %v807 = vpop.f32.mrf.mxu0
          %v808 = vadd.f32 %v690, %v807
          %v809 = vpop.f32.mrf.mxu0
          %v810 = vadd.f32 %v691, %v809
          %811 = vmatmul.bf16.gmra.mxu0 %v772
          %v812 = vpop.f32.mrf.mxu0
          %v813 = vadd.f32 %v692, %v812
          %v814 = vpop.f32.mrf.mxu0
          %v815 = vadd.f32 %v693, %v814
          %816 = vmatmul.bf16.gmra.mxu0 %v775
          %v817 = vpop.f32.mrf.mxu0
          %v818 = vadd.f32 %v694, %v817
          %v819 = vpop.f32.mrf.mxu0
          %v820 = vadd.f32 %v695, %v819
          %821 = vmatmul.bf16.gmra.mxu0 %v778
          %v822 = vpop.f32.mrf.mxu0
          %v823 = vadd.f32 %v696, %v822
          %v824 = vpop.f32.mrf.mxu0
          %v825 = vadd.f32 %v697, %v824
          %826 = vmatmul.bf16.gmra.mxu0 %v781
          %v827 = vpop.f32.mrf.mxu0
          %v828 = vadd.f32 %v698, %v827
          %v829 = vpop.f32.mrf.mxu0
          %v830 = vadd.f32 %v699, %v829
          %831 = vdwg.mxu0
          %v832 = vmul.f32 %v793, %v793
          %v833 = vmul.f32 %v795, %v795
          %v834 = vmul.f32 %v798, %v798
          %v835 = vmul.f32 %v800, %v800
          %v836 = vmul.f32 %v803, %v803
          %v837 = vmul.f32 %v805, %v805
          %v838 = vmul.f32 %v808, %v808
          %v839 = vmul.f32 %v810, %v810
          %v840 = vmul.f32 %v813, %v813
          %v841 = vmul.f32 %v815, %v815
          %v842 = vmul.f32 %v818, %v818
          %v843 = vmul.f32 %v820, %v820
          %v844 = vmul.f32 %v823, %v823
          %v845 = vmul.f32 %v825, %v825
          %v846 = vmul.f32 %v828, %v828
          %v847 = vmul.f32 %v830, %v830
          %vm848 = vcmask 261120
          %v849 = vsel %vm848, %v832, 0.0
          %850 = vadd.xlane.f32.xlu0 %v849
          %v851 = vpop.xlane.xlu0 %850
          %v852 = vsel %vm848, %v833, 0.0
          %853 = vadd.xlane.f32.xlu0 %v852
          %v854 = vpop.xlane.xlu0 %853
          %v855 = vsel %vm848, %v834, 0.0
          %856 = vadd.xlane.f32.xlu0 %v855
          %v857 = vpop.xlane.xlu0 %856
          %v858 = vsel %vm848, %v835, 0.0
          %859 = vadd.xlane.f32.xlu0 %v858
          %v860 = vpop.xlane.xlu0 %859
          %v861 = vsel %vm848, %v836, 0.0
          %862 = vadd.xlane.f32.xlu0 %v861
          %v863 = vpop.xlane.xlu0 %862
          %v864 = vsel %vm848, %v837, 0.0
          %865 = vadd.xlane.f32.xlu0 %v864
          %v866 = vpop.xlane.xlu0 %865
          %v867 = vsel %vm848, %v838, 0.0
          %868 = vadd.xlane.f32.xlu0 %v867
          %v869 = vpop.xlane.xlu0 %868
          %v870 = vsel %vm848, %v839, 0.0
          %871 = vadd.xlane.f32.xlu0 %v870
          %v872 = vpop.xlane.xlu0 %871
          %v873 = vsel %vm848, %v840, 0.0
          %874 = vadd.xlane.f32.xlu0 %v873
          %v875 = vpop.xlane.xlu0 %874
          %v876 = vsel %vm848, %v841, 0.0
          %877 = vadd.xlane.f32.xlu0 %v876
          %v878 = vpop.xlane.xlu0 %877
          %v879 = vsel %vm848, %v842, 0.0
          %880 = vadd.xlane.f32.xlu0 %v879
          %v881 = vpop.xlane.xlu0 %880
          %v882 = vsel %vm848, %v843, 0.0
          %883 = vadd.xlane.f32.xlu0 %v882
          %v884 = vpop.xlane.xlu0 %883
          %v885 = vsel %vm848, %v844, 0.0
          %886 = vadd.xlane.f32.xlu0 %v885
          %v887 = vpop.xlane.xlu0 %886
          %v888 = vsel %vm848, %v845, 0.0
          %889 = vadd.xlane.f32.xlu0 %v888
          %v890 = vpop.xlane.xlu0 %889
          %v891 = vsel %vm848, %v846, 0.0
          %892 = vadd.xlane.f32.xlu0 %v891
          %v893 = vpop.xlane.xlu0 %892
          %v894 = vsel %vm848, %v847, 0.0
          %895 = vadd.xlane.f32.xlu0 %v894
          %v896 = vpop.xlane.xlu0 %895
          %v897 = vmax.f32 %v851, 1e-24
          %v898 = vmax.f32 %v854, 1e-24
          %v899 = vmax.f32 %v857, 1e-24
          %v900 = vmax.f32 %v860, 1e-24
          %v901 = vmax.f32 %v863, 1e-24
          %v902 = vmax.f32 %v866, 1e-24
          %v903 = vmax.f32 %v869, 1e-24
          %v904 = vmax.f32 %v872, 1e-24
          %v905 = vmax.f32 %v875, 1e-24
          %v906 = vmax.f32 %v878, 1e-24
          %v907 = vmax.f32 %v881, 1e-24
          %v908 = vmax.f32 %v884, 1e-24
          %v909 = vmax.f32 %v887, 1e-24
          %v910 = vmax.f32 %v890, 1e-24
          %v911 = vmax.f32 %v893, 1e-24
          %v912 = vmax.f32 %v896, 1e-24
          %v913 = vrsqrt.pop %v897
          %v914 = vmul.f32 %v913, %v897
          %v915 = vmul.f32 %v914, %v913
          %v916 = vmul.f32 0.5, %v915
          %v917 = vsub.f32 1.5, %v916
          %v918 = vmul.f32 %v913, %v917
          %vm919 = vweird.f32 %v897
          %vm920 = vweird.f32 %v913
          %vm921 = vmor %vm919, %vm920
          %v922 = vsel %vm921, %v913, %v918
          %v923 = vrsqrt.pop %v898
          %v924 = vmul.f32 %v923, %v898
          %v925 = vmul.f32 %v924, %v923
          %v926 = vmul.f32 0.5, %v925
          %v927 = vsub.f32 1.5, %v926
          %v928 = vmul.f32 %v923, %v927
          %vm929 = vweird.f32 %v898
          %vm930 = vweird.f32 %v923
          %vm931 = vmor %vm929, %vm930
          %v932 = vsel %vm931, %v923, %v928
          %v933 = vrsqrt.pop %v899
          %v934 = vmul.f32 %v933, %v899
          %v935 = vmul.f32 %v934, %v933
          %v936 = vmul.f32 0.5, %v935
          %v937 = vsub.f32 1.5, %v936
          %v938 = vmul.f32 %v933, %v937
          %vm939 = vweird.f32 %v899
          %vm940 = vweird.f32 %v933
          %vm941 = vmor %vm939, %vm940
          %v942 = vsel %vm941, %v933, %v938
          %v943 = vrsqrt.pop %v900
          %v944 = vmul.f32 %v943, %v900
          %v945 = vmul.f32 %v944, %v943
          %v946 = vmul.f32 0.5, %v945
          %v947 = vsub.f32 1.5, %v946
          %v948 = vmul.f32 %v943, %v947
          %vm949 = vweird.f32 %v900
          %vm950 = vweird.f32 %v943
          %vm951 = vmor %vm949, %vm950
          %v952 = vsel %vm951, %v943, %v948
          %v953 = vrsqrt.pop %v901
          %v954 = vmul.f32 %v953, %v901
          %v955 = vmul.f32 %v954, %v953
          %v956 = vmul.f32 0.5, %v955
          %v957 = vsub.f32 1.5, %v956
          %v958 = vmul.f32 %v953, %v957
          %vm959 = vweird.f32 %v901
          %vm960 = vweird.f32 %v953
          %vm961 = vmor %vm959, %vm960
          %v962 = vsel %vm961, %v953, %v958
          %v963 = vrsqrt.pop %v902
          %v964 = vmul.f32 %v963, %v902
          %v965 = vmul.f32 %v964, %v963
          %v966 = vmul.f32 0.5, %v965
          %v967 = vsub.f32 1.5, %v966
          %v968 = vmul.f32 %v963, %v967
          %vm969 = vweird.f32 %v902
          %vm970 = vweird.f32 %v963
          %vm971 = vmor %vm969, %vm970
          %v972 = vsel %vm971, %v963, %v968
          %v973 = vrsqrt.pop %v903
          %v974 = vmul.f32 %v973, %v903
          %v975 = vmul.f32 %v974, %v973
          %v976 = vmul.f32 0.5, %v975
          %v977 = vsub.f32 1.5, %v976
          %v978 = vmul.f32 %v973, %v977
          %vm979 = vweird.f32 %v903
          %vm980 = vweird.f32 %v973
          %vm981 = vmor %vm979, %vm980
          %v982 = vsel %vm981, %v973, %v978
          %v983 = vrsqrt.pop %v904
          %v984 = vmul.f32 %v983, %v904
          %v985 = vmul.f32 %v984, %v983
          %v986 = vmul.f32 0.5, %v985
          %v987 = vsub.f32 1.5, %v986
          %v988 = vmul.f32 %v983, %v987
          %vm989 = vweird.f32 %v904
          %vm990 = vweird.f32 %v983
          %vm991 = vmor %vm989, %vm990
          %v992 = vsel %vm991, %v983, %v988
          %v993 = vrsqrt.pop %v905
          %v994 = vmul.f32 %v993, %v905
          %v995 = vmul.f32 %v994, %v993
          %v996 = vmul.f32 0.5, %v995
          %v997 = vsub.f32 1.5, %v996
          %v998 = vmul.f32 %v993, %v997
          %vm999 = vweird.f32 %v905
          %vm1000 = vweird.f32 %v993
          %vm1001 = vmor %vm999, %vm1000
          %v1002 = vsel %vm1001, %v993, %v998
          %v1003 = vrsqrt.pop %v906
          %v1004 = vmul.f32 %v1003, %v906
          %v1005 = vmul.f32 %v1004, %v1003
          %v1006 = vmul.f32 0.5, %v1005
          %v1007 = vsub.f32 1.5, %v1006
          %v1008 = vmul.f32 %v1003, %v1007
          %vm1009 = vweird.f32 %v906
          %vm1010 = vweird.f32 %v1003
          %vm1011 = vmor %vm1009, %vm1010
          %v1012 = vsel %vm1011, %v1003, %v1008
          %v1013 = vrsqrt.pop %v907
          %v1014 = vmul.f32 %v1013, %v907
          %v1015 = vmul.f32 %v1014, %v1013
          %v1016 = vmul.f32 0.5, %v1015
          %v1017 = vsub.f32 1.5, %v1016
          %v1018 = vmul.f32 %v1013, %v1017
          %vm1019 = vweird.f32 %v907
          %vm1020 = vweird.f32 %v1013
          %vm1021 = vmor %vm1019, %vm1020
          %v1022 = vsel %vm1021, %v1013, %v1018
          %v1023 = vrsqrt.pop %v908
          %v1024 = vmul.f32 %v1023, %v908
          %v1025 = vmul.f32 %v1024, %v1023
          %v1026 = vmul.f32 0.5, %v1025
          %v1027 = vsub.f32 1.5, %v1026
          %v1028 = vmul.f32 %v1023, %v1027
          %vm1029 = vweird.f32 %v908
          %vm1030 = vweird.f32 %v1023
          %vm1031 = vmor %vm1029, %vm1030
          %v1032 = vsel %vm1031, %v1023, %v1028
          %v1033 = vrsqrt.pop %v909
          %v1034 = vmul.f32 %v1033, %v909
          %v1035 = vmul.f32 %v1034, %v1033
          %v1036 = vmul.f32 0.5, %v1035
          %v1037 = vsub.f32 1.5, %v1036
          %v1038 = vmul.f32 %v1033, %v1037
          %vm1039 = vweird.f32 %v909
          %vm1040 = vweird.f32 %v1033
          %vm1041 = vmor %vm1039, %vm1040
          %v1042 = vsel %vm1041, %v1033, %v1038
          %v1043 = vrsqrt.pop %v910
          %v1044 = vmul.f32 %v1043, %v910
          %v1045 = vmul.f32 %v1044, %v1043
          %v1046 = vmul.f32 0.5, %v1045
          %v1047 = vsub.f32 1.5, %v1046
          %v1048 = vmul.f32 %v1043, %v1047
          %vm1049 = vweird.f32 %v910
          %vm1050 = vweird.f32 %v1043
          %vm1051 = vmor %vm1049, %vm1050
          %v1052 = vsel %vm1051, %v1043, %v1048
          %v1053 = vrsqrt.pop %v911
          %v1054 = vmul.f32 %v1053, %v911
          %v1055 = vmul.f32 %v1054, %v1053
          %v1056 = vmul.f32 0.5, %v1055
          %v1057 = vsub.f32 1.5, %v1056
          %v1058 = vmul.f32 %v1053, %v1057
          %vm1059 = vweird.f32 %v911
          %vm1060 = vweird.f32 %v1053
          %vm1061 = vmor %vm1059, %vm1060
          %v1062 = vsel %vm1061, %v1053, %v1058
          %v1063 = vrsqrt.pop %v912
          %v1064 = vmul.f32 %v1063, %v912
          %v1065 = vmul.f32 %v1064, %v1063
          %v1066 = vmul.f32 0.5, %v1065
          %v1067 = vsub.f32 1.5, %v1066
          %v1068 = vmul.f32 %v1063, %v1067
          %vm1069 = vweird.f32 %v912
          %vm1070 = vweird.f32 %v1063
          %vm1071 = vmor %vm1069, %vm1070
          %v1072 = vsel %vm1071, %v1063, %v1068
          %v1073 = vmul.f32 %v793, %v922
          %v1074 = vmul.f32 %v795, %v932
          %v1075 = vmul.f32 %v798, %v942
          %v1076 = vmul.f32 %v800, %v952
          %v1077 = vmul.f32 %v803, %v962
          %v1078 = vmul.f32 %v805, %v972
          %v1079 = vmul.f32 %v808, %v982
          %v1080 = vmul.f32 %v810, %v992
          %v1081 = vmul.f32 %v813, %v1002
          %v1082 = vmul.f32 %v815, %v1012
          %v1083 = vmul.f32 %v818, %v1022
          %v1084 = vmul.f32 %v820, %v1032
          %v1085 = vmul.f32 %v823, %v1042
          %v1086 = vmul.f32 %v825, %v1052
          %v1087 = vmul.f32 %v828, %v1062
          %v1088 = vmul.f32 %v830, %v1072
          %1089 = vst.msk [vmem:[#allocation2] sm:$0xff] %vm848, %v1073
          %1090 = vst.msk [vmem:[#allocation2 + $0x8] sm:$0xff] %vm848, %v1074
          %1091 = vst.msk [vmem:[#allocation2 + $0x10] sm:$0xff] %vm848, %v1075
          %1092 = vst.msk [vmem:[#allocation2 + $0x18] sm:$0xff] %vm848, %v1076
          %1093 = vst.msk [vmem:[#allocation2 + $0x20] sm:$0xff] %vm848, %v1077
          %1094 = vst.msk [vmem:[#allocation2 + $0x28] sm:$0xff] %vm848, %v1078
          %1095 = vst.msk [vmem:[#allocation2 + $0x30] sm:$0xff] %vm848, %v1079
          %1096 = vst.msk [vmem:[#allocation2 + $0x38] sm:$0xff] %vm848, %v1080
          %1097 = vst.msk [vmem:[#allocation2 + $0x40] sm:$0xff] %vm848, %v1081
          %1098 = vst.msk [vmem:[#allocation2 + $0x48] sm:$0xff] %vm848, %v1082
          %1099 = vst.msk [vmem:[#allocation2 + $0x50] sm:$0xff] %vm848, %v1083
          %1100 = vst.msk [vmem:[#allocation2 + $0x58] sm:$0xff] %vm848, %v1084
          %1101 = vst.msk [vmem:[#allocation2 + $0x60] sm:$0xff] %vm848, %v1085
          %1102 = vst.msk [vmem:[#allocation2 + $0x68] sm:$0xff] %vm848, %v1086
          %1103 = vst.msk [vmem:[#allocation2 + $0x70] sm:$0xff] %vm848, %v1087
          %1104 = vst.msk [vmem:[#allocation2 + $0x78] sm:$0xff] %vm848, %v1088
        $region84: #{_lambda_.1} parent=79 // pred_fallthru
          _
        %v1105 = vld [vmem:[#allocation2] sm:$0xff]
        %v1106 = vld [vmem:[#allocation2 + $0x8] sm:$0xff]
        %v1107 = vld [vmem:[#allocation2 + $0x10] sm:$0xff]
        %v1108 = vld [vmem:[#allocation2 + $0x18] sm:$0xff]
        %v1109 = vld [vmem:[#allocation2 + $0x20] sm:$0xff]
        %v1110 = vld [vmem:[#allocation2 + $0x28] sm:$0xff]
        %v1111 = vld [vmem:[#allocation2 + $0x30] sm:$0xff]
        %v1112 = vld [vmem:[#allocation2 + $0x38] sm:$0xff]
        %v1113 = vld [vmem:[#allocation2 + $0x40] sm:$0xff]
        %v1114 = vld [vmem:[#allocation2 + $0x48] sm:$0xff]
        %v1115 = vld [vmem:[#allocation2 + $0x50] sm:$0xff]
        %v1116 = vld [vmem:[#allocation2 + $0x58] sm:$0xff]
        %v1117 = vld [vmem:[#allocation2 + $0x60] sm:$0xff]
        %v1118 = vld [vmem:[#allocation2 + $0x68] sm:$0xff]
        %v1119 = vld [vmem:[#allocation2 + $0x70] sm:$0xff]
        %v1120 = vld [vmem:[#allocation2 + $0x78] sm:$0xff]
        %v1121 = vpack.c.bf16 %v1106, %v1105
        %v1122 = vpack.c.bf16 %v1108, %v1107
        %v1123 = vpack.c.bf16 %v1110, %v1109
        %v1124 = vpack.c.bf16 %v1112, %v1111
        %v1125 = vpack.c.bf16 %v1114, %v1113
        %v1126 = vpack.c.bf16 %v1116, %v1115
        %v1127 = vpack.c.bf16 %v1118, %v1117
        %v1128 = vpack.c.bf16 %v1120, %v1119
        %v1129 = vld [vmem:[%s626] sm:$0xf]
        %v1130 = vld [vmem:[%s626 + $0x4] sm:$0xf]
        %v1131 = vld [vmem:[%s626 + $0x8] sm:$0xf]
        %v1132 = vld [vmem:[%s626 + $0xc] sm:$0xf]
        %v1137 = vunpack.c.l.b16 %v1129
        %v1138 = vunpack.c.l.b16 %v1130
        %v1139 = vunpack.c.l.b16 %v1131
        %v1140 = vunpack.c.l.b16 %v1132
        %v1141 = vpack.c.b16 %v1138, %v1137
        %v1142 = vpack.c.b16 %v1140, %v1139
        %vm1145 = vcmask 261120
        %v1147 = vsel %vm1145, %v1121, 0
        %v1150 = vsel %vm1145, %v1122, 0
        %v1153 = vsel %vm1145, %v1123, 0
        %v1156 = vsel %vm1145, %v1124, 0
        %v1159 = vsel %vm1145, %v1125, 0
        %v1162 = vsel %vm1145, %v1126, 0
        %v1165 = vsel %vm1145, %v1127, 0
        %v1168 = vsel %vm1145, %v1128, 0
        %1170 = vmatpush.bf16.msra.mxu0 0
        %1171 = vmatpush.bf16.msra.mxu0 0
        %1172 = vmatpush.bf16.msra.mxu0 0
        %1173 = vmatpush.bf16.msra.mxu0 0
        %1174 = vmatpush.bf16.msra.mxu0 0
        %1175 = vmatpush.bf16.msra.mxu0 0
        %1176 = vmatpush.bf16.msra.mxu0 %v1142
        %1177 = vmatpush.bf16.msra.mxu0 %v1141
        %1178 = vmatmul.bf16.gmra.mxu0 %v1147
        %v1179 = vpop.f32.mrf.mxu0
        %v1180 = vadd.f32 0.0, %v1179
        %v1181 = vpop.f32.mrf.mxu0
        %v1182 = vadd.f32 0.0, %v1181
        %1183 = vmatmul.bf16.gmra.mxu0 %v1150
        %v1184 = vpop.f32.mrf.mxu0
        %v1185 = vadd.f32 0.0, %v1184
        %v1186 = vpop.f32.mrf.mxu0
        %v1187 = vadd.f32 0.0, %v1186
        %1188 = vmatmul.bf16.gmra.mxu0 %v1153
        %v1189 = vpop.f32.mrf.mxu0
        %v1190 = vadd.f32 0.0, %v1189
        %v1191 = vpop.f32.mrf.mxu0
        %v1192 = vadd.f32 0.0, %v1191
        %1193 = vmatmul.bf16.gmra.mxu0 %v1156
        %v1194 = vpop.f32.mrf.mxu0
        %v1195 = vadd.f32 0.0, %v1194
        %v1196 = vpop.f32.mrf.mxu0
        %v1197 = vadd.f32 0.0, %v1196
        %1198 = vmatmul.bf16.gmra.mxu0 %v1159
        %v1199 = vpop.f32.mrf.mxu0
        %v1200 = vadd.f32 0.0, %v1199
        %v1201 = vpop.f32.mrf.mxu0
        %v1202 = vadd.f32 0.0, %v1201
        %1203 = vmatmul.bf16.gmra.mxu0 %v1162
        %v1204 = vpop.f32.mrf.mxu0
        %v1205 = vadd.f32 0.0, %v1204
        %v1206 = vpop.f32.mrf.mxu0
        %v1207 = vadd.f32 0.0, %v1206
        %1208 = vmatmul.bf16.gmra.mxu0 %v1165
        %v1209 = vpop.f32.mrf.mxu0
        %v1210 = vadd.f32 0.0, %v1209
        %v1211 = vpop.f32.mrf.mxu0
        %v1212 = vadd.f32 0.0, %v1211
        %1213 = vmatmul.bf16.gmra.mxu0 %v1168
        %v1214 = vpop.f32.mrf.mxu0
        %v1215 = vadd.f32 0.0, %v1214
        %v1216 = vpop.f32.mrf.mxu0
        %v1217 = vadd.f32 0.0, %v1216
        %1218 = vdwg.mxu0
        %v1219 = vld [vmem:[%s629] sm:$0x1]
        %v1220 = vld [vmem:[%s632] sm:$0x1]
        %v1221 = vmul.f32 %v1180, %v1180
        %v1222 = vmul.f32 %v1182, %v1182
        %v1223 = vmul.f32 %v1185, %v1185
        %v1224 = vmul.f32 %v1187, %v1187
        %v1225 = vmul.f32 %v1190, %v1190
        %v1226 = vmul.f32 %v1192, %v1192
        %v1227 = vmul.f32 %v1195, %v1195
        %v1228 = vmul.f32 %v1197, %v1197
        %v1229 = vmul.f32 %v1200, %v1200
        %v1230 = vmul.f32 %v1202, %v1202
        %v1231 = vmul.f32 %v1205, %v1205
        %v1232 = vmul.f32 %v1207, %v1207
        %v1233 = vmul.f32 %v1210, %v1210
        %v1234 = vmul.f32 %v1212, %v1212
        %v1235 = vmul.f32 %v1215, %v1215
        %v1236 = vmul.f32 %v1217, %v1217
        %vm1237 = vcmask 130048
        %v1238 = vsel %vm1237, %v1221, 0.0
        %1239 = vadd.xlane.f32.xlu0 %v1238
        %v1240 = vpop.xlane.xlu0 %1239
        %v1241 = vsel %vm1237, %v1222, 0.0
        %1242 = vadd.xlane.f32.xlu0 %v1241
        %v1243 = vpop.xlane.xlu0 %1242
        %v1244 = vsel %vm1237, %v1223, 0.0
        %1245 = vadd.xlane.f32.xlu0 %v1244
        %v1246 = vpop.xlane.xlu0 %1245
        %v1247 = vsel %vm1237, %v1224, 0.0
        %1248 = vadd.xlane.f32.xlu0 %v1247
        %v1249 = vpop.xlane.xlu0 %1248
        %v1250 = vsel %vm1237, %v1225, 0.0
        %1251 = vadd.xlane.f32.xlu0 %v1250
        %v1252 = vpop.xlane.xlu0 %1251
        %v1253 = vsel %vm1237, %v1226, 0.0
        %1254 = vadd.xlane.f32.xlu0 %v1253
        %v1255 = vpop.xlane.xlu0 %1254
        %v1256 = vsel %vm1237, %v1227, 0.0
        %1257 = vadd.xlane.f32.xlu0 %v1256
        %v1258 = vpop.xlane.xlu0 %1257
        %v1259 = vsel %vm1237, %v1228, 0.0
        %1260 = vadd.xlane.f32.xlu0 %v1259
        %v1261 = vpop.xlane.xlu0 %1260
        %v1262 = vsel %vm1237, %v1229, 0.0
        %1263 = vadd.xlane.f32.xlu0 %v1262
        %v1264 = vpop.xlane.xlu0 %1263
        %v1265 = vsel %vm1237, %v1230, 0.0
        %1266 = vadd.xlane.f32.xlu0 %v1265
        %v1267 = vpop.xlane.xlu0 %1266
        %v1268 = vsel %vm1237, %v1231, 0.0
        %1269 = vadd.xlane.f32.xlu0 %v1268
        %v1270 = vpop.xlane.xlu0 %1269
        %v1271 = vsel %vm1237, %v1232, 0.0
        %1272 = vadd.xlane.f32.xlu0 %v1271
        %v1273 = vpop.xlane.xlu0 %1272
        %v1274 = vsel %vm1237, %v1233, 0.0
        %1275 = vadd.xlane.f32.xlu0 %v1274
        %v1276 = vpop.xlane.xlu0 %1275
        %v1277 = vsel %vm1237, %v1234, 0.0
        %1278 = vadd.xlane.f32.xlu0 %v1277
        %v1279 = vpop.xlane.xlu0 %1278
        %v1280 = vsel %vm1237, %v1235, 0.0
        %1281 = vadd.xlane.f32.xlu0 %v1280
        %v1282 = vpop.xlane.xlu0 %1281
        %v1283 = vsel %vm1237, %v1236, 0.0
        %1284 = vadd.xlane.f32.xlu0 %v1283
        %v1285 = vpop.xlane.xlu0 %1284
        %v1286 = vmax.f32 %v1240, 1e-24
        %v1287 = vmax.f32 %v1243, 1e-24
        %v1288 = vmax.f32 %v1246, 1e-24
        %v1289 = vmax.f32 %v1249, 1e-24
        %v1290 = vmax.f32 %v1252, 1e-24
        %v1291 = vmax.f32 %v1255, 1e-24
        %v1292 = vmax.f32 %v1258, 1e-24
        %v1293 = vmax.f32 %v1261, 1e-24
        %v1294 = vmax.f32 %v1264, 1e-24
        %v1295 = vmax.f32 %v1267, 1e-24
        %v1296 = vmax.f32 %v1270, 1e-24
        %v1297 = vmax.f32 %v1273, 1e-24
        %v1298 = vmax.f32 %v1276, 1e-24
        %v1299 = vmax.f32 %v1279, 1e-24
        %v1300 = vmax.f32 %v1282, 1e-24
        %v1301 = vmax.f32 %v1285, 1e-24
        %v1302 = vrsqrt.pop %v1286
        %v1303 = vmul.f32 %v1302, %v1286
        %v1304 = vmul.f32 %v1303, %v1302
        %v1305 = vmul.f32 0.5, %v1304
        %v1306 = vsub.f32 1.5, %v1305
        %v1307 = vmul.f32 %v1302, %v1306
        %vm1308 = vweird.f32 %v1286
        %vm1309 = vweird.f32 %v1302
        %vm1310 = vmor %vm1308, %vm1309
        %v1311 = vsel %vm1310, %v1302, %v1307
        %v1312 = vrsqrt.pop %v1287
        %v1313 = vmul.f32 %v1312, %v1287
        %v1314 = vmul.f32 %v1313, %v1312
        %v1315 = vmul.f32 0.5, %v1314
        %v1316 = vsub.f32 1.5, %v1315
        %v1317 = vmul.f32 %v1312, %v1316
        %vm1318 = vweird.f32 %v1287
        %vm1319 = vweird.f32 %v1312
        %vm1320 = vmor %vm1318, %vm1319
        %v1321 = vsel %vm1320, %v1312, %v1317
        %v1322 = vrsqrt.pop %v1288
        %v1323 = vmul.f32 %v1322, %v1288
        %v1324 = vmul.f32 %v1323, %v1322
        %v1325 = vmul.f32 0.5, %v1324
        %v1326 = vsub.f32 1.5, %v1325
        %v1327 = vmul.f32 %v1322, %v1326
        %vm1328 = vweird.f32 %v1288
        %vm1329 = vweird.f32 %v1322
        %vm1330 = vmor %vm1328, %vm1329
        %v1331 = vsel %vm1330, %v1322, %v1327
        %v1332 = vrsqrt.pop %v1289
        %v1333 = vmul.f32 %v1332, %v1289
        %v1334 = vmul.f32 %v1333, %v1332
        %v1335 = vmul.f32 0.5, %v1334
        %v1336 = vsub.f32 1.5, %v1335
        %v1337 = vmul.f32 %v1332, %v1336
        %vm1338 = vweird.f32 %v1289
        %vm1339 = vweird.f32 %v1332
        %vm1340 = vmor %vm1338, %vm1339
        %v1341 = vsel %vm1340, %v1332, %v1337
        %v1342 = vrsqrt.pop %v1290
        %v1343 = vmul.f32 %v1342, %v1290
        %v1344 = vmul.f32 %v1343, %v1342
        %v1345 = vmul.f32 0.5, %v1344
        %v1346 = vsub.f32 1.5, %v1345
        %v1347 = vmul.f32 %v1342, %v1346
        %vm1348 = vweird.f32 %v1290
        %vm1349 = vweird.f32 %v1342
        %vm1350 = vmor %vm1348, %vm1349
        %v1351 = vsel %vm1350, %v1342, %v1347
        %v1352 = vrsqrt.pop %v1291
        %v1353 = vmul.f32 %v1352, %v1291
        %v1354 = vmul.f32 %v1353, %v1352
        %v1355 = vmul.f32 0.5, %v1354
        %v1356 = vsub.f32 1.5, %v1355
        %v1357 = vmul.f32 %v1352, %v1356
        %vm1358 = vweird.f32 %v1291
        %vm1359 = vweird.f32 %v1352
        %vm1360 = vmor %vm1358, %vm1359
        %v1361 = vsel %vm1360, %v1352, %v1357
        %v1362 = vrsqrt.pop %v1292
        %v1363 = vmul.f32 %v1362, %v1292
        %v1364 = vmul.f32 %v1363, %v1362
        %v1365 = vmul.f32 0.5, %v1364
        %v1366 = vsub.f32 1.5, %v1365
        %v1367 = vmul.f32 %v1362, %v1366
        %vm1368 = vweird.f32 %v1292
        %vm1369 = vweird.f32 %v1362
        %vm1370 = vmor %vm1368, %vm1369
        %v1371 = vsel %vm1370, %v1362, %v1367
        %v1372 = vrsqrt.pop %v1293
        %v1373 = vmul.f32 %v1372, %v1293
        %v1374 = vmul.f32 %v1373, %v1372
        %v1375 = vmul.f32 0.5, %v1374
        %v1376 = vsub.f32 1.5, %v1375
        %v1377 = vmul.f32 %v1372, %v1376
        %vm1378 = vweird.f32 %v1293
        %vm1379 = vweird.f32 %v1372
        %vm1380 = vmor %vm1378, %vm1379
        %v1381 = vsel %vm1380, %v1372, %v1377
        %v1382 = vrsqrt.pop %v1294
        %v1383 = vmul.f32 %v1382, %v1294
        %v1384 = vmul.f32 %v1383, %v1382
        %v1385 = vmul.f32 0.5, %v1384
        %v1386 = vsub.f32 1.5, %v1385
        %v1387 = vmul.f32 %v1382, %v1386
        %vm1388 = vweird.f32 %v1294
        %vm1389 = vweird.f32 %v1382
        %vm1390 = vmor %vm1388, %vm1389
        %v1391 = vsel %vm1390, %v1382, %v1387
        %v1392 = vrsqrt.pop %v1295
        %v1393 = vmul.f32 %v1392, %v1295
        %v1394 = vmul.f32 %v1393, %v1392
        %v1395 = vmul.f32 0.5, %v1394
        %v1396 = vsub.f32 1.5, %v1395
        %v1397 = vmul.f32 %v1392, %v1396
        %vm1398 = vweird.f32 %v1295
        %vm1399 = vweird.f32 %v1392
        %vm1400 = vmor %vm1398, %vm1399
        %v1401 = vsel %vm1400, %v1392, %v1397
        %v1402 = vrsqrt.pop %v1296
        %v1403 = vmul.f32 %v1402, %v1296
        %v1404 = vmul.f32 %v1403, %v1402
        %v1405 = vmul.f32 0.5, %v1404
        %v1406 = vsub.f32 1.5, %v1405
        %v1407 = vmul.f32 %v1402, %v1406
        %vm1408 = vweird.f32 %v1296
        %vm1409 = vweird.f32 %v1402
        %vm1410 = vmor %vm1408, %vm1409
        %v1411 = vsel %vm1410, %v1402, %v1407
        %v1412 = vrsqrt.pop %v1297
        %v1413 = vmul.f32 %v1412, %v1297
        %v1414 = vmul.f32 %v1413, %v1412
        %v1415 = vmul.f32 0.5, %v1414
        %v1416 = vsub.f32 1.5, %v1415
        %v1417 = vmul.f32 %v1412, %v1416
        %vm1418 = vweird.f32 %v1297
        %vm1419 = vweird.f32 %v1412
        %vm1420 = vmor %vm1418, %vm1419
        %v1421 = vsel %vm1420, %v1412, %v1417
        %v1422 = vrsqrt.pop %v1298
        %v1423 = vmul.f32 %v1422, %v1298
        %v1424 = vmul.f32 %v1423, %v1422
        %v1425 = vmul.f32 0.5, %v1424
        %v1426 = vsub.f32 1.5, %v1425
        %v1427 = vmul.f32 %v1422, %v1426
        %vm1428 = vweird.f32 %v1298
        %vm1429 = vweird.f32 %v1422
        %vm1430 = vmor %vm1428, %vm1429
        %v1431 = vsel %vm1430, %v1422, %v1427
        %v1432 = vrsqrt.pop %v1299
        %v1433 = vmul.f32 %v1432, %v1299
        %v1434 = vmul.f32 %v1433, %v1432
        %v1435 = vmul.f32 0.5, %v1434
        %v1436 = vsub.f32 1.5, %v1435
        %v1437 = vmul.f32 %v1432, %v1436
        %vm1438 = vweird.f32 %v1299
        %vm1439 = vweird.f32 %v1432
        %vm1440 = vmor %vm1438, %vm1439
        %v1441 = vsel %vm1440, %v1432, %v1437
        %v1442 = vrsqrt.pop %v1300
        %v1443 = vmul.f32 %v1442, %v1300
        %v1444 = vmul.f32 %v1443, %v1442
        %v1445 = vmul.f32 0.5, %v1444
        %v1446 = vsub.f32 1.5, %v1445
        %v1447 = vmul.f32 %v1442, %v1446
        %vm1448 = vweird.f32 %v1300
        %vm1449 = vweird.f32 %v1442
        %vm1450 = vmor %vm1448, %vm1449
        %v1451 = vsel %vm1450, %v1442, %v1447
        %v1452 = vrsqrt.pop %v1301
        %v1453 = vmul.f32 %v1452, %v1301
        %v1454 = vmul.f32 %v1453, %v1452
        %v1455 = vmul.f32 0.5, %v1454
        %v1456 = vsub.f32 1.5, %v1455
        %v1457 = vmul.f32 %v1452, %v1456
        %vm1458 = vweird.f32 %v1301
        %vm1459 = vweird.f32 %v1452
        %vm1460 = vmor %vm1458, %vm1459
        %v1461 = vsel %vm1460, %v1452, %v1457
        %v1462 = vmul.f32 %v1180, %v1311
        %v1463 = vmul.f32 %v1182, %v1321
        %v1464 = vmul.f32 %v1185, %v1331
        %v1465 = vmul.f32 %v1187, %v1341
        %v1466 = vmul.f32 %v1190, %v1351
        %v1467 = vmul.f32 %v1192, %v1361
        %v1468 = vmul.f32 %v1195, %v1371
        %v1469 = vmul.f32 %v1197, %v1381
        %v1470 = vmul.f32 %v1200, %v1391
        %v1471 = vmul.f32 %v1202, %v1401
        %v1472 = vmul.f32 %v1205, %v1411
        %v1473 = vmul.f32 %v1207, %v1421
        %v1474 = vmul.f32 %v1210, %v1431
        %v1475 = vmul.f32 %v1212, %v1441
        %v1476 = vmul.f32 %v1215, %v1451
        %v1477 = vmul.f32 %v1217, %v1461
        %v1479 = vperm.slane %v1219, 0
        %v1481 = vmul.f32 %v1462, %v1479
        %v1482 = vmul.f32 %v1463, %v1479
        %v1483 = vmul.f32 %v1464, %v1479
        %v1484 = vmul.f32 %v1465, %v1479
        %v1485 = vmul.f32 %v1466, %v1479
        %v1486 = vmul.f32 %v1467, %v1479
        %v1487 = vmul.f32 %v1468, %v1479
        %v1488 = vmul.f32 %v1469, %v1479
        %v1489 = vmul.f32 %v1470, %v1479
        %v1490 = vmul.f32 %v1471, %v1479
        %v1491 = vmul.f32 %v1472, %v1479
        %v1492 = vmul.f32 %v1473, %v1479
        %v1493 = vmul.f32 %v1474, %v1479
        %v1494 = vmul.f32 %v1475, %v1479
        %v1495 = vmul.f32 %v1476, %v1479
        %v1496 = vmul.f32 %v1477, %v1479
        %1513 = vrot.lane.b32.xlu0 %v1221, 96
        %v1514 = vpop.permute.xlu0 %1513
        %1515 = vrot.lane.b32.xlu0 %v1222, 96
        %v1516 = vpop.permute.xlu0 %1515
        %1517 = vrot.lane.b32.xlu0 %v1223, 96
        %v1518 = vpop.permute.xlu0 %1517
        %1519 = vrot.lane.b32.xlu0 %v1224, 96
        %v1520 = vpop.permute.xlu0 %1519
        %1521 = vrot.lane.b32.xlu0 %v1225, 96
        %v1522 = vpop.permute.xlu0 %1521
        %1523 = vrot.lane.b32.xlu0 %v1226, 96
        %v1524 = vpop.permute.xlu0 %1523
        %1525 = vrot.lane.b32.xlu0 %v1227, 96
        %v1526 = vpop.permute.xlu0 %1525
        %1527 = vrot.lane.b32.xlu0 %v1228, 96
        %v1528 = vpop.permute.xlu0 %1527
        %1529 = vrot.lane.b32.xlu0 %v1229, 96
        %v1530 = vpop.permute.xlu0 %1529
        %1531 = vrot.lane.b32.xlu0 %v1230, 96
        %v1532 = vpop.permute.xlu0 %1531
        %1533 = vrot.lane.b32.xlu0 %v1231, 96
        %v1534 = vpop.permute.xlu0 %1533
        %1535 = vrot.lane.b32.xlu0 %v1232, 96
        %v1536 = vpop.permute.xlu0 %1535
        %1537 = vrot.lane.b32.xlu0 %v1233, 96
        %v1538 = vpop.permute.xlu0 %1537
        %1539 = vrot.lane.b32.xlu0 %v1234, 96
        %v1540 = vpop.permute.xlu0 %1539
        %1541 = vrot.lane.b32.xlu0 %v1235, 96
        %v1542 = vpop.permute.xlu0 %1541
        %1543 = vrot.lane.b32.xlu0 %v1236, 96
        %v1544 = vpop.permute.xlu0 %1543
        %v1561 = vsel %vm1237, %v1514, 0.0
        %1562 = vadd.xlane.f32.xlu0 %v1561
        %v1563 = vpop.xlane.xlu0 %1562
        %v1564 = vsel %vm1237, %v1516, 0.0
        %1565 = vadd.xlane.f32.xlu0 %v1564
        %v1566 = vpop.xlane.xlu0 %1565
        %v1567 = vsel %vm1237, %v1518, 0.0
        %1568 = vadd.xlane.f32.xlu0 %v1567
        %v1569 = vpop.xlane.xlu0 %1568
        %v1570 = vsel %vm1237, %v1520, 0.0
        %1571 = vadd.xlane.f32.xlu0 %v1570
        %v1572 = vpop.xlane.xlu0 %1571
        %v1573 = vsel %vm1237, %v1522, 0.0
        %1574 = vadd.xlane.f32.xlu0 %v1573
        %v1575 = vpop.xlane.xlu0 %1574
        %v1576 = vsel %vm1237, %v1524, 0.0
        %1577 = vadd.xlane.f32.xlu0 %v1576
        %v1578 = vpop.xlane.xlu0 %1577
        %v1579 = vsel %vm1237, %v1526, 0.0
        %1580 = vadd.xlane.f32.xlu0 %v1579
        %v1581 = vpop.xlane.xlu0 %1580
        %v1582 = vsel %vm1237, %v1528, 0.0
        %1583 = vadd.xlane.f32.xlu0 %v1582
        %v1584 = vpop.xlane.xlu0 %1583
        %v1585 = vsel %vm1237, %v1530, 0.0
        %1586 = vadd.xlane.f32.xlu0 %v1585
        %v1587 = vpop.xlane.xlu0 %1586
        %v1588 = vsel %vm1237, %v1532, 0.0
        %1589 = vadd.xlane.f32.xlu0 %v1588
        %v1590 = vpop.xlane.xlu0 %1589
        %v1591 = vsel %vm1237, %v1534, 0.0
        %1592 = vadd.xlane.f32.xlu0 %v1591
        %v1593 = vpop.xlane.xlu0 %1592
        %v1594 = vsel %vm1237, %v1536, 0.0
        %1595 = vadd.xlane.f32.xlu0 %v1594
        %v1596 = vpop.xlane.xlu0 %1595
        %v1597 = vsel %vm1237, %v1538, 0.0
        %1598 = vadd.xlane.f32.xlu0 %v1597
        %v1599 = vpop.xlane.xlu0 %1598
        %v1600 = vsel %vm1237, %v1540, 0.0
        %1601 = vadd.xlane.f32.xlu0 %v1600
        %v1602 = vpop.xlane.xlu0 %1601
        %v1603 = vsel %vm1237, %v1542, 0.0
        %1604 = vadd.xlane.f32.xlu0 %v1603
        %v1605 = vpop.xlane.xlu0 %1604
        %v1606 = vsel %vm1237, %v1544, 0.0
        %1607 = vadd.xlane.f32.xlu0 %v1606
        %v1608 = vpop.xlane.xlu0 %1607
        %v1609 = vmax.f32 %v1563, 1e-24
        %v1610 = vmax.f32 %v1566, 1e-24
        %v1611 = vmax.f32 %v1569, 1e-24
        %v1612 = vmax.f32 %v1572, 1e-24
        %v1613 = vmax.f32 %v1575, 1e-24
        %v1614 = vmax.f32 %v1578, 1e-24
        %v1615 = vmax.f32 %v1581, 1e-24
        %v1616 = vmax.f32 %v1584, 1e-24
        %v1617 = vmax.f32 %v1587, 1e-24
        %v1618 = vmax.f32 %v1590, 1e-24
        %v1619 = vmax.f32 %v1593, 1e-24
        %v1620 = vmax.f32 %v1596, 1e-24
        %v1621 = vmax.f32 %v1599, 1e-24
        %v1622 = vmax.f32 %v1602, 1e-24
        %v1623 = vmax.f32 %v1605, 1e-24
        %v1624 = vmax.f32 %v1608, 1e-24
        %v1625 = vrsqrt.pop %v1609
        %v1626 = vmul.f32 %v1625, %v1609
        %v1627 = vmul.f32 %v1626, %v1625
        %v1628 = vmul.f32 0.5, %v1627
        %v1629 = vsub.f32 1.5, %v1628
        %v1630 = vmul.f32 %v1625, %v1629
        %vm1631 = vweird.f32 %v1609
        %vm1632 = vweird.f32 %v1625
        %vm1633 = vmor %vm1631, %vm1632
        %v1634 = vsel %vm1633, %v1625, %v1630
        %v1635 = vrsqrt.pop %v1610
        %v1636 = vmul.f32 %v1635, %v1610
        %v1637 = vmul.f32 %v1636, %v1635
        %v1638 = vmul.f32 0.5, %v1637
        %v1639 = vsub.f32 1.5, %v1638
        %v1640 = vmul.f32 %v1635, %v1639
        %vm1641 = vweird.f32 %v1610
        %vm1642 = vweird.f32 %v1635
        %vm1643 = vmor %vm1641, %vm1642
        %v1644 = vsel %vm1643, %v1635, %v1640
        %v1645 = vrsqrt.pop %v1611
        %v1646 = vmul.f32 %v1645, %v1611
        %v1647 = vmul.f32 %v1646, %v1645
        %v1648 = vmul.f32 0.5, %v1647
        %v1649 = vsub.f32 1.5, %v1648
        %v1650 = vmul.f32 %v1645, %v1649
        %vm1651 = vweird.f32 %v1611
        %vm1652 = vweird.f32 %v1645
        %vm1653 = vmor %vm1651, %vm1652
        %v1654 = vsel %vm1653, %v1645, %v1650
        %v1655 = vrsqrt.pop %v1612
        %v1656 = vmul.f32 %v1655, %v1612
        %v1657 = vmul.f32 %v1656, %v1655
        %v1658 = vmul.f32 0.5, %v1657
        %v1659 = vsub.f32 1.5, %v1658
        %v1660 = vmul.f32 %v1655, %v1659
        %vm1661 = vweird.f32 %v1612
        %vm1662 = vweird.f32 %v1655
        %vm1663 = vmor %vm1661, %vm1662
        %v1664 = vsel %vm1663, %v1655, %v1660
        %v1665 = vrsqrt.pop %v1613
        %v1666 = vmul.f32 %v1665, %v1613
        %v1667 = vmul.f32 %v1666, %v1665
        %v1668 = vmul.f32 0.5, %v1667
        %v1669 = vsub.f32 1.5, %v1668
        %v1670 = vmul.f32 %v1665, %v1669
        %vm1671 = vweird.f32 %v1613
        %vm1672 = vweird.f32 %v1665
        %vm1673 = vmor %vm1671, %vm1672
        %v1674 = vsel %vm1673, %v1665, %v1670
        %v1675 = vrsqrt.pop %v1614
        %v1676 = vmul.f32 %v1675, %v1614
        %v1677 = vmul.f32 %v1676, %v1675
        %v1678 = vmul.f32 0.5, %v1677
        %v1679 = vsub.f32 1.5, %v1678
        %v1680 = vmul.f32 %v1675, %v1679
        %vm1681 = vweird.f32 %v1614
        %vm1682 = vweird.f32 %v1675
        %vm1683 = vmor %vm1681, %vm1682
        %v1684 = vsel %vm1683, %v1675, %v1680
        %v1685 = vrsqrt.pop %v1615
        %v1686 = vmul.f32 %v1685, %v1615
        %v1687 = vmul.f32 %v1686, %v1685
        %v1688 = vmul.f32 0.5, %v1687
        %v1689 = vsub.f32 1.5, %v1688
        %v1690 = vmul.f32 %v1685, %v1689
        %vm1691 = vweird.f32 %v1615
        %vm1692 = vweird.f32 %v1685
        %vm1693 = vmor %vm1691, %vm1692
        %v1694 = vsel %vm1693, %v1685, %v1690
        %v1695 = vrsqrt.pop %v1616
        %v1696 = vmul.f32 %v1695, %v1616
        %v1697 = vmul.f32 %v1696, %v1695
        %v1698 = vmul.f32 0.5, %v1697
        %v1699 = vsub.f32 1.5, %v1698
        %v1700 = vmul.f32 %v1695, %v1699
        %vm1701 = vweird.f32 %v1616
        %vm1702 = vweird.f32 %v1695
        %vm1703 = vmor %vm1701, %vm1702
        %v1704 = vsel %vm1703, %v1695, %v1700
        %v1705 = vrsqrt.pop %v1617
        %v1706 = vmul.f32 %v1705, %v1617
        %v1707 = vmul.f32 %v1706, %v1705
        %v1708 = vmul.f32 0.5, %v1707
        %v1709 = vsub.f32 1.5, %v1708
        %v1710 = vmul.f32 %v1705, %v1709
        %vm1711 = vweird.f32 %v1617
        %vm1712 = vweird.f32 %v1705
        %vm1713 = vmor %vm1711, %vm1712
        %v1714 = vsel %vm1713, %v1705, %v1710
        %v1715 = vrsqrt.pop %v1618
        %v1716 = vmul.f32 %v1715, %v1618
        %v1717 = vmul.f32 %v1716, %v1715
        %v1718 = vmul.f32 0.5, %v1717
        %v1719 = vsub.f32 1.5, %v1718
        %v1720 = vmul.f32 %v1715, %v1719
        %vm1721 = vweird.f32 %v1618
        %vm1722 = vweird.f32 %v1715
        %vm1723 = vmor %vm1721, %vm1722
        %v1724 = vsel %vm1723, %v1715, %v1720
        %v1725 = vrsqrt.pop %v1619
        %v1726 = vmul.f32 %v1725, %v1619
        %v1727 = vmul.f32 %v1726, %v1725
        %v1728 = vmul.f32 0.5, %v1727
        %v1729 = vsub.f32 1.5, %v1728
        %v1730 = vmul.f32 %v1725, %v1729
        %vm1731 = vweird.f32 %v1619
        %vm1732 = vweird.f32 %v1725
        %vm1733 = vmor %vm1731, %vm1732
        %v1734 = vsel %vm1733, %v1725, %v1730
        %v1735 = vrsqrt.pop %v1620
        %v1736 = vmul.f32 %v1735, %v1620
        %v1737 = vmul.f32 %v1736, %v1735
        %v1738 = vmul.f32 0.5, %v1737
        %v1739 = vsub.f32 1.5, %v1738
        %v1740 = vmul.f32 %v1735, %v1739
        %vm1741 = vweird.f32 %v1620
        %vm1742 = vweird.f32 %v1735
        %vm1743 = vmor %vm1741, %vm1742
        %v1744 = vsel %vm1743, %v1735, %v1740
        %v1745 = vrsqrt.pop %v1621
        %v1746 = vmul.f32 %v1745, %v1621
        %v1747 = vmul.f32 %v1746, %v1745
        %v1748 = vmul.f32 0.5, %v1747
        %v1749 = vsub.f32 1.5, %v1748
        %v1750 = vmul.f32 %v1745, %v1749
        %vm1751 = vweird.f32 %v1621
        %vm1752 = vweird.f32 %v1745
        %vm1753 = vmor %vm1751, %vm1752
        %v1754 = vsel %vm1753, %v1745, %v1750
        %v1755 = vrsqrt.pop %v1622
        %v1756 = vmul.f32 %v1755, %v1622
        %v1757 = vmul.f32 %v1756, %v1755
        %v1758 = vmul.f32 0.5, %v1757
        %v1759 = vsub.f32 1.5, %v1758
        %v1760 = vmul.f32 %v1755, %v1759
        %vm1761 = vweird.f32 %v1622
        %vm1762 = vweird.f32 %v1755
        %vm1763 = vmor %vm1761, %vm1762
        %v1764 = vsel %vm1763, %v1755, %v1760
        %v1765 = vrsqrt.pop %v1623
        %v1766 = vmul.f32 %v1765, %v1623
        %v1767 = vmul.f32 %v1766, %v1765
        %v1768 = vmul.f32 0.5, %v1767
        %v1769 = vsub.f32 1.5, %v1768
        %v1770 = vmul.f32 %v1765, %v1769
        %vm1771 = vweird.f32 %v1623
        %vm1772 = vweird.f32 %v1765
        %vm1773 = vmor %vm1771, %vm1772
        %v1774 = vsel %vm1773, %v1765, %v1770
        %v1775 = vrsqrt.pop %v1624
        %v1776 = vmul.f32 %v1775, %v1624
        %v1777 = vmul.f32 %v1776, %v1775
        %v1778 = vmul.f32 0.5, %v1777
        %v1779 = vsub.f32 1.5, %v1778
        %v1780 = vmul.f32 %v1775, %v1779
        %vm1781 = vweird.f32 %v1624
        %vm1782 = vweird.f32 %v1775
        %vm1783 = vmor %vm1781, %vm1782
        %v1784 = vsel %vm1783, %v1775, %v1780
        %v1785 = vmul.f32 %v1180, %v1634
        %v1786 = vmul.f32 %v1182, %v1644
        %v1787 = vmul.f32 %v1185, %v1654
        %v1788 = vmul.f32 %v1187, %v1664
        %v1789 = vmul.f32 %v1190, %v1674
        %v1790 = vmul.f32 %v1192, %v1684
        %v1791 = vmul.f32 %v1195, %v1694
        %v1792 = vmul.f32 %v1197, %v1704
        %v1793 = vmul.f32 %v1200, %v1714
        %v1794 = vmul.f32 %v1202, %v1724
        %v1795 = vmul.f32 %v1205, %v1734
        %v1796 = vmul.f32 %v1207, %v1744
        %v1797 = vmul.f32 %v1210, %v1754
        %v1798 = vmul.f32 %v1212, %v1764
        %v1799 = vmul.f32 %v1215, %v1774
        %v1800 = vmul.f32 %v1217, %v1784
        %v1802 = vperm.slane %v1220, 0
        %1803 = vrot.lane.b32.xlu0 %v1802, 32
        %v1804 = vpop.permute.xlu0 %1803
        %v1806 = vmul.f32 %v1785, %v1804
        %v1807 = vmul.f32 %v1786, %v1804
        %v1808 = vmul.f32 %v1787, %v1804
        %v1809 = vmul.f32 %v1788, %v1804
        %v1810 = vmul.f32 %v1789, %v1804
        %v1811 = vmul.f32 %v1790, %v1804
        %v1812 = vmul.f32 %v1791, %v1804
        %v1813 = vmul.f32 %v1792, %v1804
        %v1814 = vmul.f32 %v1793, %v1804
        %v1815 = vmul.f32 %v1794, %v1804
        %v1816 = vmul.f32 %v1795, %v1804
        %v1817 = vmul.f32 %v1796, %v1804
        %v1818 = vmul.f32 %v1797, %v1804
        %v1819 = vmul.f32 %v1798, %v1804
        %v1820 = vmul.f32 %v1799, %v1804
        %v1821 = vmul.f32 %v1800, %v1804
        %v1822 = vpack.c.bf16 %v1481, %v1481
        %v1823 = vpack.c.bf16 %v1482, %v1482
        %v1824 = vpack.c.bf16 %v1483, %v1483
        %v1825 = vpack.c.bf16 %v1484, %v1484
        %v1826 = vpack.c.bf16 %v1485, %v1485
        %v1827 = vpack.c.bf16 %v1486, %v1486
        %v1828 = vpack.c.bf16 %v1487, %v1487
        %v1829 = vpack.c.bf16 %v1488, %v1488
        %v1830 = vpack.c.bf16 %v1489, %v1489
        %v1831 = vpack.c.bf16 %v1490, %v1490
        %v1832 = vpack.c.bf16 %v1491, %v1491
        %v1833 = vpack.c.bf16 %v1492, %v1492
        %v1834 = vpack.c.bf16 %v1493, %v1493
        %v1835 = vpack.c.bf16 %v1494, %v1494
        %v1836 = vpack.c.bf16 %v1495, %v1495
        %v1837 = vpack.c.bf16 %v1496, %v1496
        %v1838 = vpack.c.bf16 %v1806, %v1806
        %v1839 = vpack.c.bf16 %v1807, %v1807
        %v1840 = vpack.c.bf16 %v1808, %v1808
        %v1841 = vpack.c.bf16 %v1809, %v1809
        %v1842 = vpack.c.bf16 %v1810, %v1810
        %v1843 = vpack.c.bf16 %v1811, %v1811
        %v1844 = vpack.c.bf16 %v1812, %v1812
        %v1845 = vpack.c.bf16 %v1813, %v1813
        %v1846 = vpack.c.bf16 %v1814, %v1814
        %v1847 = vpack.c.bf16 %v1815, %v1815
        %v1848 = vpack.c.bf16 %v1816, %v1816
        %v1849 = vpack.c.bf16 %v1817, %v1817
        %v1850 = vpack.c.bf16 %v1818, %v1818
        %v1851 = vpack.c.bf16 %v1819, %v1819
        %v1852 = vpack.c.bf16 %v1820, %v1820
        %v1853 = vpack.c.bf16 %v1821, %v1821
        %v1854 = vpack.c.bf16 %v1180, %v1180
        %v1855 = vpack.c.bf16 %v1182, %v1182
        %v1856 = vpack.c.bf16 %v1185, %v1185
        %v1857 = vpack.c.bf16 %v1187, %v1187
        %v1858 = vpack.c.bf16 %v1190, %v1190
        %v1859 = vpack.c.bf16 %v1192, %v1192
        %v1860 = vpack.c.bf16 %v1195, %v1195
        %v1861 = vpack.c.bf16 %v1197, %v1197
        %v1862 = vpack.c.bf16 %v1200, %v1200
        %v1863 = vpack.c.bf16 %v1202, %v1202
        %v1864 = vpack.c.bf16 %v1205, %v1205
        %v1865 = vpack.c.bf16 %v1207, %v1207
        %v1866 = vpack.c.bf16 %v1210, %v1210
        %v1867 = vpack.c.bf16 %v1212, %v1212
        %v1868 = vpack.c.bf16 %v1215, %v1215
        %v1869 = vpack.c.bf16 %v1217, %v1217
        %v1872 = vunpack.c.l.b16 %v1822
        %v1873 = vunpack.c.l.b16 %v1823
        %v1874 = vpack.c.b16 %v1873, %v1872
        %v1877 = vunpack.c.l.b16 %v1838
        %v1878 = vunpack.c.l.b16 %v1839
        %v1879 = vpack.c.b16 %v1878, %v1877
        %1880 = vrot.lane.b32.xlu0 %v1879, 96
        %v1881 = vpop.permute.xlu0 %1880
        %v1883 = vsel %vm1237, %v1874, 0
        %v1886 = vsel %vm1237, %v1881, 0
        %1888 = vmatpush.bf16.xpose.msra.mxu0 0
        %1889 = vmatpush.bf16.xpose.msra.mxu0 0
        %1890 = vmatpush.bf16.xpose.msra.mxu0 0
        %1891 = vmatpush.bf16.xpose.msra.mxu0 0
        %1892 = vmatpush.bf16.xpose.msra.mxu0 0
        %1893 = vmatpush.bf16.xpose.msra.mxu0 0
        %1894 = vmatpush.bf16.xpose.msra.mxu0 0
        %1895 = vmatpush.bf16.xpose.msra.mxu0 %v1886
        %1896 = vmatmul.bf16.gmra.mxu0 %v1883
        %v1897 = vpop.f32.mrf.mxu0
        %v1898 = vadd.f32 0.0, %v1897
        %v1899 = vpop.f32.mrf.mxu0
        %v1900 = vadd.f32 0.0, %v1899
        %1901 = vdwg.mxu0
        %v1904 = vunpack.c.l.b16 %v1824
        %v1905 = vunpack.c.l.b16 %v1825
        %v1906 = vpack.c.b16 %v1905, %v1904
        %v1909 = vunpack.c.l.b16 %v1840
        %v1910 = vunpack.c.l.b16 %v1841
        %v1911 = vpack.c.b16 %v1910, %v1909
        %1912 = vrot.lane.b32.xlu0 %v1911, 96
        %v1913 = vpop.permute.xlu0 %1912
        %v1915 = vsel %vm1237, %v1906, 0
        %v1918 = vsel %vm1237, %v1913, 0
        %1920 = vmatpush.bf16.xpose.msra.mxu0 0
        %1921 = vmatpush.bf16.xpose.msra.mxu0 0
        %1922 = vmatpush.bf16.xpose.msra.mxu0 0
        %1923 = vmatpush.bf16.xpose.msra.mxu0 0
        %1924 = vmatpush.bf16.xpose.msra.mxu0 0
        %1925 = vmatpush.bf16.xpose.msra.mxu0 0
        %1926 = vmatpush.bf16.xpose.msra.mxu0 0
        %1927 = vmatpush.bf16.xpose.msra.mxu0 %v1918
        %1928 = vmatmul.bf16.gmra.mxu0 %v1915
        %v1929 = vpop.f32.mrf.mxu0
        %v1930 = vadd.f32 0.0, %v1929
        %v1931 = vpop.f32.mrf.mxu0
        %v1932 = vadd.f32 0.0, %v1931
        %1933 = vdwg.mxu0
        %v1936 = vunpack.c.l.b16 %v1826
        %v1937 = vunpack.c.l.b16 %v1827
        %v1938 = vpack.c.b16 %v1937, %v1936
        %v1941 = vunpack.c.l.b16 %v1842
        %v1942 = vunpack.c.l.b16 %v1843
        %v1943 = vpack.c.b16 %v1942, %v1941
        %1944 = vrot.lane.b32.xlu0 %v1943, 96
        %v1945 = vpop.permute.xlu0 %1944
        %v1947 = vsel %vm1237, %v1938, 0
        %v1950 = vsel %vm1237, %v1945, 0
        %1952 = vmatpush.bf16.xpose.msra.mxu0 0
        %1953 = vmatpush.bf16.xpose.msra.mxu0 0
        %1954 = vmatpush.bf16.xpose.msra.mxu0 0
        %1955 = vmatpush.bf16.xpose.msra.mxu0 0
        %1956 = vmatpush.bf16.xpose.msra.mxu0 0
        %1957 = vmatpush.bf16.xpose.msra.mxu0 0
        %1958 = vmatpush.bf16.xpose.msra.mxu0 0
        %1959 = vmatpush.bf16.xpose.msra.mxu0 %v1950
        %1960 = vmatmul.bf16.gmra.mxu0 %v1947
        %v1961 = vpop.f32.mrf.mxu0
        %v1962 = vadd.f32 0.0, %v1961
        %v1963 = vpop.f32.mrf.mxu0
        %v1964 = vadd.f32 0.0, %v1963
        %1965 = vdwg.mxu0
        %v1968 = vunpack.c.l.b16 %v1828
        %v1969 = vunpack.c.l.b16 %v1829
        %v1970 = vpack.c.b16 %v1969, %v1968
        %v1973 = vunpack.c.l.b16 %v1844
        %v1974 = vunpack.c.l.b16 %v1845
        %v1975 = vpack.c.b16 %v1974, %v1973
        %1976 = vrot.lane.b32.xlu0 %v1975, 96
        %v1977 = vpop.permute.xlu0 %1976
        %v1979 = vsel %vm1237, %v1970, 0
        %v1982 = vsel %vm1237, %v1977, 0
        %1984 = vmatpush.bf16.xpose.msra.mxu0 0
        %1985 = vmatpush.bf16.xpose.msra.mxu0 0
        %1986 = vmatpush.bf16.xpose.msra.mxu0 0
        %1987 = vmatpush.bf16.xpose.msra.mxu0 0
        %1988 = vmatpush.bf16.xpose.msra.mxu0 0
        %1989 = vmatpush.bf16.xpose.msra.mxu0 0
        %1990 = vmatpush.bf16.xpose.msra.mxu0 0
        %1991 = vmatpush.bf16.xpose.msra.mxu0 %v1982
        %1992 = vmatmul.bf16.gmra.mxu0 %v1979
        %v1993 = vpop.f32.mrf.mxu0
        %v1994 = vadd.f32 0.0, %v1993
        %v1995 = vpop.f32.mrf.mxu0
        %v1996 = vadd.f32 0.0, %v1995
        %1997 = vdwg.mxu0
        %v2000 = vunpack.c.l.b16 %v1830
        %v2001 = vunpack.c.l.b16 %v1831
        %v2002 = vpack.c.b16 %v2001, %v2000
        %v2005 = vunpack.c.l.b16 %v1846
        %v2006 = vunpack.c.l.b16 %v1847
        %v2007 = vpack.c.b16 %v2006, %v2005
        %2008 = vrot.lane.b32.xlu0 %v2007, 96
        %v2009 = vpop.permute.xlu0 %2008
        %v2011 = vsel %vm1237, %v2002, 0
        %v2014 = vsel %vm1237, %v2009, 0
        %2016 = vmatpush.bf16.xpose.msra.mxu0 0
        %2017 = vmatpush.bf16.xpose.msra.mxu0 0
        %2018 = vmatpush.bf16.xpose.msra.mxu0 0
        %2019 = vmatpush.bf16.xpose.msra.mxu0 0
        %2020 = vmatpush.bf16.xpose.msra.mxu0 0
        %2021 = vmatpush.bf16.xpose.msra.mxu0 0
        %2022 = vmatpush.bf16.xpose.msra.mxu0 0
        %2023 = vmatpush.bf16.xpose.msra.mxu0 %v2014
        %2024 = vmatmul.bf16.gmra.mxu0 %v2011
        %v2025 = vpop.f32.mrf.mxu0
        %v2026 = vadd.f32 0.0, %v2025
        %v2027 = vpop.f32.mrf.mxu0
        %v2028 = vadd.f32 0.0, %v2027
        %2029 = vdwg.mxu0
        %v2032 = vunpack.c.l.b16 %v1832
        %v2033 = vunpack.c.l.b16 %v1833
        %v2034 = vpack.c.b16 %v2033, %v2032
        %v2037 = vunpack.c.l.b16 %v1848
        %v2038 = vunpack.c.l.b16 %v1849
        %v2039 = vpack.c.b16 %v2038, %v2037
        %2040 = vrot.lane.b32.xlu0 %v2039, 96
        %v2041 = vpop.permute.xlu0 %2040
        %v2043 = vsel %vm1237, %v2034, 0
        %v2046 = vsel %vm1237, %v2041, 0
        %2048 = vmatpush.bf16.xpose.msra.mxu0 0
        %2049 = vmatpush.bf16.xpose.msra.mxu0 0
        %2050 = vmatpush.bf16.xpose.msra.mxu0 0
        %2051 = vmatpush.bf16.xpose.msra.mxu0 0
        %2052 = vmatpush.bf16.xpose.msra.mxu0 0
        %2053 = vmatpush.bf16.xpose.msra.mxu0 0
        %2054 = vmatpush.bf16.xpose.msra.mxu0 0
        %2055 = vmatpush.bf16.xpose.msra.mxu0 %v2046
        %2056 = vmatmul.bf16.gmra.mxu0 %v2043
        %v2057 = vpop.f32.mrf.mxu0
        %v2058 = vadd.f32 0.0, %v2057
        %v2059 = vpop.f32.mrf.mxu0
        %v2060 = vadd.f32 0.0, %v2059
        %2061 = vdwg.mxu0
        %v2064 = vunpack.c.l.b16 %v1834
        %v2065 = vunpack.c.l.b16 %v1835
        %v2066 = vpack.c.b16 %v2065, %v2064
        %v2069 = vunpack.c.l.b16 %v1850
        %v2070 = vunpack.c.l.b16 %v1851
        %v2071 = vpack.c.b16 %v2070, %v2069
        %2072 = vrot.lane.b32.xlu0 %v2071, 96
        %v2073 = vpop.permute.xlu0 %2072
        %v2075 = vsel %vm1237, %v2066, 0
        %v2078 = vsel %vm1237, %v2073, 0
        %2080 = vmatpush.bf16.xpose.msra.mxu0 0
        %2081 = vmatpush.bf16.xpose.msra.mxu0 0
        %2082 = vmatpush.bf16.xpose.msra.mxu0 0
        %2083 = vmatpush.bf16.xpose.msra.mxu0 0
        %2084 = vmatpush.bf16.xpose.msra.mxu0 0
        %2085 = vmatpush.bf16.xpose.msra.mxu0 0
        %2086 = vmatpush.bf16.xpose.msra.mxu0 0
        %2087 = vmatpush.bf16.xpose.msra.mxu0 %v2078
        %2088 = vmatmul.bf16.gmra.mxu0 %v2075
        %v2089 = vpop.f32.mrf.mxu0
        %v2090 = vadd.f32 0.0, %v2089
        %v2091 = vpop.f32.mrf.mxu0
        %v2092 = vadd.f32 0.0, %v2091
        %2093 = vdwg.mxu0
        %v2096 = vunpack.c.l.b16 %v1836
        %v2097 = vunpack.c.l.b16 %v1837
        %v2098 = vpack.c.b16 %v2097, %v2096
        %v2101 = vunpack.c.l.b16 %v1852
        %v2102 = vunpack.c.l.b16 %v1853
        %v2103 = vpack.c.b16 %v2102, %v2101
        %2104 = vrot.lane.b32.xlu0 %v2103, 96
        %v2105 = vpop.permute.xlu0 %2104
        %v2107 = vsel %vm1237, %v2098, 0
        %v2110 = vsel %vm1237, %v2105, 0
        %2112 = vmatpush.bf16.xpose.msra.mxu0 0
        %2113 = vmatpush.bf16.xpose.msra.mxu0 0
        %2114 = vmatpush.bf16.xpose.msra.mxu0 0
        %2115 = vmatpush.bf16.xpose.msra.mxu0 0
        %2116 = vmatpush.bf16.xpose.msra.mxu0 0
        %2117 = vmatpush.bf16.xpose.msra.mxu0 0
        %2118 = vmatpush.bf16.xpose.msra.mxu0 0
        %2119 = vmatpush.bf16.xpose.msra.mxu0 %v2110
        %2120 = vmatmul.bf16.gmra.mxu0 %v2107
        %v2121 = vpop.f32.mrf.mxu0
        %v2122 = vadd.f32 0.0, %v2121
        %v2123 = vpop.f32.mrf.mxu0
        %v2124 = vadd.f32 0.0, %v2123
        %2125 = vdwg.mxu0
        %v2126 = vsel %vm1237, %v1898, -inf
        %2127 = vmax.xlane.f32.xlu0 %v2126
        %v2128 = vpop.xlane.xlu0 %2127
        %v2129 = vsel %vm1237, %v1900, -inf
        %2130 = vmax.xlane.f32.xlu0 %v2129
        %v2131 = vpop.xlane.xlu0 %2130
        %v2132 = vsel %vm1237, %v1930, -inf
        %2133 = vmax.xlane.f32.xlu0 %v2132
        %v2134 = vpop.xlane.xlu0 %2133
        %v2135 = vsel %vm1237, %v1932, -inf
        %2136 = vmax.xlane.f32.xlu0 %v2135
        %v2137 = vpop.xlane.xlu0 %2136
        %v2138 = vsel %vm1237, %v1962, -inf
        %2139 = vmax.xlane.f32.xlu0 %v2138
        %v2140 = vpop.xlane.xlu0 %2139
        %v2141 = vsel %vm1237, %v1964, -inf
        %2142 = vmax.xlane.f32.xlu0 %v2141
        %v2143 = vpop.xlane.xlu0 %2142
        %v2144 = vsel %vm1237, %v1994, -inf
        %2145 = vmax.xlane.f32.xlu0 %v2144
        %v2146 = vpop.xlane.xlu0 %2145
        %v2147 = vsel %vm1237, %v1996, -inf
        %2148 = vmax.xlane.f32.xlu0 %v2147
        %v2149 = vpop.xlane.xlu0 %2148
        %v2150 = vsel %vm1237, %v2026, -inf
        %2151 = vmax.xlane.f32.xlu0 %v2150
        %v2152 = vpop.xlane.xlu0 %2151
        %v2153 = vsel %vm1237, %v2028, -inf
        %2154 = vmax.xlane.f32.xlu0 %v2153
        %v2155 = vpop.xlane.xlu0 %2154
        %v2156 = vsel %vm1237, %v2058, -inf
        %2157 = vmax.xlane.f32.xlu0 %v2156
        %v2158 = vpop.xlane.xlu0 %2157
        %v2159 = vsel %vm1237, %v2060, -inf
        %2160 = vmax.xlane.f32.xlu0 %v2159
        %v2161 = vpop.xlane.xlu0 %2160
        %v2162 = vsel %vm1237, %v2090, -inf
        %2163 = vmax.xlane.f32.xlu0 %v2162
        %v2164 = vpop.xlane.xlu0 %2163
        %v2165 = vsel %vm1237, %v2092, -inf
        %2166 = vmax.xlane.f32.xlu0 %v2165
        %v2167 = vpop.xlane.xlu0 %2166
        %v2168 = vsel %vm1237, %v2122, -inf
        %2169 = vmax.xlane.f32.xlu0 %v2168
        %v2170 = vpop.xlane.xlu0 %2169
        %v2171 = vsel %vm1237, %v2124, -inf
        %2172 = vmax.xlane.f32.xlu0 %v2171
        %v2173 = vpop.xlane.xlu0 %2172
        %v2174 = vsub.f32 %v1898, %v2128
        %v2175 = vsub.f32 %v1900, %v2131
        %v2176 = vsub.f32 %v1930, %v2134
        %v2177 = vsub.f32 %v1932, %v2137
        %v2178 = vsub.f32 %v1962, %v2140
        %v2179 = vsub.f32 %v1964, %v2143
        %v2180 = vsub.f32 %v1994, %v2146
        %v2181 = vsub.f32 %v1996, %v2149
        %v2182 = vsub.f32 %v2026, %v2152
        %v2183 = vsub.f32 %v2028, %v2155
        %v2184 = vsub.f32 %v2058, %v2158
        %v2185 = vsub.f32 %v2060, %v2161
        %v2186 = vsub.f32 %v2090, %v2164
        %v2187 = vsub.f32 %v2092, %v2167
        %v2188 = vsub.f32 %v2122, %v2170
        %v2189 = vsub.f32 %v2124, %v2173
        %v2190 = vmul.f32 %v2174, 1.442695
        %v2191 = vpow.pop %v2190
        %v2192 = vmul.f32 %v2175, 1.442695
        %v2193 = vpow.pop %v2192
        %v2194 = vmul.f32 %v2176, 1.442695
        %v2195 = vpow.pop %v2194
        %v2196 = vmul.f32 %v2177, 1.442695
        %v2197 = vpow.pop %v2196
        %v2198 = vmul.f32 %v2178, 1.442695
        %v2199 = vpow.pop %v2198
        %v2200 = vmul.f32 %v2179, 1.442695
        %v2201 = vpow.pop %v2200
        %v2202 = vmul.f32 %v2180, 1.442695
        %v2203 = vpow.pop %v2202
        %v2204 = vmul.f32 %v2181, 1.442695
        %v2205 = vpow.pop %v2204
        %v2206 = vmul.f32 %v2182, 1.442695
        %v2207 = vpow.pop %v2206
        %v2208 = vmul.f32 %v2183, 1.442695
        %v2209 = vpow.pop %v2208
        %v2210 = vmul.f32 %v2184, 1.442695
        %v2211 = vpow.pop %v2210
        %v2212 = vmul.f32 %v2185, 1.442695
        %v2213 = vpow.pop %v2212
        %v2214 = vmul.f32 %v2186, 1.442695
        %v2215 = vpow.pop %v2214
        %v2216 = vmul.f32 %v2187, 1.442695
        %v2217 = vpow.pop %v2216
        %v2218 = vmul.f32 %v2188, 1.442695
        %v2219 = vpow.pop %v2218
        %v2220 = vmul.f32 %v2189, 1.442695
        %v2221 = vpow.pop %v2220
        %v2222 = vsel %vm1237, %v2191, 0.0
        %2223 = vadd.xlane.f32.xlu0 %v2222
        %v2224 = vpop.xlane.xlu0 %2223
        %v2225 = vsel %vm1237, %v2193, 0.0
        %2226 = vadd.xlane.f32.xlu0 %v2225
        %v2227 = vpop.xlane.xlu0 %2226
        %v2228 = vsel %vm1237, %v2195, 0.0
        %2229 = vadd.xlane.f32.xlu0 %v2228
        %v2230 = vpop.xlane.xlu0 %2229
        %v2231 = vsel %vm1237, %v2197, 0.0
        %2232 = vadd.xlane.f32.xlu0 %v2231
        %v2233 = vpop.xlane.xlu0 %2232
        %v2234 = vsel %vm1237, %v2199, 0.0
        %2235 = vadd.xlane.f32.xlu0 %v2234
        %v2236 = vpop.xlane.xlu0 %2235
        %v2237 = vsel %vm1237, %v2201, 0.0
        %2238 = vadd.xlane.f32.xlu0 %v2237
        %v2239 = vpop.xlane.xlu0 %2238
        %v2240 = vsel %vm1237, %v2203, 0.0
        %2241 = vadd.xlane.f32.xlu0 %v2240
        %v2242 = vpop.xlane.xlu0 %2241
        %v2243 = vsel %vm1237, %v2205, 0.0
        %2244 = vadd.xlane.f32.xlu0 %v2243
        %v2245 = vpop.xlane.xlu0 %2244
        %v2246 = vsel %vm1237, %v2207, 0.0
        %2247 = vadd.xlane.f32.xlu0 %v2246
        %v2248 = vpop.xlane.xlu0 %2247
        %v2249 = vsel %vm1237, %v2209, 0.0
        %2250 = vadd.xlane.f32.xlu0 %v2249
        %v2251 = vpop.xlane.xlu0 %2250
        %v2252 = vsel %vm1237, %v2211, 0.0
        %2253 = vadd.xlane.f32.xlu0 %v2252
        %v2254 = vpop.xlane.xlu0 %2253
        %v2255 = vsel %vm1237, %v2213, 0.0
        %2256 = vadd.xlane.f32.xlu0 %v2255
        %v2257 = vpop.xlane.xlu0 %2256
        %v2258 = vsel %vm1237, %v2215, 0.0
        %2259 = vadd.xlane.f32.xlu0 %v2258
        %v2260 = vpop.xlane.xlu0 %2259
        %v2261 = vsel %vm1237, %v2217, 0.0
        %2262 = vadd.xlane.f32.xlu0 %v2261
        %v2263 = vpop.xlane.xlu0 %2262
        %v2264 = vsel %vm1237, %v2219, 0.0
        %2265 = vadd.xlane.f32.xlu0 %v2264
        %v2266 = vpop.xlane.xlu0 %2265
        %v2267 = vsel %vm1237, %v2221, 0.0
        %2268 = vadd.xlane.f32.xlu0 %v2267
        %v2269 = vpop.xlane.xlu0 %2268
        %v2270 = vrcp.pop %v2224
        %v2271 = vrcp.pop %v2227
        %v2272 = vrcp.pop %v2230
        %v2273 = vrcp.pop %v2233
        %v2274 = vrcp.pop %v2236
        %v2275 = vrcp.pop %v2239
        %v2276 = vrcp.pop %v2242
        %v2277 = vrcp.pop %v2245
        %v2278 = vrcp.pop %v2248
        %v2279 = vrcp.pop %v2251
        %v2280 = vrcp.pop %v2254
        %v2281 = vrcp.pop %v2257
        %v2282 = vrcp.pop %v2260
        %v2283 = vrcp.pop %v2263
        %v2284 = vrcp.pop %v2266
        %v2285 = vrcp.pop %v2269
        %v2286 = vmul.f32 %v2191, %v2270
        %v2287 = vmul.f32 %v2193, %v2271
        %v2288 = vmul.f32 %v2195, %v2272
        %v2289 = vmul.f32 %v2197, %v2273
        %v2290 = vmul.f32 %v2199, %v2274
        %v2291 = vmul.f32 %v2201, %v2275
        %v2292 = vmul.f32 %v2203, %v2276
        %v2293 = vmul.f32 %v2205, %v2277
        %v2294 = vmul.f32 %v2207, %v2278
        %v2295 = vmul.f32 %v2209, %v2279
        %v2296 = vmul.f32 %v2211, %v2280
        %v2297 = vmul.f32 %v2213, %v2281
        %v2298 = vmul.f32 %v2215, %v2282
        %v2299 = vmul.f32 %v2217, %v2283
        %v2300 = vmul.f32 %v2219, %v2284
        %v2301 = vmul.f32 %v2221, %v2285
        %v2302 = vpack.c.bf16 %v2286, %v2286
        %v2303 = vpack.c.bf16 %v2287, %v2287
        %v2304 = vpack.c.bf16 %v2288, %v2288
        %v2305 = vpack.c.bf16 %v2289, %v2289
        %v2306 = vpack.c.bf16 %v2290, %v2290
        %v2307 = vpack.c.bf16 %v2291, %v2291
        %v2308 = vpack.c.bf16 %v2292, %v2292
        %v2309 = vpack.c.bf16 %v2293, %v2293
        %v2310 = vpack.c.bf16 %v2294, %v2294
        %v2311 = vpack.c.bf16 %v2295, %v2295
        %v2312 = vpack.c.bf16 %v2296, %v2296
        %v2313 = vpack.c.bf16 %v2297, %v2297
        %v2314 = vpack.c.bf16 %v2298, %v2298
        %v2315 = vpack.c.bf16 %v2299, %v2299
        %v2316 = vpack.c.bf16 %v2300, %v2300
        %v2317 = vpack.c.bf16 %v2301, %v2301
        %v2320 = vunpack.c.l.b16 %v2302
        %v2321 = vunpack.c.l.b16 %v2303
        %v2322 = vpack.c.b16 %v2321, %v2320
        %v2325 = vunpack.c.l.b16 %v1854
        %v2326 = vunpack.c.l.b16 %v1855
        %v2327 = vpack.c.b16 %v2326, %v2325
        %2328 = vrot.lane.b32.xlu0 %v2327, 64
        %v2329 = vpop.permute.xlu0 %2328
        %v2332 = vsel %vm1237, %v2322, 0
        %2334 = vmatpush.bf16.msra.mxu0 0
        %2335 = vmatpush.bf16.msra.mxu0 0
        %2336 = vmatpush.bf16.msra.mxu0 0
        %2337 = vmatpush.bf16.msra.mxu0 0
        %2338 = vmatpush.bf16.msra.mxu0 0
        %2339 = vmatpush.bf16.msra.mxu0 0
        %2340 = vmatpush.bf16.msra.mxu0 0
        %2341 = vmatpush.bf16.msra.mxu0 %v2329
        %2342 = vmatmul.bf16.gmra.mxu0 %v2332
        %v2343 = vpop.f32.mrf.mxu0
        %v2344 = vadd.f32 0.0, %v2343
        %v2345 = vpop.f32.mrf.mxu0
        %v2346 = vadd.f32 0.0, %v2345
        %2347 = vdwg.mxu0
        %v2350 = vunpack.c.l.b16 %v2304
        %v2351 = vunpack.c.l.b16 %v2305
        %v2352 = vpack.c.b16 %v2351, %v2350
        %v2355 = vunpack.c.l.b16 %v1856
        %v2356 = vunpack.c.l.b16 %v1857
        %v2357 = vpack.c.b16 %v2356, %v2355
        %2358 = vrot.lane.b32.xlu0 %v2357, 64
        %v2359 = vpop.permute.xlu0 %2358
        %v2362 = vsel %vm1237, %v2352, 0
        %2364 = vmatpush.bf16.msra.mxu0 0
        %2365 = vmatpush.bf16.msra.mxu0 0
        %2366 = vmatpush.bf16.msra.mxu0 0
        %2367 = vmatpush.bf16.msra.mxu0 0
        %2368 = vmatpush.bf16.msra.mxu0 0
        %2369 = vmatpush.bf16.msra.mxu0 0
        %2370 = vmatpush.bf16.msra.mxu0 0
        %2371 = vmatpush.bf16.msra.mxu0 %v2359
        %2372 = vmatmul.bf16.gmra.mxu0 %v2362
        %v2373 = vpop.f32.mrf.mxu0
        %v2374 = vadd.f32 0.0, %v2373
        %v2375 = vpop.f32.mrf.mxu0
        %v2376 = vadd.f32 0.0, %v2375
        %2377 = vdwg.mxu0
        %v2380 = vunpack.c.l.b16 %v2306
        %v2381 = vunpack.c.l.b16 %v2307
        %v2382 = vpack.c.b16 %v2381, %v2380
        %v2385 = vunpack.c.l.b16 %v1858
        %v2386 = vunpack.c.l.b16 %v1859
        %v2387 = vpack.c.b16 %v2386, %v2385
        %2388 = vrot.lane.b32.xlu0 %v2387, 64
        %v2389 = vpop.permute.xlu0 %2388
        %v2392 = vsel %vm1237, %v2382, 0
        %2394 = vmatpush.bf16.msra.mxu0 0
        %2395 = vmatpush.bf16.msra.mxu0 0
        %2396 = vmatpush.bf16.msra.mxu0 0
        %2397 = vmatpush.bf16.msra.mxu0 0
        %2398 = vmatpush.bf16.msra.mxu0 0
        %2399 = vmatpush.bf16.msra.mxu0 0
        %2400 = vmatpush.bf16.msra.mxu0 0
        %2401 = vmatpush.bf16.msra.mxu0 %v2389
        %2402 = vmatmul.bf16.gmra.mxu0 %v2392
        %v2403 = vpop.f32.mrf.mxu0
        %v2404 = vadd.f32 0.0, %v2403
        %v2405 = vpop.f32.mrf.mxu0
        %v2406 = vadd.f32 0.0, %v2405
        %2407 = vdwg.mxu0
        %v2410 = vunpack.c.l.b16 %v2308
        %v2411 = vunpack.c.l.b16 %v2309
        %v2412 = vpack.c.b16 %v2411, %v2410
        %v2415 = vunpack.c.l.b16 %v1860
        %v2416 = vunpack.c.l.b16 %v1861
        %v2417 = vpack.c.b16 %v2416, %v2415
        %2418 = vrot.lane.b32.xlu0 %v2417, 64
        %v2419 = vpop.permute.xlu0 %2418
        %v2422 = vsel %vm1237, %v2412, 0
        %2424 = vmatpush.bf16.msra.mxu0 0
        %2425 = vmatpush.bf16.msra.mxu0 0
        %2426 = vmatpush.bf16.msra.mxu0 0
        %2427 = vmatpush.bf16.msra.mxu0 0
        %2428 = vmatpush.bf16.msra.mxu0 0
        %2429 = vmatpush.bf16.msra.mxu0 0
        %2430 = vmatpush.bf16.msra.mxu0 0
        %2431 = vmatpush.bf16.msra.mxu0 %v2419
        %2432 = vmatmul.bf16.gmra.mxu0 %v2422
        %v2433 = vpop.f32.mrf.mxu0
        %v2434 = vadd.f32 0.0, %v2433
        %v2435 = vpop.f32.mrf.mxu0
        %v2436 = vadd.f32 0.0, %v2435
        %2437 = vdwg.mxu0
        %v2440 = vunpack.c.l.b16 %v2310
        %v2441 = vunpack.c.l.b16 %v2311
        %v2442 = vpack.c.b16 %v2441, %v2440
        %v2445 = vunpack.c.l.b16 %v1862
        %v2446 = vunpack.c.l.b16 %v1863
        %v2447 = vpack.c.b16 %v2446, %v2445
        %2448 = vrot.lane.b32.xlu0 %v2447, 64
        %v2449 = vpop.permute.xlu0 %2448
        %v2452 = vsel %vm1237, %v2442, 0
        %2454 = vmatpush.bf16.msra.mxu0 0
        %2455 = vmatpush.bf16.msra.mxu0 0
        %2456 = vmatpush.bf16.msra.mxu0 0
        %2457 = vmatpush.bf16.msra.mxu0 0
        %2458 = vmatpush.bf16.msra.mxu0 0
        %2459 = vmatpush.bf16.msra.mxu0 0
        %2460 = vmatpush.bf16.msra.mxu0 0
        %2461 = vmatpush.bf16.msra.mxu0 %v2449
        %2462 = vmatmul.bf16.gmra.mxu0 %v2452
        %v2463 = vpop.f32.mrf.mxu0
        %v2464 = vadd.f32 0.0, %v2463
        %v2465 = vpop.f32.mrf.mxu0
        %v2466 = vadd.f32 0.0, %v2465
        %2467 = vdwg.mxu0
        %v2470 = vunpack.c.l.b16 %v2312
        %v2471 = vunpack.c.l.b16 %v2313
        %v2472 = vpack.c.b16 %v2471, %v2470
        %v2475 = vunpack.c.l.b16 %v1864
        %v2476 = vunpack.c.l.b16 %v1865
        %v2477 = vpack.c.b16 %v2476, %v2475
        %2478 = vrot.lane.b32.xlu0 %v2477, 64
        %v2479 = vpop.permute.xlu0 %2478
        %v2482 = vsel %vm1237, %v2472, 0
        %2484 = vmatpush.bf16.msra.mxu0 0
        %2485 = vmatpush.bf16.msra.mxu0 0
        %2486 = vmatpush.bf16.msra.mxu0 0
        %2487 = vmatpush.bf16.msra.mxu0 0
        %2488 = vmatpush.bf16.msra.mxu0 0
        %2489 = vmatpush.bf16.msra.mxu0 0
        %2490 = vmatpush.bf16.msra.mxu0 0
        %2491 = vmatpush.bf16.msra.mxu0 %v2479
        %2492 = vmatmul.bf16.gmra.mxu0 %v2482
        %v2493 = vpop.f32.mrf.mxu0
        %v2494 = vadd.f32 0.0, %v2493
        %v2495 = vpop.f32.mrf.mxu0
        %v2496 = vadd.f32 0.0, %v2495
        %2497 = vdwg.mxu0
        %v2500 = vunpack.c.l.b16 %v2314
        %v2501 = vunpack.c.l.b16 %v2315
        %v2502 = vpack.c.b16 %v2501, %v2500
        %v2505 = vunpack.c.l.b16 %v1866
        %v2506 = vunpack.c.l.b16 %v1867
        %v2507 = vpack.c.b16 %v2506, %v2505
        %2508 = vrot.lane.b32.xlu0 %v2507, 64
        %v2509 = vpop.permute.xlu0 %2508
        %v2512 = vsel %vm1237, %v2502, 0
        %2514 = vmatpush.bf16.msra.mxu0 0
        %2515 = vmatpush.bf16.msra.mxu0 0
        %2516 = vmatpush.bf16.msra.mxu0 0
        %2517 = vmatpush.bf16.msra.mxu0 0
        %2518 = vmatpush.bf16.msra.mxu0 0
        %2519 = vmatpush.bf16.msra.mxu0 0
        %2520 = vmatpush.bf16.msra.mxu0 0
        %2521 = vmatpush.bf16.msra.mxu0 %v2509
        %2522 = vmatmul.bf16.gmra.mxu0 %v2512
        %v2523 = vpop.f32.mrf.mxu0
        %v2524 = vadd.f32 0.0, %v2523
        %v2525 = vpop.f32.mrf.mxu0
        %v2526 = vadd.f32 0.0, %v2525
        %2527 = vdwg.mxu0
        %v2530 = vunpack.c.l.b16 %v2316
        %v2531 = vunpack.c.l.b16 %v2317
        %v2532 = vpack.c.b16 %v2531, %v2530
        %v2535 = vunpack.c.l.b16 %v1868
        %v2536 = vunpack.c.l.b16 %v1869
        %v2537 = vpack.c.b16 %v2536, %v2535
        %2538 = vrot.lane.b32.xlu0 %v2537, 64
        %v2539 = vpop.permute.xlu0 %2538
        %v2542 = vsel %vm1237, %v2532, 0
        %2544 = vmatpush.bf16.msra.mxu0 0
        %2545 = vmatpush.bf16.msra.mxu0 0
        %2546 = vmatpush.bf16.msra.mxu0 0
        %2547 = vmatpush.bf16.msra.mxu0 0
        %2548 = vmatpush.bf16.msra.mxu0 0
        %2549 = vmatpush.bf16.msra.mxu0 0
        %2550 = vmatpush.bf16.msra.mxu0 0
        %2551 = vmatpush.bf16.msra.mxu0 %v2539
        %2552 = vmatmul.bf16.gmra.mxu0 %v2542
        %v2553 = vpop.f32.mrf.mxu0
        %v2554 = vadd.f32 0.0, %v2553
        %v2555 = vpop.f32.mrf.mxu0
        %v2556 = vadd.f32 0.0, %v2555
        %2557 = vdwg.mxu0
        %v2558 = vpack.c.bf16 %v2344, %v2344
        %v2559 = vpack.c.bf16 %v2346, %v2346
        %v2560 = vpack.c.bf16 %v2374, %v2374
        %v2561 = vpack.c.bf16 %v2376, %v2376
        %v2562 = vpack.c.bf16 %v2404, %v2404
        %v2563 = vpack.c.bf16 %v2406, %v2406
        %v2564 = vpack.c.bf16 %v2434, %v2434
        %v2565 = vpack.c.bf16 %v2436, %v2436
        %v2566 = vpack.c.bf16 %v2464, %v2464
        %v2567 = vpack.c.bf16 %v2466, %v2466
        %v2568 = vpack.c.bf16 %v2494, %v2494
        %v2569 = vpack.c.bf16 %v2496, %v2496
        %v2570 = vpack.c.bf16 %v2524, %v2524
        %v2571 = vpack.c.bf16 %v2526, %v2526
        %v2572 = vpack.c.bf16 %v2554, %v2554
        %v2573 = vpack.c.bf16 %v2556, %v2556
        %2574 = vrot.lane.b32.xlu0 %v1221, 112
        %v2575 = vpop.permute.xlu0 %2574
        %2576 = vrot.lane.b32.xlu0 %v1222, 112
        %v2577 = vpop.permute.xlu0 %2576
        %2578 = vrot.lane.b32.xlu0 %v1223, 112
        %v2579 = vpop.permute.xlu0 %2578
        %2580 = vrot.lane.b32.xlu0 %v1224, 112
        %v2581 = vpop.permute.xlu0 %2580
        %2582 = vrot.lane.b32.xlu0 %v1225, 112
        %v2583 = vpop.permute.xlu0 %2582
        %2584 = vrot.lane.b32.xlu0 %v1226, 112
        %v2585 = vpop.permute.xlu0 %2584
        %2586 = vrot.lane.b32.xlu0 %v1227, 112
        %v2587 = vpop.permute.xlu0 %2586
        %2588 = vrot.lane.b32.xlu0 %v1228, 112
        %v2589 = vpop.permute.xlu0 %2588
        %2590 = vrot.lane.b32.xlu0 %v1229, 112
        %v2591 = vpop.permute.xlu0 %2590
        %2592 = vrot.lane.b32.xlu0 %v1230, 112
        %v2593 = vpop.permute.xlu0 %2592
        %2594 = vrot.lane.b32.xlu0 %v1231, 112
        %v2595 = vpop.permute.xlu0 %2594
        %2596 = vrot.lane.b32.xlu0 %v1232, 112
        %v2597 = vpop.permute.xlu0 %2596
        %2598 = vrot.lane.b32.xlu0 %v1233, 112
        %v2599 = vpop.permute.xlu0 %2598
        %2600 = vrot.lane.b32.xlu0 %v1234, 112
        %v2601 = vpop.permute.xlu0 %2600
        %2602 = vrot.lane.b32.xlu0 %v1235, 112
        %v2603 = vpop.permute.xlu0 %2602
        %2604 = vrot.lane.b32.xlu0 %v1236, 112
        %v2605 = vpop.permute.xlu0 %2604
        %v2622 = vsel %vm1237, %v2575, 0.0
        %2623 = vadd.xlane.f32.xlu0 %v2622
        %v2624 = vpop.xlane.xlu0 %2623
        %v2625 = vsel %vm1237, %v2577, 0.0
        %2626 = vadd.xlane.f32.xlu0 %v2625
        %v2627 = vpop.xlane.xlu0 %2626
        %v2628 = vsel %vm1237, %v2579, 0.0
        %2629 = vadd.xlane.f32.xlu0 %v2628
        %v2630 = vpop.xlane.xlu0 %2629
        %v2631 = vsel %vm1237, %v2581, 0.0
        %2632 = vadd.xlane.f32.xlu0 %v2631
        %v2633 = vpop.xlane.xlu0 %2632
        %v2634 = vsel %vm1237, %v2583, 0.0
        %2635 = vadd.xlane.f32.xlu0 %v2634
        %v2636 = vpop.xlane.xlu0 %2635
        %v2637 = vsel %vm1237, %v2585, 0.0
        %2638 = vadd.xlane.f32.xlu0 %v2637
        %v2639 = vpop.xlane.xlu0 %2638
        %v2640 = vsel %vm1237, %v2587, 0.0
        %2641 = vadd.xlane.f32.xlu0 %v2640
        %v2642 = vpop.xlane.xlu0 %2641
        %v2643 = vsel %vm1237, %v2589, 0.0
        %2644 = vadd.xlane.f32.xlu0 %v2643
        %v2645 = vpop.xlane.xlu0 %2644
        %v2646 = vsel %vm1237, %v2591, 0.0
        %2647 = vadd.xlane.f32.xlu0 %v2646
        %v2648 = vpop.xlane.xlu0 %2647
        %v2649 = vsel %vm1237, %v2593, 0.0
        %2650 = vadd.xlane.f32.xlu0 %v2649
        %v2651 = vpop.xlane.xlu0 %2650
        %v2652 = vsel %vm1237, %v2595, 0.0
        %2653 = vadd.xlane.f32.xlu0 %v2652
        %v2654 = vpop.xlane.xlu0 %2653
        %v2655 = vsel %vm1237, %v2597, 0.0
        %2656 = vadd.xlane.f32.xlu0 %v2655
        %v2657 = vpop.xlane.xlu0 %2656
        %v2658 = vsel %vm1237, %v2599, 0.0
        %2659 = vadd.xlane.f32.xlu0 %v2658
        %v2660 = vpop.xlane.xlu0 %2659
        %v2661 = vsel %vm1237, %v2601, 0.0
        %2662 = vadd.xlane.f32.xlu0 %v2661
        %v2663 = vpop.xlane.xlu0 %2662
        %v2664 = vsel %vm1237, %v2603, 0.0
        %2665 = vadd.xlane.f32.xlu0 %v2664
        %v2666 = vpop.xlane.xlu0 %2665
        %v2667 = vsel %vm1237, %v2605, 0.0
        %2668 = vadd.xlane.f32.xlu0 %v2667
        %v2669 = vpop.xlane.xlu0 %2668
        %v2670 = vmax.f32 %v2624, 1e-24
        %v2671 = vmax.f32 %v2627, 1e-24
        %v2672 = vmax.f32 %v2630, 1e-24
        %v2673 = vmax.f32 %v2633, 1e-24
        %v2674 = vmax.f32 %v2636, 1e-24
        %v2675 = vmax.f32 %v2639, 1e-24
        %v2676 = vmax.f32 %v2642, 1e-24
        %v2677 = vmax.f32 %v2645, 1e-24
        %v2678 = vmax.f32 %v2648, 1e-24
        %v2679 = vmax.f32 %v2651, 1e-24
        %v2680 = vmax.f32 %v2654, 1e-24
        %v2681 = vmax.f32 %v2657, 1e-24
        %v2682 = vmax.f32 %v2660, 1e-24
        %v2683 = vmax.f32 %v2663, 1e-24
        %v2684 = vmax.f32 %v2666, 1e-24
        %v2685 = vmax.f32 %v2669, 1e-24
        %v2686 = vrsqrt.pop %v2670
        %v2687 = vmul.f32 %v2686, %v2670
        %v2688 = vmul.f32 %v2687, %v2686
        %v2689 = vmul.f32 0.5, %v2688
        %v2690 = vsub.f32 1.5, %v2689
        %v2691 = vmul.f32 %v2686, %v2690
        %vm2692 = vweird.f32 %v2670
        %vm2693 = vweird.f32 %v2686
        %vm2694 = vmor %vm2692, %vm2693
        %v2695 = vsel %vm2694, %v2686, %v2691
        %v2696 = vrsqrt.pop %v2671
        %v2697 = vmul.f32 %v2696, %v2671
        %v2698 = vmul.f32 %v2697, %v2696
        %v2699 = vmul.f32 0.5, %v2698
        %v2700 = vsub.f32 1.5, %v2699
        %v2701 = vmul.f32 %v2696, %v2700
        %vm2702 = vweird.f32 %v2671
        %vm2703 = vweird.f32 %v2696
        %vm2704 = vmor %vm2702, %vm2703
        %v2705 = vsel %vm2704, %v2696, %v2701
        %v2706 = vrsqrt.pop %v2672
        %v2707 = vmul.f32 %v2706, %v2672
        %v2708 = vmul.f32 %v2707, %v2706
        %v2709 = vmul.f32 0.5, %v2708
        %v2710 = vsub.f32 1.5, %v2709
        %v2711 = vmul.f32 %v2706, %v2710
        %vm2712 = vweird.f32 %v2672
        %vm2713 = vweird.f32 %v2706
        %vm2714 = vmor %vm2712, %vm2713
        %v2715 = vsel %vm2714, %v2706, %v2711
        %v2716 = vrsqrt.pop %v2673
        %v2717 = vmul.f32 %v2716, %v2673
        %v2718 = vmul.f32 %v2717, %v2716
        %v2719 = vmul.f32 0.5, %v2718
        %v2720 = vsub.f32 1.5, %v2719
        %v2721 = vmul.f32 %v2716, %v2720
        %vm2722 = vweird.f32 %v2673
        %vm2723 = vweird.f32 %v2716
        %vm2724 = vmor %vm2722, %vm2723
        %v2725 = vsel %vm2724, %v2716, %v2721
        %v2726 = vrsqrt.pop %v2674
        %v2727 = vmul.f32 %v2726, %v2674
        %v2728 = vmul.f32 %v2727, %v2726
        %v2729 = vmul.f32 0.5, %v2728
        %v2730 = vsub.f32 1.5, %v2729
        %v2731 = vmul.f32 %v2726, %v2730
        %vm2732 = vweird.f32 %v2674
        %vm2733 = vweird.f32 %v2726
        %vm2734 = vmor %vm2732, %vm2733
        %v2735 = vsel %vm2734, %v2726, %v2731
        %v2736 = vrsqrt.pop %v2675
        %v2737 = vmul.f32 %v2736, %v2675
        %v2738 = vmul.f32 %v2737, %v2736
        %v2739 = vmul.f32 0.5, %v2738
        %v2740 = vsub.f32 1.5, %v2739
        %v2741 = vmul.f32 %v2736, %v2740
        %vm2742 = vweird.f32 %v2675
        %vm2743 = vweird.f32 %v2736
        %vm2744 = vmor %vm2742, %vm2743
        %v2745 = vsel %vm2744, %v2736, %v2741
        %v2746 = vrsqrt.pop %v2676
        %v2747 = vmul.f32 %v2746, %v2676
        %v2748 = vmul.f32 %v2747, %v2746
        %v2749 = vmul.f32 0.5, %v2748
        %v2750 = vsub.f32 1.5, %v2749
        %v2751 = vmul.f32 %v2746, %v2750
        %vm2752 = vweird.f32 %v2676
        %vm2753 = vweird.f32 %v2746
        %vm2754 = vmor %vm2752, %vm2753
        %v2755 = vsel %vm2754, %v2746, %v2751
        %v2756 = vrsqrt.pop %v2677
        %v2757 = vmul.f32 %v2756, %v2677
        %v2758 = vmul.f32 %v2757, %v2756
        %v2759 = vmul.f32 0.5, %v2758
        %v2760 = vsub.f32 1.5, %v2759
        %v2761 = vmul.f32 %v2756, %v2760
        %vm2762 = vweird.f32 %v2677
        %vm2763 = vweird.f32 %v2756
        %vm2764 = vmor %vm2762, %vm2763
        %v2765 = vsel %vm2764, %v2756, %v2761
        %v2766 = vrsqrt.pop %v2678
        %v2767 = vmul.f32 %v2766, %v2678
        %v2768 = vmul.f32 %v2767, %v2766
        %v2769 = vmul.f32 0.5, %v2768
        %v2770 = vsub.f32 1.5, %v2769
        %v2771 = vmul.f32 %v2766, %v2770
        %vm2772 = vweird.f32 %v2678
        %vm2773 = vweird.f32 %v2766
        %vm2774 = vmor %vm2772, %vm2773
        %v2775 = vsel %vm2774, %v2766, %v2771
        %v2776 = vrsqrt.pop %v2679
        %v2777 = vmul.f32 %v2776, %v2679
        %v2778 = vmul.f32 %v2777, %v2776
        %v2779 = vmul.f32 0.5, %v2778
        %v2780 = vsub.f32 1.5, %v2779
        %v2781 = vmul.f32 %v2776, %v2780
        %vm2782 = vweird.f32 %v2679
        %vm2783 = vweird.f32 %v2776
        %vm2784 = vmor %vm2782, %vm2783
        %v2785 = vsel %vm2784, %v2776, %v2781
        %v2786 = vrsqrt.pop %v2680
        %v2787 = vmul.f32 %v2786, %v2680
        %v2788 = vmul.f32 %v2787, %v2786
        %v2789 = vmul.f32 0.5, %v2788
        %v2790 = vsub.f32 1.5, %v2789
        %v2791 = vmul.f32 %v2786, %v2790
        %vm2792 = vweird.f32 %v2680
        %vm2793 = vweird.f32 %v2786
        %vm2794 = vmor %vm2792, %vm2793
        %v2795 = vsel %vm2794, %v2786, %v2791
        %v2796 = vrsqrt.pop %v2681
        %v2797 = vmul.f32 %v2796, %v2681
        %v2798 = vmul.f32 %v2797, %v2796
        %v2799 = vmul.f32 0.5, %v2798
        %v2800 = vsub.f32 1.5, %v2799
        %v2801 = vmul.f32 %v2796, %v2800
        %vm2802 = vweird.f32 %v2681
        %vm2803 = vweird.f32 %v2796
        %vm2804 = vmor %vm2802, %vm2803
        %v2805 = vsel %vm2804, %v2796, %v2801
        %v2806 = vrsqrt.pop %v2682
        %v2807 = vmul.f32 %v2806, %v2682
        %v2808 = vmul.f32 %v2807, %v2806
        %v2809 = vmul.f32 0.5, %v2808
        %v2810 = vsub.f32 1.5, %v2809
        %v2811 = vmul.f32 %v2806, %v2810
        %vm2812 = vweird.f32 %v2682
        %vm2813 = vweird.f32 %v2806
        %vm2814 = vmor %vm2812, %vm2813
        %v2815 = vsel %vm2814, %v2806, %v2811
        %v2816 = vrsqrt.pop %v2683
        %v2817 = vmul.f32 %v2816, %v2683
        %v2818 = vmul.f32 %v2817, %v2816
        %v2819 = vmul.f32 0.5, %v2818
        %v2820 = vsub.f32 1.5, %v2819
        %v2821 = vmul.f32 %v2816, %v2820
        %vm2822 = vweird.f32 %v2683
        %vm2823 = vweird.f32 %v2816
        %vm2824 = vmor %vm2822, %vm2823
        %v2825 = vsel %vm2824, %v2816, %v2821
        %v2826 = vrsqrt.pop %v2684
        %v2827 = vmul.f32 %v2826, %v2684
        %v2828 = vmul.f32 %v2827, %v2826
        %v2829 = vmul.f32 0.5, %v2828
        %v2830 = vsub.f32 1.5, %v2829
        %v2831 = vmul.f32 %v2826, %v2830
        %vm2832 = vweird.f32 %v2684
        %vm2833 = vweird.f32 %v2826
        %vm2834 = vmor %vm2832, %vm2833
        %v2835 = vsel %vm2834, %v2826, %v2831
        %v2836 = vrsqrt.pop %v2685
        %v2837 = vmul.f32 %v2836, %v2685
        %v2838 = vmul.f32 %v2837, %v2836
        %v2839 = vmul.f32 0.5, %v2838
        %v2840 = vsub.f32 1.5, %v2839
        %v2841 = vmul.f32 %v2836, %v2840
        %vm2842 = vweird.f32 %v2685
        %vm2843 = vweird.f32 %v2836
        %vm2844 = vmor %vm2842, %vm2843
        %v2845 = vsel %vm2844, %v2836, %v2841
        %v2846 = vmul.f32 %v1180, %v2695
        %v2847 = vmul.f32 %v1182, %v2705
        %v2848 = vmul.f32 %v1185, %v2715
        %v2849 = vmul.f32 %v1187, %v2725
        %v2850 = vmul.f32 %v1190, %v2735
        %v2851 = vmul.f32 %v1192, %v2745
        %v2852 = vmul.f32 %v1195, %v2755
        %v2853 = vmul.f32 %v1197, %v2765
        %v2854 = vmul.f32 %v1200, %v2775
        %v2855 = vmul.f32 %v1202, %v2785
        %v2856 = vmul.f32 %v1205, %v2795
        %v2857 = vmul.f32 %v1207, %v2805
        %v2858 = vmul.f32 %v1210, %v2815
        %v2859 = vmul.f32 %v1212, %v2825
        %v2860 = vmul.f32 %v1215, %v2835
        %v2861 = vmul.f32 %v1217, %v2845
        %v2862 = vmul.f32 %v2846, %v1479
        %v2863 = vmul.f32 %v2847, %v1479
        %v2864 = vmul.f32 %v2848, %v1479
        %v2865 = vmul.f32 %v2849, %v1479
        %v2866 = vmul.f32 %v2850, %v1479
        %v2867 = vmul.f32 %v2851, %v1479
        %v2868 = vmul.f32 %v2852, %v1479
        %v2869 = vmul.f32 %v2853, %v1479
        %v2870 = vmul.f32 %v2854, %v1479
        %v2871 = vmul.f32 %v2855, %v1479
        %v2872 = vmul.f32 %v2856, %v1479
        %v2873 = vmul.f32 %v2857, %v1479
        %v2874 = vmul.f32 %v2858, %v1479
        %v2875 = vmul.f32 %v2859, %v1479
        %v2876 = vmul.f32 %v2860, %v1479
        %v2877 = vmul.f32 %v2861, %v1479
        %2878 = vrot.lane.b32.xlu0 %v1221, 80
        %v2879 = vpop.permute.xlu0 %2878
        %2880 = vrot.lane.b32.xlu0 %v1222, 80
        %v2881 = vpop.permute.xlu0 %2880
        %2882 = vrot.lane.b32.xlu0 %v1223, 80
        %v2883 = vpop.permute.xlu0 %2882
        %2884 = vrot.lane.b32.xlu0 %v1224, 80
        %v2885 = vpop.permute.xlu0 %2884
        %2886 = vrot.lane.b32.xlu0 %v1225, 80
        %v2887 = vpop.permute.xlu0 %2886
        %2888 = vrot.lane.b32.xlu0 %v1226, 80
        %v2889 = vpop.permute.xlu0 %2888
        %2890 = vrot.lane.b32.xlu0 %v1227, 80
        %v2891 = vpop.permute.xlu0 %2890
        %2892 = vrot.lane.b32.xlu0 %v1228, 80
        %v2893 = vpop.permute.xlu0 %2892
        %2894 = vrot.lane.b32.xlu0 %v1229, 80
        %v2895 = vpop.permute.xlu0 %2894
        %2896 = vrot.lane.b32.xlu0 %v1230, 80
        %v2897 = vpop.permute.xlu0 %2896
        %2898 = vrot.lane.b32.xlu0 %v1231, 80
        %v2899 = vpop.permute.xlu0 %2898
        %2900 = vrot.lane.b32.xlu0 %v1232, 80
        %v2901 = vpop.permute.xlu0 %2900
        %2902 = vrot.lane.b32.xlu0 %v1233, 80
        %v2903 = vpop.permute.xlu0 %2902
        %2904 = vrot.lane.b32.xlu0 %v1234, 80
        %v2905 = vpop.permute.xlu0 %2904
        %2906 = vrot.lane.b32.xlu0 %v1235, 80
        %v2907 = vpop.permute.xlu0 %2906
        %2908 = vrot.lane.b32.xlu0 %v1236, 80
        %v2909 = vpop.permute.xlu0 %2908
        %v2926 = vsel %vm1237, %v2879, 0.0
        %2927 = vadd.xlane.f32.xlu0 %v2926
        %v2928 = vpop.xlane.xlu0 %2927
        %v2929 = vsel %vm1237, %v2881, 0.0
        %2930 = vadd.xlane.f32.xlu0 %v2929
        %v2931 = vpop.xlane.xlu0 %2930
        %v2932 = vsel %vm1237, %v2883, 0.0
        %2933 = vadd.xlane.f32.xlu0 %v2932
        %v2934 = vpop.xlane.xlu0 %2933
        %v2935 = vsel %vm1237, %v2885, 0.0
        %2936 = vadd.xlane.f32.xlu0 %v2935
        %v2937 = vpop.xlane.xlu0 %2936
        %v2938 = vsel %vm1237, %v2887, 0.0
        %2939 = vadd.xlane.f32.xlu0 %v2938
        %v2940 = vpop.xlane.xlu0 %2939
        %v2941 = vsel %vm1237, %v2889, 0.0
        %2942 = vadd.xlane.f32.xlu0 %v2941
        %v2943 = vpop.xlane.xlu0 %2942
        %v2944 = vsel %vm1237, %v2891, 0.0
        %2945 = vadd.xlane.f32.xlu0 %v2944
        %v2946 = vpop.xlane.xlu0 %2945
        %v2947 = vsel %vm1237, %v2893, 0.0
        %2948 = vadd.xlane.f32.xlu0 %v2947
        %v2949 = vpop.xlane.xlu0 %2948
        %v2950 = vsel %vm1237, %v2895, 0.0
        %2951 = vadd.xlane.f32.xlu0 %v2950
        %v2952 = vpop.xlane.xlu0 %2951
        %v2953 = vsel %vm1237, %v2897, 0.0
        %2954 = vadd.xlane.f32.xlu0 %v2953
        %v2955 = vpop.xlane.xlu0 %2954
        %v2956 = vsel %vm1237, %v2899, 0.0
        %2957 = vadd.xlane.f32.xlu0 %v2956
        %v2958 = vpop.xlane.xlu0 %2957
        %v2959 = vsel %vm1237, %v2901, 0.0
        %2960 = vadd.xlane.f32.xlu0 %v2959
        %v2961 = vpop.xlane.xlu0 %2960
        %v2962 = vsel %vm1237, %v2903, 0.0
        %2963 = vadd.xlane.f32.xlu0 %v2962
        %v2964 = vpop.xlane.xlu0 %2963
        %v2965 = vsel %vm1237, %v2905, 0.0
        %2966 = vadd.xlane.f32.xlu0 %v2965
        %v2967 = vpop.xlane.xlu0 %2966
        %v2968 = vsel %vm1237, %v2907, 0.0
        %2969 = vadd.xlane.f32.xlu0 %v2968
        %v2970 = vpop.xlane.xlu0 %2969
        %v2971 = vsel %vm1237, %v2909, 0.0
        %2972 = vadd.xlane.f32.xlu0 %v2971
        %v2973 = vpop.xlane.xlu0 %2972
        %v2974 = vmax.f32 %v2928, 1e-24
        %v2975 = vmax.f32 %v2931, 1e-24
        %v2976 = vmax.f32 %v2934, 1e-24
        %v2977 = vmax.f32 %v2937, 1e-24
        %v2978 = vmax.f32 %v2940, 1e-24
        %v2979 = vmax.f32 %v2943, 1e-24
        %v2980 = vmax.f32 %v2946, 1e-24
        %v2981 = vmax.f32 %v2949, 1e-24
        %v2982 = vmax.f32 %v2952, 1e-24
        %v2983 = vmax.f32 %v2955, 1e-24
        %v2984 = vmax.f32 %v2958, 1e-24
        %v2985 = vmax.f32 %v2961, 1e-24
        %v2986 = vmax.f32 %v2964, 1e-24
        %v2987 = vmax.f32 %v2967, 1e-24
        %v2988 = vmax.f32 %v2970, 1e-24
        %v2989 = vmax.f32 %v2973, 1e-24
        %v2990 = vrsqrt.pop %v2974
        %v2991 = vmul.f32 %v2990, %v2974
        %v2992 = vmul.f32 %v2991, %v2990
        %v2993 = vmul.f32 0.5, %v2992
        %v2994 = vsub.f32 1.5, %v2993
        %v2995 = vmul.f32 %v2990, %v2994
        %vm2996 = vweird.f32 %v2974
        %vm2997 = vweird.f32 %v2990
        %vm2998 = vmor %vm2996, %vm2997
        %v2999 = vsel %vm2998, %v2990, %v2995
        %v3000 = vrsqrt.pop %v2975
        %v3001 = vmul.f32 %v3000, %v2975
        %v3002 = vmul.f32 %v3001, %v3000
        %v3003 = vmul.f32 0.5, %v3002
        %v3004 = vsub.f32 1.5, %v3003
        %v3005 = vmul.f32 %v3000, %v3004
        %vm3006 = vweird.f32 %v2975
        %vm3007 = vweird.f32 %v3000
        %vm3008 = vmor %vm3006, %vm3007
        %v3009 = vsel %vm3008, %v3000, %v3005
        %v3010 = vrsqrt.pop %v2976
        %v3011 = vmul.f32 %v3010, %v2976
        %v3012 = vmul.f32 %v3011, %v3010
        %v3013 = vmul.f32 0.5, %v3012
        %v3014 = vsub.f32 1.5, %v3013
        %v3015 = vmul.f32 %v3010, %v3014
        %vm3016 = vweird.f32 %v2976
        %vm3017 = vweird.f32 %v3010
        %vm3018 = vmor %vm3016, %vm3017
        %v3019 = vsel %vm3018, %v3010, %v3015
        %v3020 = vrsqrt.pop %v2977
        %v3021 = vmul.f32 %v3020, %v2977
        %v3022 = vmul.f32 %v3021, %v3020
        %v3023 = vmul.f32 0.5, %v3022
        %v3024 = vsub.f32 1.5, %v3023
        %v3025 = vmul.f32 %v3020, %v3024
        %vm3026 = vweird.f32 %v2977
        %vm3027 = vweird.f32 %v3020
        %vm3028 = vmor %vm3026, %vm3027
        %v3029 = vsel %vm3028, %v3020, %v3025
        %v3030 = vrsqrt.pop %v2978
        %v3031 = vmul.f32 %v3030, %v2978
        %v3032 = vmul.f32 %v3031, %v3030
        %v3033 = vmul.f32 0.5, %v3032
        %v3034 = vsub.f32 1.5, %v3033
        %v3035 = vmul.f32 %v3030, %v3034
        %vm3036 = vweird.f32 %v2978
        %vm3037 = vweird.f32 %v3030
        %vm3038 = vmor %vm3036, %vm3037
        %v3039 = vsel %vm3038, %v3030, %v3035
        %v3040 = vrsqrt.pop %v2979
        %v3041 = vmul.f32 %v3040, %v2979
        %v3042 = vmul.f32 %v3041, %v3040
        %v3043 = vmul.f32 0.5, %v3042
        %v3044 = vsub.f32 1.5, %v3043
        %v3045 = vmul.f32 %v3040, %v3044
        %vm3046 = vweird.f32 %v2979
        %vm3047 = vweird.f32 %v3040
        %vm3048 = vmor %vm3046, %vm3047
        %v3049 = vsel %vm3048, %v3040, %v3045
        %v3050 = vrsqrt.pop %v2980
        %v3051 = vmul.f32 %v3050, %v2980
        %v3052 = vmul.f32 %v3051, %v3050
        %v3053 = vmul.f32 0.5, %v3052
        %v3054 = vsub.f32 1.5, %v3053
        %v3055 = vmul.f32 %v3050, %v3054
        %vm3056 = vweird.f32 %v2980
        %vm3057 = vweird.f32 %v3050
        %vm3058 = vmor %vm3056, %vm3057
        %v3059 = vsel %vm3058, %v3050, %v3055
        %v3060 = vrsqrt.pop %v2981
        %v3061 = vmul.f32 %v3060, %v2981
        %v3062 = vmul.f32 %v3061, %v3060
        %v3063 = vmul.f32 0.5, %v3062
        %v3064 = vsub.f32 1.5, %v3063
        %v3065 = vmul.f32 %v3060, %v3064
        %vm3066 = vweird.f32 %v2981
        %vm3067 = vweird.f32 %v3060
        %vm3068 = vmor %vm3066, %vm3067
        %v3069 = vsel %vm3068, %v3060, %v3065
        %v3070 = vrsqrt.pop %v2982
        %v3071 = vmul.f32 %v3070, %v2982
        %v3072 = vmul.f32 %v3071, %v3070
        %v3073 = vmul.f32 0.5, %v3072
        %v3074 = vsub.f32 1.5, %v3073
        %v3075 = vmul.f32 %v3070, %v3074
        %vm3076 = vweird.f32 %v2982
        %vm3077 = vweird.f32 %v3070
        %vm3078 = vmor %vm3076, %vm3077
        %v3079 = vsel %vm3078, %v3070, %v3075
        %v3080 = vrsqrt.pop %v2983
        %v3081 = vmul.f32 %v3080, %v2983
        %v3082 = vmul.f32 %v3081, %v3080
        %v3083 = vmul.f32 0.5, %v3082
        %v3084 = vsub.f32 1.5, %v3083
        %v3085 = vmul.f32 %v3080, %v3084
        %vm3086 = vweird.f32 %v2983
        %vm3087 = vweird.f32 %v3080
        %vm3088 = vmor %vm3086, %vm3087
        %v3089 = vsel %vm3088, %v3080, %v3085
        %v3090 = vrsqrt.pop %v2984
        %v3091 = vmul.f32 %v3090, %v2984
        %v3092 = vmul.f32 %v3091, %v3090
        %v3093 = vmul.f32 0.5, %v3092
        %v3094 = vsub.f32 1.5, %v3093
        %v3095 = vmul.f32 %v3090, %v3094
        %vm3096 = vweird.f32 %v2984
        %vm3097 = vweird.f32 %v3090
        %vm3098 = vmor %vm3096, %vm3097
        %v3099 = vsel %vm3098, %v3090, %v3095
        %v3100 = vrsqrt.pop %v2985
        %v3101 = vmul.f32 %v3100, %v2985
        %v3102 = vmul.f32 %v3101, %v3100
        %v3103 = vmul.f32 0.5, %v3102
        %v3104 = vsub.f32 1.5, %v3103
        %v3105 = vmul.f32 %v3100, %v3104
        %vm3106 = vweird.f32 %v2985
        %vm3107 = vweird.f32 %v3100
        %vm3108 = vmor %vm3106, %vm3107
        %v3109 = vsel %vm3108, %v3100, %v3105
        %v3110 = vrsqrt.pop %v2986
        %v3111 = vmul.f32 %v3110, %v2986
        %v3112 = vmul.f32 %v3111, %v3110
        %v3113 = vmul.f32 0.5, %v3112
        %v3114 = vsub.f32 1.5, %v3113
        %v3115 = vmul.f32 %v3110, %v3114
        %vm3116 = vweird.f32 %v2986
        %vm3117 = vweird.f32 %v3110
        %vm3118 = vmor %vm3116, %vm3117
        %v3119 = vsel %vm3118, %v3110, %v3115
        %v3120 = vrsqrt.pop %v2987
        %v3121 = vmul.f32 %v3120, %v2987
        %v3122 = vmul.f32 %v3121, %v3120
        %v3123 = vmul.f32 0.5, %v3122
        %v3124 = vsub.f32 1.5, %v3123
        %v3125 = vmul.f32 %v3120, %v3124
        %vm3126 = vweird.f32 %v2987
        %vm3127 = vweird.f32 %v3120
        %vm3128 = vmor %vm3126, %vm3127
        %v3129 = vsel %vm3128, %v3120, %v3125
        %v3130 = vrsqrt.pop %v2988
        %v3131 = vmul.f32 %v3130, %v2988
        %v3132 = vmul.f32 %v3131, %v3130
        %v3133 = vmul.f32 0.5, %v3132
        %v3134 = vsub.f32 1.5, %v3133
        %v3135 = vmul.f32 %v3130, %v3134
        %vm3136 = vweird.f32 %v2988
        %vm3137 = vweird.f32 %v3130
        %vm3138 = vmor %vm3136, %vm3137
        %v3139 = vsel %vm3138, %v3130, %v3135
        %v3140 = vrsqrt.pop %v2989
        %v3141 = vmul.f32 %v3140, %v2989
        %v3142 = vmul.f32 %v3141, %v3140
        %v3143 = vmul.f32 0.5, %v3142
        %v3144 = vsub.f32 1.5, %v3143
        %v3145 = vmul.f32 %v3140, %v3144
        %vm3146 = vweird.f32 %v2989
        %vm3147 = vweird.f32 %v3140
        %vm3148 = vmor %vm3146, %vm3147
        %v3149 = vsel %vm3148, %v3140, %v3145
        %v3150 = vmul.f32 %v1180, %v2999
        %v3151 = vmul.f32 %v1182, %v3009
        %v3152 = vmul.f32 %v1185, %v3019
        %v3153 = vmul.f32 %v1187, %v3029
        %v3154 = vmul.f32 %v1190, %v3039
        %v3155 = vmul.f32 %v1192, %v3049
        %v3156 = vmul.f32 %v1195, %v3059
        %v3157 = vmul.f32 %v1197, %v3069
        %v3158 = vmul.f32 %v1200, %v3079
        %v3159 = vmul.f32 %v1202, %v3089
        %v3160 = vmul.f32 %v1205, %v3099
        %v3161 = vmul.f32 %v1207, %v3109
        %v3162 = vmul.f32 %v1210, %v3119
        %v3163 = vmul.f32 %v1212, %v3129
        %v3164 = vmul.f32 %v1215, %v3139
        %v3165 = vmul.f32 %v1217, %v3149
        %v3166 = vmul.f32 %v3150, %v1804
        %v3167 = vmul.f32 %v3151, %v1804
        %v3168 = vmul.f32 %v3152, %v1804
        %v3169 = vmul.f32 %v3153, %v1804
        %v3170 = vmul.f32 %v3154, %v1804
        %v3171 = vmul.f32 %v3155, %v1804
        %v3172 = vmul.f32 %v3156, %v1804
        %v3173 = vmul.f32 %v3157, %v1804
        %v3174 = vmul.f32 %v3158, %v1804
        %v3175 = vmul.f32 %v3159, %v1804
        %v3176 = vmul.f32 %v3160, %v1804
        %v3177 = vmul.f32 %v3161, %v1804
        %v3178 = vmul.f32 %v3162, %v1804
        %v3179 = vmul.f32 %v3163, %v1804
        %v3180 = vmul.f32 %v3164, %v1804
        %v3181 = vmul.f32 %v3165, %v1804
        %v3182 = vpack.c.bf16 %v2862, %v2862
        %v3183 = vpack.c.bf16 %v2863, %v2863
        %v3184 = vpack.c.bf16 %v2864, %v2864
        %v3185 = vpack.c.bf16 %v2865, %v2865
        %v3186 = vpack.c.bf16 %v2866, %v2866
        %v3187 = vpack.c.bf16 %v2867, %v2867
        %v3188 = vpack.c.bf16 %v2868, %v2868
        %v3189 = vpack.c.bf16 %v2869, %v2869
        %v3190 = vpack.c.bf16 %v2870, %v2870
        %v3191 = vpack.c.bf16 %v2871, %v2871
        %v3192 = vpack.c.bf16 %v2872, %v2872
        %v3193 = vpack.c.bf16 %v2873, %v2873
        %v3194 = vpack.c.bf16 %v2874, %v2874
        %v3195 = vpack.c.bf16 %v2875, %v2875
        %v3196 = vpack.c.bf16 %v2876, %v2876
        %v3197 = vpack.c.bf16 %v2877, %v2877
        %v3198 = vpack.c.bf16 %v3166, %v3166
        %v3199 = vpack.c.bf16 %v3167, %v3167
        %v3200 = vpack.c.bf16 %v3168, %v3168
        %v3201 = vpack.c.bf16 %v3169, %v3169
        %v3202 = vpack.c.bf16 %v3170, %v3170
        %v3203 = vpack.c.bf16 %v3171, %v3171
        %v3204 = vpack.c.bf16 %v3172, %v3172
        %v3205 = vpack.c.bf16 %v3173, %v3173
        %v3206 = vpack.c.bf16 %v3174, %v3174
        %v3207 = vpack.c.bf16 %v3175, %v3175
        %v3208 = vpack.c.bf16 %v3176, %v3176
        %v3209 = vpack.c.bf16 %v3177, %v3177
        %v3210 = vpack.c.bf16 %v3178, %v3178
        %v3211 = vpack.c.bf16 %v3179, %v3179
        %v3212 = vpack.c.bf16 %v3180, %v3180
        %v3213 = vpack.c.bf16 %v3181, %v3181
        %v3216 = vunpack.c.l.b16 %v3182
        %v3217 = vunpack.c.l.b16 %v3183
        %v3218 = vpack.c.b16 %v3217, %v3216
        %3219 = vrot.lane.b32.xlu0 %v3218, 112
        %v3220 = vpop.permute.xlu0 %3219
        %v3223 = vunpack.c.l.b16 %v3198
        %v3224 = vunpack.c.l.b16 %v3199
        %v3225 = vpack.c.b16 %v3224, %v3223
        %3226 = vrot.lane.b32.xlu0 %v3225, 80
        %v3227 = vpop.permute.xlu0 %3226
        %v3229 = vsel %vm1237, %v3220, 0
        %v3232 = vsel %vm1237, %v3227, 0
        %3234 = vmatpush.bf16.xpose.msra.mxu0 0
        %3235 = vmatpush.bf16.xpose.msra.mxu0 0
        %3236 = vmatpush.bf16.xpose.msra.mxu0 0
        %3237 = vmatpush.bf16.xpose.msra.mxu0 0
        %3238 = vmatpush.bf16.xpose.msra.mxu0 0
        %3239 = vmatpush.bf16.xpose.msra.mxu0 0
        %3240 = vmatpush.bf16.xpose.msra.mxu0 0
        %3241 = vmatpush.bf16.xpose.msra.mxu0 %v3232
        %3242 = vmatmul.bf16.gmra.mxu0 %v3229
        %v3243 = vpop.f32.mrf.mxu0
        %v3244 = vadd.f32 0.0, %v3243
        %v3245 = vpop.f32.mrf.mxu0
        %v3246 = vadd.f32 0.0, %v3245
        %3247 = vdwg.mxu0
        %v3250 = vunpack.c.l.b16 %v3184
        %v3251 = vunpack.c.l.b16 %v3185
        %v3252 = vpack.c.b16 %v3251, %v3250
        %3253 = vrot.lane.b32.xlu0 %v3252, 112
        %v3254 = vpop.permute.xlu0 %3253
        %v3257 = vunpack.c.l.b16 %v3200
        %v3258 = vunpack.c.l.b16 %v3201
        %v3259 = vpack.c.b16 %v3258, %v3257
        %3260 = vrot.lane.b32.xlu0 %v3259, 80
        %v3261 = vpop.permute.xlu0 %3260
        %v3263 = vsel %vm1237, %v3254, 0
        %v3266 = vsel %vm1237, %v3261, 0
        %3268 = vmatpush.bf16.xpose.msra.mxu0 0
        %3269 = vmatpush.bf16.xpose.msra.mxu0 0
        %3270 = vmatpush.bf16.xpose.msra.mxu0 0
        %3271 = vmatpush.bf16.xpose.msra.mxu0 0
        %3272 = vmatpush.bf16.xpose.msra.mxu0 0
        %3273 = vmatpush.bf16.xpose.msra.mxu0 0
        %3274 = vmatpush.bf16.xpose.msra.mxu0 0
        %3275 = vmatpush.bf16.xpose.msra.mxu0 %v3266
        %3276 = vmatmul.bf16.gmra.mxu0 %v3263
        %v3277 = vpop.f32.mrf.mxu0
        %v3278 = vadd.f32 0.0, %v3277
        %v3279 = vpop.f32.mrf.mxu0
        %v3280 = vadd.f32 0.0, %v3279
        %3281 = vdwg.mxu0
        %v3284 = vunpack.c.l.b16 %v3186
        %v3285 = vunpack.c.l.b16 %v3187
        %v3286 = vpack.c.b16 %v3285, %v3284
        %3287 = vrot.lane.b32.xlu0 %v3286, 112
        %v3288 = vpop.permute.xlu0 %3287
        %v3291 = vunpack.c.l.b16 %v3202
        %v3292 = vunpack.c.l.b16 %v3203
        %v3293 = vpack.c.b16 %v3292, %v3291
        %3294 = vrot.lane.b32.xlu0 %v3293, 80
        %v3295 = vpop.permute.xlu0 %3294
        %v3297 = vsel %vm1237, %v3288, 0
        %v3300 = vsel %vm1237, %v3295, 0
        %3302 = vmatpush.bf16.xpose.msra.mxu0 0
        %3303 = vmatpush.bf16.xpose.msra.mxu0 0
        %3304 = vmatpush.bf16.xpose.msra.mxu0 0
        %3305 = vmatpush.bf16.xpose.msra.mxu0 0
        %3306 = vmatpush.bf16.xpose.msra.mxu0 0
        %3307 = vmatpush.bf16.xpose.msra.mxu0 0
        %3308 = vmatpush.bf16.xpose.msra.mxu0 0
        %3309 = vmatpush.bf16.xpose.msra.mxu0 %v3300
        %3310 = vmatmul.bf16.gmra.mxu0 %v3297
        %v3311 = vpop.f32.mrf.mxu0
        %v3312 = vadd.f32 0.0, %v3311
        %v3313 = vpop.f32.mrf.mxu0
        %v3314 = vadd.f32 0.0, %v3313
        %3315 = vdwg.mxu0
        %v3318 = vunpack.c.l.b16 %v3188
        %v3319 = vunpack.c.l.b16 %v3189
        %v3320 = vpack.c.b16 %v3319, %v3318
        %3321 = vrot.lane.b32.xlu0 %v3320, 112
        %v3322 = vpop.permute.xlu0 %3321
        %v3325 = vunpack.c.l.b16 %v3204
        %v3326 = vunpack.c.l.b16 %v3205
        %v3327 = vpack.c.b16 %v3326, %v3325
        %3328 = vrot.lane.b32.xlu0 %v3327, 80
        %v3329 = vpop.permute.xlu0 %3328
        %v3331 = vsel %vm1237, %v3322, 0
        %v3334 = vsel %vm1237, %v3329, 0
        %3336 = vmatpush.bf16.xpose.msra.mxu0 0
        %3337 = vmatpush.bf16.xpose.msra.mxu0 0
        %3338 = vmatpush.bf16.xpose.msra.mxu0 0
        %3339 = vmatpush.bf16.xpose.msra.mxu0 0
        %3340 = vmatpush.bf16.xpose.msra.mxu0 0
        %3341 = vmatpush.bf16.xpose.msra.mxu0 0
        %3342 = vmatpush.bf16.xpose.msra.mxu0 0
        %3343 = vmatpush.bf16.xpose.msra.mxu0 %v3334
        %3344 = vmatmul.bf16.gmra.mxu0 %v3331
        %v3345 = vpop.f32.mrf.mxu0
        %v3346 = vadd.f32 0.0, %v3345
        %v3347 = vpop.f32.mrf.mxu0
        %v3348 = vadd.f32 0.0, %v3347
        %3349 = vdwg.mxu0
        %v3352 = vunpack.c.l.b16 %v3190
        %v3353 = vunpack.c.l.b16 %v3191
        %v3354 = vpack.c.b16 %v3353, %v3352
        %3355 = vrot.lane.b32.xlu0 %v3354, 112
        %v3356 = vpop.permute.xlu0 %3355
        %v3359 = vunpack.c.l.b16 %v3206
        %v3360 = vunpack.c.l.b16 %v3207
        %v3361 = vpack.c.b16 %v3360, %v3359
        %3362 = vrot.lane.b32.xlu0 %v3361, 80
        %v3363 = vpop.permute.xlu0 %3362
        %v3365 = vsel %vm1237, %v3356, 0
        %v3368 = vsel %vm1237, %v3363, 0
        %3370 = vmatpush.bf16.xpose.msra.mxu0 0
        %3371 = vmatpush.bf16.xpose.msra.mxu0 0
        %3372 = vmatpush.bf16.xpose.msra.mxu0 0
        %3373 = vmatpush.bf16.xpose.msra.mxu0 0
        %3374 = vmatpush.bf16.xpose.msra.mxu0 0
        %3375 = vmatpush.bf16.xpose.msra.mxu0 0
        %3376 = vmatpush.bf16.xpose.msra.mxu0 0
        %3377 = vmatpush.bf16.xpose.msra.mxu0 %v3368
        %3378 = vmatmul.bf16.gmra.mxu0 %v3365
        %v3379 = vpop.f32.mrf.mxu0
        %v3380 = vadd.f32 0.0, %v3379
        %v3381 = vpop.f32.mrf.mxu0
        %v3382 = vadd.f32 0.0, %v3381
        %3383 = vdwg.mxu0
        %v3386 = vunpack.c.l.b16 %v3192
        %v3387 = vunpack.c.l.b16 %v3193
        %v3388 = vpack.c.b16 %v3387, %v3386
        %3389 = vrot.lane.b32.xlu0 %v3388, 112
        %v3390 = vpop.permute.xlu0 %3389
        %v3393 = vunpack.c.l.b16 %v3208
        %v3394 = vunpack.c.l.b16 %v3209
        %v3395 = vpack.c.b16 %v3394, %v3393
        %3396 = vrot.lane.b32.xlu0 %v3395, 80
        %v3397 = vpop.permute.xlu0 %3396
        %v3399 = vsel %vm1237, %v3390, 0
        %v3402 = vsel %vm1237, %v3397, 0
        %3404 = vmatpush.bf16.xpose.msra.mxu0 0
        %3405 = vmatpush.bf16.xpose.msra.mxu0 0
        %3406 = vmatpush.bf16.xpose.msra.mxu0 0
        %3407 = vmatpush.bf16.xpose.msra.mxu0 0
        %3408 = vmatpush.bf16.xpose.msra.mxu0 0
        %3409 = vmatpush.bf16.xpose.msra.mxu0 0
        %3410 = vmatpush.bf16.xpose.msra.mxu0 0
        %3411 = vmatpush.bf16.xpose.msra.mxu0 %v3402
        %3412 = vmatmul.bf16.gmra.mxu0 %v3399
        %v3413 = vpop.f32.mrf.mxu0
        %v3414 = vadd.f32 0.0, %v3413
        %v3415 = vpop.f32.mrf.mxu0
        %v3416 = vadd.f32 0.0, %v3415
        %3417 = vdwg.mxu0
        %v3420 = vunpack.c.l.b16 %v3194
        %v3421 = vunpack.c.l.b16 %v3195
        %v3422 = vpack.c.b16 %v3421, %v3420
        %3423 = vrot.lane.b32.xlu0 %v3422, 112
        %v3424 = vpop.permute.xlu0 %3423
        %v3427 = vunpack.c.l.b16 %v3210
        %v3428 = vunpack.c.l.b16 %v3211
        %v3429 = vpack.c.b16 %v3428, %v3427
        %3430 = vrot.lane.b32.xlu0 %v3429, 80
        %v3431 = vpop.permute.xlu0 %3430
        %v3433 = vsel %vm1237, %v3424, 0
        %v3436 = vsel %vm1237, %v3431, 0
        %3438 = vmatpush.bf16.xpose.msra.mxu0 0
        %3439 = vmatpush.bf16.xpose.msra.mxu0 0
        %3440 = vmatpush.bf16.xpose.msra.mxu0 0
        %3441 = vmatpush.bf16.xpose.msra.mxu0 0
        %3442 = vmatpush.bf16.xpose.msra.mxu0 0
        %3443 = vmatpush.bf16.xpose.msra.mxu0 0
        %3444 = vmatpush.bf16.xpose.msra.mxu0 0
        %3445 = vmatpush.bf16.xpose.msra.mxu0 %v3436
        %3446 = vmatmul.bf16.gmra.mxu0 %v3433
        %v3447 = vpop.f32.mrf.mxu0
        %v3448 = vadd.f32 0.0, %v3447
        %v3449 = vpop.f32.mrf.mxu0
        %v3450 = vadd.f32 0.0, %v3449
        %3451 = vdwg.mxu0
        %v3454 = vunpack.c.l.b16 %v3196
        %v3455 = vunpack.c.l.b16 %v3197
        %v3456 = vpack.c.b16 %v3455, %v3454
        %3457 = vrot.lane.b32.xlu0 %v3456, 112
        %v3458 = vpop.permute.xlu0 %3457
        %v3461 = vunpack.c.l.b16 %v3212
        %v3462 = vunpack.c.l.b16 %v3213
        %v3463 = vpack.c.b16 %v3462, %v3461
        %3464 = vrot.lane.b32.xlu0 %v3463, 80
        %v3465 = vpop.permute.xlu0 %3464
        %v3467 = vsel %vm1237, %v3458, 0
        %v3470 = vsel %vm1237, %v3465, 0
        %3472 = vmatpush.bf16.xpose.msra.mxu0 0
        %3473 = vmatpush.bf16.xpose.msra.mxu0 0
        %3474 = vmatpush.bf16.xpose.msra.mxu0 0
        %3475 = vmatpush.bf16.xpose.msra.mxu0 0
        %3476 = vmatpush.bf16.xpose.msra.mxu0 0
        %3477 = vmatpush.bf16.xpose.msra.mxu0 0
        %3478 = vmatpush.bf16.xpose.msra.mxu0 0
        %3479 = vmatpush.bf16.xpose.msra.mxu0 %v3470
        %3480 = vmatmul.bf16.gmra.mxu0 %v3467
        %v3481 = vpop.f32.mrf.mxu0
        %v3482 = vadd.f32 0.0, %v3481
        %v3483 = vpop.f32.mrf.mxu0
        %v3484 = vadd.f32 0.0, %v3483
        %3485 = vdwg.mxu0
        %v3486 = vsel %vm1237, %v3244, -inf
        %3487 = vmax.xlane.f32.xlu0 %v3486
        %v3488 = vpop.xlane.xlu0 %3487
        %v3489 = vsel %vm1237, %v3246, -inf
        %3490 = vmax.xlane.f32.xlu0 %v3489
        %v3491 = vpop.xlane.xlu0 %3490
        %v3492 = vsel %vm1237, %v3278, -inf
        %3493 = vmax.xlane.f32.xlu0 %v3492
        %v3494 = vpop.xlane.xlu0 %3493
        %v3495 = vsel %vm1237, %v3280, -inf
        %3496 = vmax.xlane.f32.xlu0 %v3495
        %v3497 = vpop.xlane.xlu0 %3496
        %v3498 = vsel %vm1237, %v3312, -inf
        %3499 = vmax.xlane.f32.xlu0 %v3498
        %v3500 = vpop.xlane.xlu0 %3499
        %v3501 = vsel %vm1237, %v3314, -inf
        %3502 = vmax.xlane.f32.xlu0 %v3501
        %v3503 = vpop.xlane.xlu0 %3502
        %v3504 = vsel %vm1237, %v3346, -inf
        %3505 = vmax.xlane.f32.xlu0 %v3504
        %v3506 = vpop.xlane.xlu0 %3505
        %v3507 = vsel %vm1237, %v3348, -inf
        %3508 = vmax.xlane.f32.xlu0 %v3507
        %v3509 = vpop.xlane.xlu0 %3508
        %v3510 = vsel %vm1237, %v3380, -inf
        %3511 = vmax.xlane.f32.xlu0 %v3510
        %v3512 = vpop.xlane.xlu0 %3511
        %v3513 = vsel %vm1237, %v3382, -inf
        %3514 = vmax.xlane.f32.xlu0 %v3513
        %v3515 = vpop.xlane.xlu0 %3514
        %v3516 = vsel %vm1237, %v3414, -inf
        %3517 = vmax.xlane.f32.xlu0 %v3516
        %v3518 = vpop.xlane.xlu0 %3517
        %v3519 = vsel %vm1237, %v3416, -inf
        %3520 = vmax.xlane.f32.xlu0 %v3519
        %v3521 = vpop.xlane.xlu0 %3520
        %v3522 = vsel %vm1237, %v3448, -inf
        %3523 = vmax.xlane.f32.xlu0 %v3522
        %v3524 = vpop.xlane.xlu0 %3523
        %v3525 = vsel %vm1237, %v3450, -inf
        %3526 = vmax.xlane.f32.xlu0 %v3525
        %v3527 = vpop.xlane.xlu0 %3526
        %v3528 = vsel %vm1237, %v3482, -inf
        %3529 = vmax.xlane.f32.xlu0 %v3528
        %v3530 = vpop.xlane.xlu0 %3529
        %v3531 = vsel %vm1237, %v3484, -inf
        %3532 = vmax.xlane.f32.xlu0 %v3531
        %v3533 = vpop.xlane.xlu0 %3532
        %v3534 = vsub.f32 %v3244, %v3488
        %v3535 = vsub.f32 %v3246, %v3491
        %v3536 = vsub.f32 %v3278, %v3494
        %v3537 = vsub.f32 %v3280, %v3497
        %v3538 = vsub.f32 %v3312, %v3500
        %v3539 = vsub.f32 %v3314, %v3503
        %v3540 = vsub.f32 %v3346, %v3506
        %v3541 = vsub.f32 %v3348, %v3509
        %v3542 = vsub.f32 %v3380, %v3512
        %v3543 = vsub.f32 %v3382, %v3515
        %v3544 = vsub.f32 %v3414, %v3518
        %v3545 = vsub.f32 %v3416, %v3521
        %v3546 = vsub.f32 %v3448, %v3524
        %v3547 = vsub.f32 %v3450, %v3527
        %v3548 = vsub.f32 %v3482, %v3530
        %v3549 = vsub.f32 %v3484, %v3533
        %v3550 = vmul.f32 %v3534, 1.442695
        %v3551 = vpow.pop %v3550
        %v3552 = vmul.f32 %v3535, 1.442695
        %v3553 = vpow.pop %v3552
        %v3554 = vmul.f32 %v3536, 1.442695
        %v3555 = vpow.pop %v3554
        %v3556 = vmul.f32 %v3537, 1.442695
        %v3557 = vpow.pop %v3556
        %v3558 = vmul.f32 %v3538, 1.442695
        %v3559 = vpow.pop %v3558
        %v3560 = vmul.f32 %v3539, 1.442695
        %v3561 = vpow.pop %v3560
        %v3562 = vmul.f32 %v3540, 1.442695
        %v3563 = vpow.pop %v3562
        %v3564 = vmul.f32 %v3541, 1.442695
        %v3565 = vpow.pop %v3564
        %v3566 = vmul.f32 %v3542, 1.442695
        %v3567 = vpow.pop %v3566
        %v3568 = vmul.f32 %v3543, 1.442695
        %v3569 = vpow.pop %v3568
        %v3570 = vmul.f32 %v3544, 1.442695
        %v3571 = vpow.pop %v3570
        %v3572 = vmul.f32 %v3545, 1.442695
        %v3573 = vpow.pop %v3572
        %v3574 = vmul.f32 %v3546, 1.442695
        %v3575 = vpow.pop %v3574
        %v3576 = vmul.f32 %v3547, 1.442695
        %v3577 = vpow.pop %v3576
        %v3578 = vmul.f32 %v3548, 1.442695
        %v3579 = vpow.pop %v3578
        %v3580 = vmul.f32 %v3549, 1.442695
        %v3581 = vpow.pop %v3580
        %v3582 = vsel %vm1237, %v3551, 0.0
        %3583 = vadd.xlane.f32.xlu0 %v3582
        %v3584 = vpop.xlane.xlu0 %3583
        %v3585 = vsel %vm1237, %v3553, 0.0
        %3586 = vadd.xlane.f32.xlu0 %v3585
        %v3587 = vpop.xlane.xlu0 %3586
        %v3588 = vsel %vm1237, %v3555, 0.0
        %3589 = vadd.xlane.f32.xlu0 %v3588
        %v3590 = vpop.xlane.xlu0 %3589
        %v3591 = vsel %vm1237, %v3557, 0.0
        %3592 = vadd.xlane.f32.xlu0 %v3591
        %v3593 = vpop.xlane.xlu0 %3592
        %v3594 = vsel %vm1237, %v3559, 0.0
        %3595 = vadd.xlane.f32.xlu0 %v3594
        %v3596 = vpop.xlane.xlu0 %3595
        %v3597 = vsel %vm1237, %v3561, 0.0
        %3598 = vadd.xlane.f32.xlu0 %v3597
        %v3599 = vpop.xlane.xlu0 %3598
        %v3600 = vsel %vm1237, %v3563, 0.0
        %3601 = vadd.xlane.f32.xlu0 %v3600
        %v3602 = vpop.xlane.xlu0 %3601
        %v3603 = vsel %vm1237, %v3565, 0.0
        %3604 = vadd.xlane.f32.xlu0 %v3603
        %v3605 = vpop.xlane.xlu0 %3604
        %v3606 = vsel %vm1237, %v3567, 0.0
        %3607 = vadd.xlane.f32.xlu0 %v3606
        %v3608 = vpop.xlane.xlu0 %3607
        %v3609 = vsel %vm1237, %v3569, 0.0
        %3610 = vadd.xlane.f32.xlu0 %v3609
        %v3611 = vpop.xlane.xlu0 %3610
        %v3612 = vsel %vm1237, %v3571, 0.0
        %3613 = vadd.xlane.f32.xlu0 %v3612
        %v3614 = vpop.xlane.xlu0 %3613
        %v3615 = vsel %vm1237, %v3573, 0.0
        %3616 = vadd.xlane.f32.xlu0 %v3615
        %v3617 = vpop.xlane.xlu0 %3616
        %v3618 = vsel %vm1237, %v3575, 0.0
        %3619 = vadd.xlane.f32.xlu0 %v3618
        %v3620 = vpop.xlane.xlu0 %3619
        %v3621 = vsel %vm1237, %v3577, 0.0
        %3622 = vadd.xlane.f32.xlu0 %v3621
        %v3623 = vpop.xlane.xlu0 %3622
        %v3624 = vsel %vm1237, %v3579, 0.0
        %3625 = vadd.xlane.f32.xlu0 %v3624
        %v3626 = vpop.xlane.xlu0 %3625
        %v3627 = vsel %vm1237, %v3581, 0.0
        %3628 = vadd.xlane.f32.xlu0 %v3627
        %v3629 = vpop.xlane.xlu0 %3628
        %v3630 = vrcp.pop %v3584
        %v3631 = vrcp.pop %v3587
        %v3632 = vrcp.pop %v3590
        %v3633 = vrcp.pop %v3593
        %v3634 = vrcp.pop %v3596
        %v3635 = vrcp.pop %v3599
        %v3636 = vrcp.pop %v3602
        %v3637 = vrcp.pop %v3605
        %v3638 = vrcp.pop %v3608
        %v3639 = vrcp.pop %v3611
        %v3640 = vrcp.pop %v3614
        %v3641 = vrcp.pop %v3617
        %v3642 = vrcp.pop %v3620
        %v3643 = vrcp.pop %v3623
        %v3644 = vrcp.pop %v3626
        %v3645 = vrcp.pop %v3629
        %v3646 = vmul.f32 %v3551, %v3630
        %v3647 = vmul.f32 %v3553, %v3631
        %v3648 = vmul.f32 %v3555, %v3632
        %v3649 = vmul.f32 %v3557, %v3633
        %v3650 = vmul.f32 %v3559, %v3634
        %v3651 = vmul.f32 %v3561, %v3635
        %v3652 = vmul.f32 %v3563, %v3636
        %v3653 = vmul.f32 %v3565, %v3637
        %v3654 = vmul.f32 %v3567, %v3638
        %v3655 = vmul.f32 %v3569, %v3639
        %v3656 = vmul.f32 %v3571, %v3640
        %v3657 = vmul.f32 %v3573, %v3641
        %v3658 = vmul.f32 %v3575, %v3642
        %v3659 = vmul.f32 %v3577, %v3643
        %v3660 = vmul.f32 %v3579, %v3644
        %v3661 = vmul.f32 %v3581, %v3645
        %v3662 = vpack.c.bf16 %v3646, %v3646
        %v3663 = vpack.c.bf16 %v3647, %v3647
        %v3664 = vpack.c.bf16 %v3648, %v3648
        %v3665 = vpack.c.bf16 %v3649, %v3649
        %v3666 = vpack.c.bf16 %v3650, %v3650
        %v3667 = vpack.c.bf16 %v3651, %v3651
        %v3668 = vpack.c.bf16 %v3652, %v3652
        %v3669 = vpack.c.bf16 %v3653, %v3653
        %v3670 = vpack.c.bf16 %v3654, %v3654
        %v3671 = vpack.c.bf16 %v3655, %v3655
        %v3672 = vpack.c.bf16 %v3656, %v3656
        %v3673 = vpack.c.bf16 %v3657, %v3657
        %v3674 = vpack.c.bf16 %v3658, %v3658
        %v3675 = vpack.c.bf16 %v3659, %v3659
        %v3676 = vpack.c.bf16 %v3660, %v3660
        %v3677 = vpack.c.bf16 %v3661, %v3661
        %v3680 = vunpack.c.l.b16 %v3662
        %v3681 = vunpack.c.l.b16 %v3663
        %v3682 = vpack.c.b16 %v3681, %v3680
        %3683 = vrot.lane.b32.xlu0 %v2327, 48
        %v3684 = vpop.permute.xlu0 %3683
        %v3687 = vsel %vm1237, %v3682, 0
        %3689 = vmatpush.bf16.msra.mxu0 0
        %3690 = vmatpush.bf16.msra.mxu0 0
        %3691 = vmatpush.bf16.msra.mxu0 0
        %3692 = vmatpush.bf16.msra.mxu0 0
        %3693 = vmatpush.bf16.msra.mxu0 0
        %3694 = vmatpush.bf16.msra.mxu0 0
        %3695 = vmatpush.bf16.msra.mxu0 0
        %3696 = vmatpush.bf16.msra.mxu0 %v3684
        %3697 = vmatmul.bf16.gmra.mxu0 %v3687
        %v3698 = vpop.f32.mrf.mxu0
        %v3699 = vadd.f32 0.0, %v3698
        %v3700 = vpop.f32.mrf.mxu0
        %v3701 = vadd.f32 0.0, %v3700
        %3702 = vdwg.mxu0
        %v3705 = vunpack.c.l.b16 %v3664
        %v3706 = vunpack.c.l.b16 %v3665
        %v3707 = vpack.c.b16 %v3706, %v3705
        %3708 = vrot.lane.b32.xlu0 %v2357, 48
        %v3709 = vpop.permute.xlu0 %3708
        %v3712 = vsel %vm1237, %v3707, 0
        %3714 = vmatpush.bf16.msra.mxu0 0
        %3715 = vmatpush.bf16.msra.mxu0 0
        %3716 = vmatpush.bf16.msra.mxu0 0
        %3717 = vmatpush.bf16.msra.mxu0 0
        %3718 = vmatpush.bf16.msra.mxu0 0
        %3719 = vmatpush.bf16.msra.mxu0 0
        %3720 = vmatpush.bf16.msra.mxu0 0
        %3721 = vmatpush.bf16.msra.mxu0 %v3709
        %3722 = vmatmul.bf16.gmra.mxu0 %v3712
        %v3723 = vpop.f32.mrf.mxu0
        %v3724 = vadd.f32 0.0, %v3723
        %v3725 = vpop.f32.mrf.mxu0
        %v3726 = vadd.f32 0.0, %v3725
        %3727 = vdwg.mxu0
        %v3730 = vunpack.c.l.b16 %v3666
        %v3731 = vunpack.c.l.b16 %v3667
        %v3732 = vpack.c.b16 %v3731, %v3730
        %3733 = vrot.lane.b32.xlu0 %v2387, 48
        %v3734 = vpop.permute.xlu0 %3733
        %v3737 = vsel %vm1237, %v3732, 0
        %3739 = vmatpush.bf16.msra.mxu0 0
        %3740 = vmatpush.bf16.msra.mxu0 0
        %3741 = vmatpush.bf16.msra.mxu0 0
        %3742 = vmatpush.bf16.msra.mxu0 0
        %3743 = vmatpush.bf16.msra.mxu0 0
        %3744 = vmatpush.bf16.msra.mxu0 0
        %3745 = vmatpush.bf16.msra.mxu0 0
        %3746 = vmatpush.bf16.msra.mxu0 %v3734
        %3747 = vmatmul.bf16.gmra.mxu0 %v3737
        %v3748 = vpop.f32.mrf.mxu0
        %v3749 = vadd.f32 0.0, %v3748
        %v3750 = vpop.f32.mrf.mxu0
        %v3751 = vadd.f32 0.0, %v3750
        %3752 = vdwg.mxu0
        %v3755 = vunpack.c.l.b16 %v3668
        %v3756 = vunpack.c.l.b16 %v3669
        %v3757 = vpack.c.b16 %v3756, %v3755
        %3758 = vrot.lane.b32.xlu0 %v2417, 48
        %v3759 = vpop.permute.xlu0 %3758
        %v3762 = vsel %vm1237, %v3757, 0
        %3764 = vmatpush.bf16.msra.mxu0 0
        %3765 = vmatpush.bf16.msra.mxu0 0
        %3766 = vmatpush.bf16.msra.mxu0 0
        %3767 = vmatpush.bf16.msra.mxu0 0
        %3768 = vmatpush.bf16.msra.mxu0 0
        %3769 = vmatpush.bf16.msra.mxu0 0
        %3770 = vmatpush.bf16.msra.mxu0 0
        %3771 = vmatpush.bf16.msra.mxu0 %v3759
        %3772 = vmatmul.bf16.gmra.mxu0 %v3762
        %v3773 = vpop.f32.mrf.mxu0
        %v3774 = vadd.f32 0.0, %v3773
        %v3775 = vpop.f32.mrf.mxu0
        %v3776 = vadd.f32 0.0, %v3775
        %3777 = vdwg.mxu0
        %v3780 = vunpack.c.l.b16 %v3670
        %v3781 = vunpack.c.l.b16 %v3671
        %v3782 = vpack.c.b16 %v3781, %v3780
        %3783 = vrot.lane.b32.xlu0 %v2447, 48
        %v3784 = vpop.permute.xlu0 %3783
        %v3787 = vsel %vm1237, %v3782, 0
        %3789 = vmatpush.bf16.msra.mxu0 0
        %3790 = vmatpush.bf16.msra.mxu0 0
        %3791 = vmatpush.bf16.msra.mxu0 0
        %3792 = vmatpush.bf16.msra.mxu0 0
        %3793 = vmatpush.bf16.msra.mxu0 0
        %3794 = vmatpush.bf16.msra.mxu0 0
        %3795 = vmatpush.bf16.msra.mxu0 0
        %3796 = vmatpush.bf16.msra.mxu0 %v3784
        %3797 = vmatmul.bf16.gmra.mxu0 %v3787
        %v3798 = vpop.f32.mrf.mxu0
        %v3799 = vadd.f32 0.0, %v3798
        %v3800 = vpop.f32.mrf.mxu0
        %v3801 = vadd.f32 0.0, %v3800
        %3802 = vdwg.mxu0
        %v3805 = vunpack.c.l.b16 %v3672
        %v3806 = vunpack.c.l.b16 %v3673
        %v3807 = vpack.c.b16 %v3806, %v3805
        %3808 = vrot.lane.b32.xlu0 %v2477, 48
        %v3809 = vpop.permute.xlu0 %3808
        %v3812 = vsel %vm1237, %v3807, 0
        %3814 = vmatpush.bf16.msra.mxu0 0
        %3815 = vmatpush.bf16.msra.mxu0 0
        %3816 = vmatpush.bf16.msra.mxu0 0
        %3817 = vmatpush.bf16.msra.mxu0 0
        %3818 = vmatpush.bf16.msra.mxu0 0
        %3819 = vmatpush.bf16.msra.mxu0 0
        %3820 = vmatpush.bf16.msra.mxu0 0
        %3821 = vmatpush.bf16.msra.mxu0 %v3809
        %3822 = vmatmul.bf16.gmra.mxu0 %v3812
        %v3823 = vpop.f32.mrf.mxu0
        %v3824 = vadd.f32 0.0, %v3823
        %v3825 = vpop.f32.mrf.mxu0
        %v3826 = vadd.f32 0.0, %v3825
        %3827 = vdwg.mxu0
        %v3830 = vunpack.c.l.b16 %v3674
        %v3831 = vunpack.c.l.b16 %v3675
        %v3832 = vpack.c.b16 %v3831, %v3830
        %3833 = vrot.lane.b32.xlu0 %v2507, 48
        %v3834 = vpop.permute.xlu0 %3833
        %v3837 = vsel %vm1237, %v3832, 0
        %3839 = vmatpush.bf16.msra.mxu0 0
        %3840 = vmatpush.bf16.msra.mxu0 0
        %3841 = vmatpush.bf16.msra.mxu0 0
        %3842 = vmatpush.bf16.msra.mxu0 0
        %3843 = vmatpush.bf16.msra.mxu0 0
        %3844 = vmatpush.bf16.msra.mxu0 0
        %3845 = vmatpush.bf16.msra.mxu0 0
        %3846 = vmatpush.bf16.msra.mxu0 %v3834
        %3847 = vmatmul.bf16.gmra.mxu0 %v3837
        %v3848 = vpop.f32.mrf.mxu0
        %v3849 = vadd.f32 0.0, %v3848
        %v3850 = vpop.f32.mrf.mxu0
        %v3851 = vadd.f32 0.0, %v3850
        %3852 = vdwg.mxu0
        %v3855 = vunpack.c.l.b16 %v3676
        %v3856 = vunpack.c.l.b16 %v3677
        %v3857 = vpack.c.b16 %v3856, %v3855
        %3858 = vrot.lane.b32.xlu0 %v2537, 48
        %v3859 = vpop.permute.xlu0 %3858
        %v3862 = vsel %vm1237, %v3857, 0
        %3864 = vmatpush.bf16.msra.mxu0 0
        %3865 = vmatpush.bf16.msra.mxu0 0
        %3866 = vmatpush.bf16.msra.mxu0 0
        %3867 = vmatpush.bf16.msra.mxu0 0
        %3868 = vmatpush.bf16.msra.mxu0 0
        %3869 = vmatpush.bf16.msra.mxu0 0
        %3870 = vmatpush.bf16.msra.mxu0 0
        %3871 = vmatpush.bf16.msra.mxu0 %v3859
        %3872 = vmatmul.bf16.gmra.mxu0 %v3862
        %v3873 = vpop.f32.mrf.mxu0
        %v3874 = vadd.f32 0.0, %v3873
        %v3875 = vpop.f32.mrf.mxu0
        %v3876 = vadd.f32 0.0, %v3875
        %3877 = vdwg.mxu0
        %v3878 = vpack.c.bf16 %v3699, %v3699
        %v3879 = vpack.c.bf16 %v3701, %v3701
        %v3880 = vpack.c.bf16 %v3724, %v3724
        %v3881 = vpack.c.bf16 %v3726, %v3726
        %v3882 = vpack.c.bf16 %v3749, %v3749
        %v3883 = vpack.c.bf16 %v3751, %v3751
        %v3884 = vpack.c.bf16 %v3774, %v3774
        %v3885 = vpack.c.bf16 %v3776, %v3776
        %v3886 = vpack.c.bf16 %v3799, %v3799
        %v3887 = vpack.c.bf16 %v3801, %v3801
        %v3888 = vpack.c.bf16 %v3824, %v3824
        %v3889 = vpack.c.bf16 %v3826, %v3826
        %v3890 = vpack.c.bf16 %v3849, %v3849
        %v3891 = vpack.c.bf16 %v3851, %v3851
        %v3892 = vpack.c.bf16 %v3874, %v3874
        %v3893 = vpack.c.bf16 %v3876, %v3876
        %v3910 = vunpack.c.l.b16 %v2558
        %v3911 = vunpack.c.l.b16 %v2559
        %v3912 = vunpack.c.l.b16 %v2560
        %v3913 = vunpack.c.l.b16 %v2561
        %v3914 = vunpack.c.l.b16 %v2562
        %v3915 = vunpack.c.l.b16 %v2563
        %v3916 = vunpack.c.l.b16 %v2564
        %v3917 = vunpack.c.l.b16 %v2565
        %v3918 = vunpack.c.l.b16 %v2566
        %v3919 = vunpack.c.l.b16 %v2567
        %v3920 = vunpack.c.l.b16 %v2568
        %v3921 = vunpack.c.l.b16 %v2569
        %v3922 = vunpack.c.l.b16 %v2570
        %v3923 = vunpack.c.l.b16 %v2571
        %v3924 = vunpack.c.l.b16 %v2572
        %v3925 = vunpack.c.l.b16 %v2573
        %v3926 = vpack.c.b16 %v3911, %v3910
        %v3927 = vpack.c.b16 %v3913, %v3912
        %v3928 = vpack.c.b16 %v3915, %v3914
        %v3929 = vpack.c.b16 %v3917, %v3916
        %v3930 = vpack.c.b16 %v3919, %v3918
        %v3931 = vpack.c.b16 %v3921, %v3920
        %v3932 = vpack.c.b16 %v3923, %v3922
        %v3933 = vpack.c.b16 %v3925, %v3924
        %v3950 = vunpack.c.l.b16 %v3878
        %v3951 = vunpack.c.l.b16 %v3879
        %v3952 = vunpack.c.l.b16 %v3880
        %v3953 = vunpack.c.l.b16 %v3881
        %v3954 = vunpack.c.l.b16 %v3882
        %v3955 = vunpack.c.l.b16 %v3883
        %v3956 = vunpack.c.l.b16 %v3884
        %v3957 = vunpack.c.l.b16 %v3885
        %v3958 = vunpack.c.l.b16 %v3886
        %v3959 = vunpack.c.l.b16 %v3887
        %v3960 = vunpack.c.l.b16 %v3888
        %v3961 = vunpack.c.l.b16 %v3889
        %v3962 = vunpack.c.l.b16 %v3890
        %v3963 = vunpack.c.l.b16 %v3891
        %v3964 = vunpack.c.l.b16 %v3892
        %v3965 = vunpack.c.l.b16 %v3893
        %v3966 = vpack.c.b16 %v3951, %v3950
        %v3967 = vpack.c.b16 %v3953, %v3952
        %v3968 = vpack.c.b16 %v3955, %v3954
        %v3969 = vpack.c.b16 %v3957, %v3956
        %v3970 = vpack.c.b16 %v3959, %v3958
        %v3971 = vpack.c.b16 %v3961, %v3960
        %v3972 = vpack.c.b16 %v3963, %v3962
        %v3973 = vpack.c.b16 %v3965, %v3964
        %3974 = vrot.lane.b32.xlu0 %v3966, 16
        %v3975 = vpop.permute.xlu0 %3974
        %3976 = vrot.lane.b32.xlu0 %v3967, 16
        %v3977 = vpop.permute.xlu0 %3976
        %3978 = vrot.lane.b32.xlu0 %v3968, 16
        %v3979 = vpop.permute.xlu0 %3978
        %3980 = vrot.lane.b32.xlu0 %v3969, 16
        %v3981 = vpop.permute.xlu0 %3980
        %3982 = vrot.lane.b32.xlu0 %v3970, 16
        %v3983 = vpop.permute.xlu0 %3982
        %3984 = vrot.lane.b32.xlu0 %v3971, 16
        %v3985 = vpop.permute.xlu0 %3984
        %3986 = vrot.lane.b32.xlu0 %v3972, 16
        %v3987 = vpop.permute.xlu0 %3986
        %3988 = vrot.lane.b32.xlu0 %v3973, 16
        %v3989 = vpop.permute.xlu0 %3988
        %v3992 = vsel %vm1237, %v3926, %v3975
        %v3995 = vsel %vm1237, %v3927, %v3977
        %v3998 = vsel %vm1237, %v3928, %v3979
        %v4001 = vsel %vm1237, %v3929, %v3981
        %v4004 = vsel %vm1237, %v3930, %v3983
        %v4007 = vsel %vm1237, %v3931, %v3985
        %v4010 = vsel %vm1237, %v3932, %v3987
        %v4013 = vsel %vm1237, %v3933, %v3989
        %v4014 = vld [vmem:[%s637] sm:$0xf]
        %v4015 = vld [vmem:[%s637 + $0x4] sm:$0xf]
        %v4016 = vld [vmem:[%s637 + $0x8] sm:$0xf]
        %v4017 = vld [vmem:[%s637 + $0xc] sm:$0xf]
        %v4022 = vunpack.c.l.b16 %v4014
        %v4023 = vunpack.c.l.b16 %v4015
        %v4024 = vunpack.c.l.b16 %v4016
        %v4025 = vunpack.c.l.b16 %v4017
        %v4026 = vpack.c.b16 %v4023, %v4022
        %v4027 = vpack.c.b16 %v4025, %v4024
        %v4030 = vsel %vm1145, %v3992, 0
        %v4032 = vsel %vm1145, %v3995, 0
        %v4034 = vsel %vm1145, %v3998, 0
        %v4036 = vsel %vm1145, %v4001, 0
        %v4038 = vsel %vm1145, %v4004, 0
        %v4040 = vsel %vm1145, %v4007, 0
        %v4042 = vsel %vm1145, %v4010, 0
        %v4044 = vsel %vm1145, %v4013, 0
        %4046 = vmatpush.bf16.msra.mxu0 0
        %4047 = vmatpush.bf16.msra.mxu0 0
        %4048 = vmatpush.bf16.msra.mxu0 0
        %4049 = vmatpush.bf16.msra.mxu0 0
        %4050 = vmatpush.bf16.msra.mxu0 0
        %4051 = vmatpush.bf16.msra.mxu0 0
        %4052 = vmatpush.bf16.msra.mxu0 %v4027
        %4053 = vmatpush.bf16.msra.mxu0 %v4026
        %4054 = vmatmul.bf16.gmra.mxu0 %v4030
        %v4055 = vpop.f32.mrf.mxu0
        %v4056 = vadd.f32 0.0, %v4055
        %v4057 = vpop.f32.mrf.mxu0
        %v4058 = vadd.f32 0.0, %v4057
        %4059 = vmatmul.bf16.gmra.mxu0 %v4032
        %v4060 = vpop.f32.mrf.mxu0
        %v4061 = vadd.f32 0.0, %v4060
        %v4062 = vpop.f32.mrf.mxu0
        %v4063 = vadd.f32 0.0, %v4062
        %4064 = vmatmul.bf16.gmra.mxu0 %v4034
        %v4065 = vpop.f32.mrf.mxu0
        %v4066 = vadd.f32 0.0, %v4065
        %v4067 = vpop.f32.mrf.mxu0
        %v4068 = vadd.f32 0.0, %v4067
        %4069 = vmatmul.bf16.gmra.mxu0 %v4036
        %v4070 = vpop.f32.mrf.mxu0
        %v4071 = vadd.f32 0.0, %v4070
        %v4072 = vpop.f32.mrf.mxu0
        %v4073 = vadd.f32 0.0, %v4072
        %4074 = vmatmul.bf16.gmra.mxu0 %v4038
        %v4075 = vpop.f32.mrf.mxu0
        %v4076 = vadd.f32 0.0, %v4075
        %v4077 = vpop.f32.mrf.mxu0
        %v4078 = vadd.f32 0.0, %v4077
        %4079 = vmatmul.bf16.gmra.mxu0 %v4040
        %v4080 = vpop.f32.mrf.mxu0
        %v4081 = vadd.f32 0.0, %v4080
        %v4082 = vpop.f32.mrf.mxu0
        %v4083 = vadd.f32 0.0, %v4082
        %4084 = vmatmul.bf16.gmra.mxu0 %v4042
        %v4085 = vpop.f32.mrf.mxu0
        %v4086 = vadd.f32 0.0, %v4085
        %v4087 = vpop.f32.mrf.mxu0
        %v4088 = vadd.f32 0.0, %v4087
        %4089 = vmatmul.bf16.gmra.mxu0 %v4044
        %v4090 = vpop.f32.mrf.mxu0
        %v4091 = vadd.f32 0.0, %v4090
        %v4092 = vpop.f32.mrf.mxu0
        %v4093 = vadd.f32 0.0, %v4092
        %4094 = vdwg.mxu0
        %v4095 = vmul.f32 %v4056, %v4056
        %v4096 = vmul.f32 %v4058, %v4058
        %v4097 = vmul.f32 %v4061, %v4061
        %v4098 = vmul.f32 %v4063, %v4063
        %v4099 = vmul.f32 %v4066, %v4066
        %v4100 = vmul.f32 %v4068, %v4068
        %v4101 = vmul.f32 %v4071, %v4071
        %v4102 = vmul.f32 %v4073, %v4073
        %v4103 = vmul.f32 %v4076, %v4076
        %v4104 = vmul.f32 %v4078, %v4078
        %v4105 = vmul.f32 %v4081, %v4081
        %v4106 = vmul.f32 %v4083, %v4083
        %v4107 = vmul.f32 %v4086, %v4086
        %v4108 = vmul.f32 %v4088, %v4088
        %v4109 = vmul.f32 %v4091, %v4091
        %v4110 = vmul.f32 %v4093, %v4093
        %v4111 = vsel %vm1145, %v4095, 0.0
        %4112 = vadd.xlane.f32.xlu0 %v4111
        %v4113 = vpop.xlane.xlu0 %4112
        %v4114 = vsel %vm1145, %v4096, 0.0
        %4115 = vadd.xlane.f32.xlu0 %v4114
        %v4116 = vpop.xlane.xlu0 %4115
        %v4117 = vsel %vm1145, %v4097, 0.0
        %4118 = vadd.xlane.f32.xlu0 %v4117
        %v4119 = vpop.xlane.xlu0 %4118
        %v4120 = vsel %vm1145, %v4098, 0.0
        %4121 = vadd.xlane.f32.xlu0 %v4120
        %v4122 = vpop.xlane.xlu0 %4121
        %v4123 = vsel %vm1145, %v4099, 0.0
        %4124 = vadd.xlane.f32.xlu0 %v4123
        %v4125 = vpop.xlane.xlu0 %4124
        %v4126 = vsel %vm1145, %v4100, 0.0
        %4127 = vadd.xlane.f32.xlu0 %v4126
        %v4128 = vpop.xlane.xlu0 %4127
        %v4129 = vsel %vm1145, %v4101, 0.0
        %4130 = vadd.xlane.f32.xlu0 %v4129
        %v4131 = vpop.xlane.xlu0 %4130
        %v4132 = vsel %vm1145, %v4102, 0.0
        %4133 = vadd.xlane.f32.xlu0 %v4132
        %v4134 = vpop.xlane.xlu0 %4133
        %v4135 = vsel %vm1145, %v4103, 0.0
        %4136 = vadd.xlane.f32.xlu0 %v4135
        %v4137 = vpop.xlane.xlu0 %4136
        %v4138 = vsel %vm1145, %v4104, 0.0
        %4139 = vadd.xlane.f32.xlu0 %v4138
        %v4140 = vpop.xlane.xlu0 %4139
        %v4141 = vsel %vm1145, %v4105, 0.0
        %4142 = vadd.xlane.f32.xlu0 %v4141
        %v4143 = vpop.xlane.xlu0 %4142
        %v4144 = vsel %vm1145, %v4106, 0.0
        %4145 = vadd.xlane.f32.xlu0 %v4144
        %v4146 = vpop.xlane.xlu0 %4145
        %v4147 = vsel %vm1145, %v4107, 0.0
        %4148 = vadd.xlane.f32.xlu0 %v4147
        %v4149 = vpop.xlane.xlu0 %4148
        %v4150 = vsel %vm1145, %v4108, 0.0
        %4151 = vadd.xlane.f32.xlu0 %v4150
        %v4152 = vpop.xlane.xlu0 %4151
        %v4153 = vsel %vm1145, %v4109, 0.0
        %4154 = vadd.xlane.f32.xlu0 %v4153
        %v4155 = vpop.xlane.xlu0 %4154
        %v4156 = vsel %vm1145, %v4110, 0.0
        %4157 = vadd.xlane.f32.xlu0 %v4156
        %v4158 = vpop.xlane.xlu0 %4157
        %v4159 = vmax.f32 %v4113, 1e-24
        %v4160 = vmax.f32 %v4116, 1e-24
        %v4161 = vmax.f32 %v4119, 1e-24
        %v4162 = vmax.f32 %v4122, 1e-24
        %v4163 = vmax.f32 %v4125, 1e-24
        %v4164 = vmax.f32 %v4128, 1e-24
        %v4165 = vmax.f32 %v4131, 1e-24
        %v4166 = vmax.f32 %v4134, 1e-24
        %v4167 = vmax.f32 %v4137, 1e-24
        %v4168 = vmax.f32 %v4140, 1e-24
        %v4169 = vmax.f32 %v4143, 1e-24
        %v4170 = vmax.f32 %v4146, 1e-24
        %v4171 = vmax.f32 %v4149, 1e-24
        %v4172 = vmax.f32 %v4152, 1e-24
        %v4173 = vmax.f32 %v4155, 1e-24
        %v4174 = vmax.f32 %v4158, 1e-24
        %v4175 = vrsqrt.pop %v4159
        %v4176 = vmul.f32 %v4175, %v4159
        %v4177 = vmul.f32 %v4176, %v4175
        %v4178 = vmul.f32 0.5, %v4177
        %v4179 = vsub.f32 1.5, %v4178
        %v4180 = vmul.f32 %v4175, %v4179
        %vm4181 = vweird.f32 %v4159
        %vm4182 = vweird.f32 %v4175
        %vm4183 = vmor %vm4181, %vm4182
        %v4184 = vsel %vm4183, %v4175, %v4180
        %v4185 = vrsqrt.pop %v4160
        %v4186 = vmul.f32 %v4185, %v4160
        %v4187 = vmul.f32 %v4186, %v4185
        %v4188 = vmul.f32 0.5, %v4187
        %v4189 = vsub.f32 1.5, %v4188
        %v4190 = vmul.f32 %v4185, %v4189
        %vm4191 = vweird.f32 %v4160
        %vm4192 = vweird.f32 %v4185
        %vm4193 = vmor %vm4191, %vm4192
        %v4194 = vsel %vm4193, %v4185, %v4190
        %v4195 = vrsqrt.pop %v4161
        %v4196 = vmul.f32 %v4195, %v4161
        %v4197 = vmul.f32 %v4196, %v4195
        %v4198 = vmul.f32 0.5, %v4197
        %v4199 = vsub.f32 1.5, %v4198
        %v4200 = vmul.f32 %v4195, %v4199
        %vm4201 = vweird.f32 %v4161
        %vm4202 = vweird.f32 %v4195
        %vm4203 = vmor %vm4201, %vm4202
        %v4204 = vsel %vm4203, %v4195, %v4200
        %v4205 = vrsqrt.pop %v4162
        %v4206 = vmul.f32 %v4205, %v4162
        %v4207 = vmul.f32 %v4206, %v4205
        %v4208 = vmul.f32 0.5, %v4207
        %v4209 = vsub.f32 1.5, %v4208
        %v4210 = vmul.f32 %v4205, %v4209
        %vm4211 = vweird.f32 %v4162
        %vm4212 = vweird.f32 %v4205
        %vm4213 = vmor %vm4211, %vm4212
        %v4214 = vsel %vm4213, %v4205, %v4210
        %v4215 = vrsqrt.pop %v4163
        %v4216 = vmul.f32 %v4215, %v4163
        %v4217 = vmul.f32 %v4216, %v4215
        %v4218 = vmul.f32 0.5, %v4217
        %v4219 = vsub.f32 1.5, %v4218
        %v4220 = vmul.f32 %v4215, %v4219
        %vm4221 = vweird.f32 %v4163
        %vm4222 = vweird.f32 %v4215
        %vm4223 = vmor %vm4221, %vm4222
        %v4224 = vsel %vm4223, %v4215, %v4220
        %v4225 = vrsqrt.pop %v4164
        %v4226 = vmul.f32 %v4225, %v4164
        %v4227 = vmul.f32 %v4226, %v4225
        %v4228 = vmul.f32 0.5, %v4227
        %v4229 = vsub.f32 1.5, %v4228
        %v4230 = vmul.f32 %v4225, %v4229
        %vm4231 = vweird.f32 %v4164
        %vm4232 = vweird.f32 %v4225
        %vm4233 = vmor %vm4231, %vm4232
        %v4234 = vsel %vm4233, %v4225, %v4230
        %v4235 = vrsqrt.pop %v4165
        %v4236 = vmul.f32 %v4235, %v4165
        %v4237 = vmul.f32 %v4236, %v4235
        %v4238 = vmul.f32 0.5, %v4237
        %v4239 = vsub.f32 1.5, %v4238
        %v4240 = vmul.f32 %v4235, %v4239
        %vm4241 = vweird.f32 %v4165
        %vm4242 = vweird.f32 %v4235
        %vm4243 = vmor %vm4241, %vm4242
        %v4244 = vsel %vm4243, %v4235, %v4240
        %v4245 = vrsqrt.pop %v4166
        %v4246 = vmul.f32 %v4245, %v4166
        %v4247 = vmul.f32 %v4246, %v4245
        %v4248 = vmul.f32 0.5, %v4247
        %v4249 = vsub.f32 1.5, %v4248
        %v4250 = vmul.f32 %v4245, %v4249
        %vm4251 = vweird.f32 %v4166
        %vm4252 = vweird.f32 %v4245
        %vm4253 = vmor %vm4251, %vm4252
        %v4254 = vsel %vm4253, %v4245, %v4250
        %v4255 = vrsqrt.pop %v4167
        %v4256 = vmul.f32 %v4255, %v4167
        %v4257 = vmul.f32 %v4256, %v4255
        %v4258 = vmul.f32 0.5, %v4257
        %v4259 = vsub.f32 1.5, %v4258
        %v4260 = vmul.f32 %v4255, %v4259
        %vm4261 = vweird.f32 %v4167
        %vm4262 = vweird.f32 %v4255
        %vm4263 = vmor %vm4261, %vm4262
        %v4264 = vsel %vm4263, %v4255, %v4260
        %v4265 = vrsqrt.pop %v4168
        %v4266 = vmul.f32 %v4265, %v4168
        %v4267 = vmul.f32 %v4266, %v4265
        %v4268 = vmul.f32 0.5, %v4267
        %v4269 = vsub.f32 1.5, %v4268
        %v4270 = vmul.f32 %v4265, %v4269
        %vm4271 = vweird.f32 %v4168
        %vm4272 = vweird.f32 %v4265
        %vm4273 = vmor %vm4271, %vm4272
        %v4274 = vsel %vm4273, %v4265, %v4270
        %v4275 = vrsqrt.pop %v4169
        %v4276 = vmul.f32 %v4275, %v4169
        %v4277 = vmul.f32 %v4276, %v4275
        %v4278 = vmul.f32 0.5, %v4277
        %v4279 = vsub.f32 1.5, %v4278
        %v4280 = vmul.f32 %v4275, %v4279
        %vm4281 = vweird.f32 %v4169
        %vm4282 = vweird.f32 %v4275
        %vm4283 = vmor %vm4281, %vm4282
        %v4284 = vsel %vm4283, %v4275, %v4280
        %v4285 = vrsqrt.pop %v4170
        %v4286 = vmul.f32 %v4285, %v4170
        %v4287 = vmul.f32 %v4286, %v4285
        %v4288 = vmul.f32 0.5, %v4287
        %v4289 = vsub.f32 1.5, %v4288
        %v4290 = vmul.f32 %v4285, %v4289
        %vm4291 = vweird.f32 %v4170
        %vm4292 = vweird.f32 %v4285
        %vm4293 = vmor %vm4291, %vm4292
        %v4294 = vsel %vm4293, %v4285, %v4290
        %v4295 = vrsqrt.pop %v4171
        %v4296 = vmul.f32 %v4295, %v4171
        %v4297 = vmul.f32 %v4296, %v4295
        %v4298 = vmul.f32 0.5, %v4297
        %v4299 = vsub.f32 1.5, %v4298
        %v4300 = vmul.f32 %v4295, %v4299
        %vm4301 = vweird.f32 %v4171
        %vm4302 = vweird.f32 %v4295
        %vm4303 = vmor %vm4301, %vm4302
        %v4304 = vsel %vm4303, %v4295, %v4300
        %v4305 = vrsqrt.pop %v4172
        %v4306 = vmul.f32 %v4305, %v4172
        %v4307 = vmul.f32 %v4306, %v4305
        %v4308 = vmul.f32 0.5, %v4307
        %v4309 = vsub.f32 1.5, %v4308
        %v4310 = vmul.f32 %v4305, %v4309
        %vm4311 = vweird.f32 %v4172
        %vm4312 = vweird.f32 %v4305
        %vm4313 = vmor %vm4311, %vm4312
        %v4314 = vsel %vm4313, %v4305, %v4310
        %v4315 = vrsqrt.pop %v4173
        %v4316 = vmul.f32 %v4315, %v4173
        %v4317 = vmul.f32 %v4316, %v4315
        %v4318 = vmul.f32 0.5, %v4317
        %v4319 = vsub.f32 1.5, %v4318
        %v4320 = vmul.f32 %v4315, %v4319
        %vm4321 = vweird.f32 %v4173
        %vm4322 = vweird.f32 %v4315
        %vm4323 = vmor %vm4321, %vm4322
        %v4324 = vsel %vm4323, %v4315, %v4320
        %v4325 = vrsqrt.pop %v4174
        %v4326 = vmul.f32 %v4325, %v4174
        %v4327 = vmul.f32 %v4326, %v4325
        %v4328 = vmul.f32 0.5, %v4327
        %v4329 = vsub.f32 1.5, %v4328
        %v4330 = vmul.f32 %v4325, %v4329
        %vm4331 = vweird.f32 %v4174
        %vm4332 = vweird.f32 %v4325
        %vm4333 = vmor %vm4331, %vm4332
        %v4334 = vsel %vm4333, %v4325, %v4330
        %v4335 = vmul.f32 %v4056, %v4184
        %v4336 = vmul.f32 %v4058, %v4194
        %v4337 = vmul.f32 %v4061, %v4204
        %v4338 = vmul.f32 %v4063, %v4214
        %v4339 = vmul.f32 %v4066, %v4224
        %v4340 = vmul.f32 %v4068, %v4234
        %v4341 = vmul.f32 %v4071, %v4244
        %v4342 = vmul.f32 %v4073, %v4254
        %v4343 = vmul.f32 %v4076, %v4264
        %v4344 = vmul.f32 %v4078, %v4274
        %v4345 = vmul.f32 %v4081, %v4284
        %v4346 = vmul.f32 %v4083, %v4294
        %v4347 = vmul.f32 %v4086, %v4304
        %v4348 = vmul.f32 %v4088, %v4314
        %v4349 = vmul.f32 %v4091, %v4324
        %v4350 = vmul.f32 %v4093, %v4334
        %v4351 = vld [vmem:[%s640] sm:$0x1]
        %v4352 = vsub.f32 %v4335, %v1105
        %v4353 = vsub.f32 %v4336, %v1106
        %v4354 = vsub.f32 %v4337, %v1107
        %v4355 = vsub.f32 %v4338, %v1108
        %v4356 = vsub.f32 %v4339, %v1109
        %v4357 = vsub.f32 %v4340, %v1110
        %v4358 = vsub.f32 %v4341, %v1111
        %v4359 = vsub.f32 %v4342, %v1112
        %v4360 = vsub.f32 %v4343, %v1113
        %v4361 = vsub.f32 %v4344, %v1114
        %v4362 = vsub.f32 %v4345, %v1115
        %v4363 = vsub.f32 %v4346, %v1116
        %v4364 = vsub.f32 %v4347, %v1117
        %v4365 = vsub.f32 %v4348, %v1118
        %v4366 = vsub.f32 %v4349, %v1119
        %v4367 = vsub.f32 %v4350, %v1120
        %v4369 = vperm.slane %v4351, 0
        %v4371 = vmul.f32 %v4369, %v4352
        %v4372 = vmul.f32 %v4369, %v4353
        %v4373 = vmul.f32 %v4369, %v4354
        %v4374 = vmul.f32 %v4369, %v4355
        %v4375 = vmul.f32 %v4369, %v4356
        %v4376 = vmul.f32 %v4369, %v4357
        %v4377 = vmul.f32 %v4369, %v4358
        %v4378 = vmul.f32 %v4369, %v4359
        %v4379 = vmul.f32 %v4369, %v4360
        %v4380 = vmul.f32 %v4369, %v4361
        %v4381 = vmul.f32 %v4369, %v4362
        %v4382 = vmul.f32 %v4369, %v4363
        %v4383 = vmul.f32 %v4369, %v4364
        %v4384 = vmul.f32 %v4369, %v4365
        %v4385 = vmul.f32 %v4369, %v4366
        %v4386 = vmul.f32 %v4369, %v4367
        %v4387 = vadd.f32 %v1105, %v4371
        %v4388 = vadd.f32 %v1106, %v4372
        %v4389 = vadd.f32 %v1107, %v4373
        %v4390 = vadd.f32 %v1108, %v4374
        %v4391 = vadd.f32 %v1109, %v4375
        %v4392 = vadd.f32 %v1110, %v4376
        %v4393 = vadd.f32 %v1111, %v4377
        %v4394 = vadd.f32 %v1112, %v4378
        %v4395 = vadd.f32 %v1113, %v4379
        %v4396 = vadd.f32 %v1114, %v4380
        %v4397 = vadd.f32 %v1115, %v4381
        %v4398 = vadd.f32 %v1116, %v4382
        %v4399 = vadd.f32 %v1117, %v4383
        %v4400 = vadd.f32 %v1118, %v4384
        %v4401 = vadd.f32 %v1119, %v4385
        %v4402 = vadd.f32 %v1120, %v4386
        %v4403 = vmul.f32 %v4387, %v4387
        %v4404 = vmul.f32 %v4388, %v4388
        %v4405 = vmul.f32 %v4389, %v4389
        %v4406 = vmul.f32 %v4390, %v4390
        %v4407 = vmul.f32 %v4391, %v4391
        %v4408 = vmul.f32 %v4392, %v4392
        %v4409 = vmul.f32 %v4393, %v4393
        %v4410 = vmul.f32 %v4394, %v4394
        %v4411 = vmul.f32 %v4395, %v4395
        %v4412 = vmul.f32 %v4396, %v4396
        %v4413 = vmul.f32 %v4397, %v4397
        %v4414 = vmul.f32 %v4398, %v4398
        %v4415 = vmul.f32 %v4399, %v4399
        %v4416 = vmul.f32 %v4400, %v4400
        %v4417 = vmul.f32 %v4401, %v4401
        %v4418 = vmul.f32 %v4402, %v4402
        %v4419 = vsel %vm1145, %v4403, 0.0
        %4420 = vadd.xlane.f32.xlu0 %v4419
        %v4421 = vpop.xlane.xlu0 %4420
        %v4422 = vsel %vm1145, %v4404, 0.0
        %4423 = vadd.xlane.f32.xlu0 %v4422
        %v4424 = vpop.xlane.xlu0 %4423
        %v4425 = vsel %vm1145, %v4405, 0.0
        %4426 = vadd.xlane.f32.xlu0 %v4425
        %v4427 = vpop.xlane.xlu0 %4426
        %v4428 = vsel %vm1145, %v4406, 0.0
        %4429 = vadd.xlane.f32.xlu0 %v4428
        %v4430 = vpop.xlane.xlu0 %4429
        %v4431 = vsel %vm1145, %v4407, 0.0
        %4432 = vadd.xlane.f32.xlu0 %v4431
        %v4433 = vpop.xlane.xlu0 %4432
        %v4434 = vsel %vm1145, %v4408, 0.0
        %4435 = vadd.xlane.f32.xlu0 %v4434
        %v4436 = vpop.xlane.xlu0 %4435
        %v4437 = vsel %vm1145, %v4409, 0.0
        %4438 = vadd.xlane.f32.xlu0 %v4437
        %v4439 = vpop.xlane.xlu0 %4438
        %v4440 = vsel %vm1145, %v4410, 0.0
        %4441 = vadd.xlane.f32.xlu0 %v4440
        %v4442 = vpop.xlane.xlu0 %4441
        %v4443 = vsel %vm1145, %v4411, 0.0
        %4444 = vadd.xlane.f32.xlu0 %v4443
        %v4445 = vpop.xlane.xlu0 %4444
        %v4446 = vsel %vm1145, %v4412, 0.0
        %4447 = vadd.xlane.f32.xlu0 %v4446
        %v4448 = vpop.xlane.xlu0 %4447
        %v4449 = vsel %vm1145, %v4413, 0.0
        %4450 = vadd.xlane.f32.xlu0 %v4449
        %v4451 = vpop.xlane.xlu0 %4450
        %v4452 = vsel %vm1145, %v4414, 0.0
        %4453 = vadd.xlane.f32.xlu0 %v4452
        %v4454 = vpop.xlane.xlu0 %4453
        %v4455 = vsel %vm1145, %v4415, 0.0
        %4456 = vadd.xlane.f32.xlu0 %v4455
        %v4457 = vpop.xlane.xlu0 %4456
        %v4458 = vsel %vm1145, %v4416, 0.0
        %4459 = vadd.xlane.f32.xlu0 %v4458
        %v4460 = vpop.xlane.xlu0 %4459
        %v4461 = vsel %vm1145, %v4417, 0.0
        %4462 = vadd.xlane.f32.xlu0 %v4461
        %v4463 = vpop.xlane.xlu0 %4462
        %v4464 = vsel %vm1145, %v4418, 0.0
        %4465 = vadd.xlane.f32.xlu0 %v4464
        %v4466 = vpop.xlane.xlu0 %4465
        %v4467 = vmax.f32 %v4421, 1e-24
        %v4468 = vmax.f32 %v4424, 1e-24
        %v4469 = vmax.f32 %v4427, 1e-24
        %v4470 = vmax.f32 %v4430, 1e-24
        %v4471 = vmax.f32 %v4433, 1e-24
        %v4472 = vmax.f32 %v4436, 1e-24
        %v4473 = vmax.f32 %v4439, 1e-24
        %v4474 = vmax.f32 %v4442, 1e-24
        %v4475 = vmax.f32 %v4445, 1e-24
        %v4476 = vmax.f32 %v4448, 1e-24
        %v4477 = vmax.f32 %v4451, 1e-24
        %v4478 = vmax.f32 %v4454, 1e-24
        %v4479 = vmax.f32 %v4457, 1e-24
        %v4480 = vmax.f32 %v4460, 1e-24
        %v4481 = vmax.f32 %v4463, 1e-24
        %v4482 = vmax.f32 %v4466, 1e-24
        %v4483 = vrsqrt.pop %v4467
        %v4484 = vmul.f32 %v4483, %v4467
        %v4485 = vmul.f32 %v4484, %v4483
        %v4486 = vmul.f32 0.5, %v4485
        %v4487 = vsub.f32 1.5, %v4486
        %v4488 = vmul.f32 %v4483, %v4487
        %vm4489 = vweird.f32 %v4467
        %vm4490 = vweird.f32 %v4483
        %vm4491 = vmor %vm4489, %vm4490
        %v4492 = vsel %vm4491, %v4483, %v4488
        %v4493 = vrsqrt.pop %v4468
        %v4494 = vmul.f32 %v4493, %v4468
        %v4495 = vmul.f32 %v4494, %v4493
        %v4496 = vmul.f32 0.5, %v4495
        %v4497 = vsub.f32 1.5, %v4496
        %v4498 = vmul.f32 %v4493, %v4497
        %vm4499 = vweird.f32 %v4468
        %vm4500 = vweird.f32 %v4493
        %vm4501 = vmor %vm4499, %vm4500
        %v4502 = vsel %vm4501, %v4493, %v4498
        %v4503 = vrsqrt.pop %v4469
        %v4504 = vmul.f32 %v4503, %v4469
        %v4505 = vmul.f32 %v4504, %v4503
        %v4506 = vmul.f32 0.5, %v4505
        %v4507 = vsub.f32 1.5, %v4506
        %v4508 = vmul.f32 %v4503, %v4507
        %vm4509 = vweird.f32 %v4469
        %vm4510 = vweird.f32 %v4503
        %vm4511 = vmor %vm4509, %vm4510
        %v4512 = vsel %vm4511, %v4503, %v4508
        %v4513 = vrsqrt.pop %v4470
        %v4514 = vmul.f32 %v4513, %v4470
        %v4515 = vmul.f32 %v4514, %v4513
        %v4516 = vmul.f32 0.5, %v4515
        %v4517 = vsub.f32 1.5, %v4516
        %v4518 = vmul.f32 %v4513, %v4517
        %vm4519 = vweird.f32 %v4470
        %vm4520 = vweird.f32 %v4513
        %vm4521 = vmor %vm4519, %vm4520
        %v4522 = vsel %vm4521, %v4513, %v4518
        %v4523 = vrsqrt.pop %v4471
        %v4524 = vmul.f32 %v4523, %v4471
        %v4525 = vmul.f32 %v4524, %v4523
        %v4526 = vmul.f32 0.5, %v4525
        %v4527 = vsub.f32 1.5, %v4526
        %v4528 = vmul.f32 %v4523, %v4527
        %vm4529 = vweird.f32 %v4471
        %vm4530 = vweird.f32 %v4523
        %vm4531 = vmor %vm4529, %vm4530
        %v4532 = vsel %vm4531, %v4523, %v4528
        %v4533 = vrsqrt.pop %v4472
        %v4534 = vmul.f32 %v4533, %v4472
        %v4535 = vmul.f32 %v4534, %v4533
        %v4536 = vmul.f32 0.5, %v4535
        %v4537 = vsub.f32 1.5, %v4536
        %v4538 = vmul.f32 %v4533, %v4537
        %vm4539 = vweird.f32 %v4472
        %vm4540 = vweird.f32 %v4533
        %vm4541 = vmor %vm4539, %vm4540
        %v4542 = vsel %vm4541, %v4533, %v4538
        %v4543 = vrsqrt.pop %v4473
        %v4544 = vmul.f32 %v4543, %v4473
        %v4545 = vmul.f32 %v4544, %v4543
        %v4546 = vmul.f32 0.5, %v4545
        %v4547 = vsub.f32 1.5, %v4546
        %v4548 = vmul.f32 %v4543, %v4547
        %vm4549 = vweird.f32 %v4473
        %vm4550 = vweird.f32 %v4543
        %vm4551 = vmor %vm4549, %vm4550
        %v4552 = vsel %vm4551, %v4543, %v4548
        %v4553 = vrsqrt.pop %v4474
        %v4554 = vmul.f32 %v4553, %v4474
        %v4555 = vmul.f32 %v4554, %v4553
        %v4556 = vmul.f32 0.5, %v4555
        %v4557 = vsub.f32 1.5, %v4556
        %v4558 = vmul.f32 %v4553, %v4557
        %vm4559 = vweird.f32 %v4474
        %vm4560 = vweird.f32 %v4553
        %vm4561 = vmor %vm4559, %vm4560
        %v4562 = vsel %vm4561, %v4553, %v4558
        %v4563 = vrsqrt.pop %v4475
        %v4564 = vmul.f32 %v4563, %v4475
        %v4565 = vmul.f32 %v4564, %v4563
        %v4566 = vmul.f32 0.5, %v4565
        %v4567 = vsub.f32 1.5, %v4566
        %v4568 = vmul.f32 %v4563, %v4567
        %vm4569 = vweird.f32 %v4475
        %vm4570 = vweird.f32 %v4563
        %vm4571 = vmor %vm4569, %vm4570
        %v4572 = vsel %vm4571, %v4563, %v4568
        %v4573 = vrsqrt.pop %v4476
        %v4574 = vmul.f32 %v4573, %v4476
        %v4575 = vmul.f32 %v4574, %v4573
        %v4576 = vmul.f32 0.5, %v4575
        %v4577 = vsub.f32 1.5, %v4576
        %v4578 = vmul.f32 %v4573, %v4577
        %vm4579 = vweird.f32 %v4476
        %vm4580 = vweird.f32 %v4573
        %vm4581 = vmor %vm4579, %vm4580
        %v4582 = vsel %vm4581, %v4573, %v4578
        %v4583 = vrsqrt.pop %v4477
        %v4584 = vmul.f32 %v4583, %v4477
        %v4585 = vmul.f32 %v4584, %v4583
        %v4586 = vmul.f32 0.5, %v4585
        %v4587 = vsub.f32 1.5, %v4586
        %v4588 = vmul.f32 %v4583, %v4587
        %vm4589 = vweird.f32 %v4477
        %vm4590 = vweird.f32 %v4583
        %vm4591 = vmor %vm4589, %vm4590
        %v4592 = vsel %vm4591, %v4583, %v4588
        %v4593 = vrsqrt.pop %v4478
        %v4594 = vmul.f32 %v4593, %v4478
        %v4595 = vmul.f32 %v4594, %v4593
        %v4596 = vmul.f32 0.5, %v4595
        %v4597 = vsub.f32 1.5, %v4596
        %v4598 = vmul.f32 %v4593, %v4597
        %vm4599 = vweird.f32 %v4478
        %vm4600 = vweird.f32 %v4593
        %vm4601 = vmor %vm4599, %vm4600
        %v4602 = vsel %vm4601, %v4593, %v4598
        %v4603 = vrsqrt.pop %v4479
        %v4604 = vmul.f32 %v4603, %v4479
        %v4605 = vmul.f32 %v4604, %v4603
        %v4606 = vmul.f32 0.5, %v4605
        %v4607 = vsub.f32 1.5, %v4606
        %v4608 = vmul.f32 %v4603, %v4607
        %vm4609 = vweird.f32 %v4479
        %vm4610 = vweird.f32 %v4603
        %vm4611 = vmor %vm4609, %vm4610
        %v4612 = vsel %vm4611, %v4603, %v4608
        %v4613 = vrsqrt.pop %v4480
        %v4614 = vmul.f32 %v4613, %v4480
        %v4615 = vmul.f32 %v4614, %v4613
        %v4616 = vmul.f32 0.5, %v4615
        %v4617 = vsub.f32 1.5, %v4616
        %v4618 = vmul.f32 %v4613, %v4617
        %vm4619 = vweird.f32 %v4480
        %vm4620 = vweird.f32 %v4613
        %vm4621 = vmor %vm4619, %vm4620
        %v4622 = vsel %vm4621, %v4613, %v4618
        %v4623 = vrsqrt.pop %v4481
        %v4624 = vmul.f32 %v4623, %v4481
        %v4625 = vmul.f32 %v4624, %v4623
        %v4626 = vmul.f32 0.5, %v4625
        %v4627 = vsub.f32 1.5, %v4626
        %v4628 = vmul.f32 %v4623, %v4627
        %vm4629 = vweird.f32 %v4481
        %vm4630 = vweird.f32 %v4623
        %vm4631 = vmor %vm4629, %vm4630
        %v4632 = vsel %vm4631, %v4623, %v4628
        %v4633 = vrsqrt.pop %v4482
        %v4634 = vmul.f32 %v4633, %v4482
        %v4635 = vmul.f32 %v4634, %v4633
        %v4636 = vmul.f32 0.5, %v4635
        %v4637 = vsub.f32 1.5, %v4636
        %v4638 = vmul.f32 %v4633, %v4637
        %vm4639 = vweird.f32 %v4482
        %vm4640 = vweird.f32 %v4633
        %vm4641 = vmor %vm4639, %vm4640
        %v4642 = vsel %vm4641, %v4633, %v4638
        %v4643 = vmul.f32 %v4387, %v4492
        %v4644 = vmul.f32 %v4388, %v4502
        %v4645 = vmul.f32 %v4389, %v4512
        %v4646 = vmul.f32 %v4390, %v4522
        %v4647 = vmul.f32 %v4391, %v4532
        %v4648 = vmul.f32 %v4392, %v4542
        %v4649 = vmul.f32 %v4393, %v4552
        %v4650 = vmul.f32 %v4394, %v4562
        %v4651 = vmul.f32 %v4395, %v4572
        %v4652 = vmul.f32 %v4396, %v4582
        %v4653 = vmul.f32 %v4397, %v4592
        %v4654 = vmul.f32 %v4398, %v4602
        %v4655 = vmul.f32 %v4399, %v4612
        %v4656 = vmul.f32 %v4400, %v4622
        %v4657 = vmul.f32 %v4401, %v4632
        %v4658 = vmul.f32 %v4402, %v4642
        %v4659 = vpack.c.bf16 %v4644, %v4643
        %v4660 = vpack.c.bf16 %v4646, %v4645
        %v4661 = vpack.c.bf16 %v4648, %v4647
        %v4662 = vpack.c.bf16 %v4650, %v4649
        %v4663 = vpack.c.bf16 %v4652, %v4651
        %v4664 = vpack.c.bf16 %v4654, %v4653
        %v4665 = vpack.c.bf16 %v4656, %v4655
        %v4666 = vpack.c.bf16 %v4658, %v4657
        %v4667 = vld [vmem:[%s645] sm:$0xf]
        %v4668 = vld [vmem:[%s645 + $0x4] sm:$0xf]
        %v4669 = vld [vmem:[%s645 + $0x8] sm:$0xf]
        %v4670 = vld [vmem:[%s645 + $0xc] sm:$0xf]
        %v4675 = vunpack.c.l.b16 %v4667
        %v4676 = vunpack.c.l.b16 %v4668
        %v4677 = vunpack.c.l.b16 %v4669
        %v4678 = vunpack.c.l.b16 %v4670
        %v4679 = vpack.c.b16 %v4676, %v4675
        %v4680 = vpack.c.b16 %v4678, %v4677
        %v4684 = vsel %vm1145, %v4659, 0
        %v4687 = vsel %vm1145, %v4660, 0
        %v4690 = vsel %vm1145, %v4661, 0
        %v4693 = vsel %vm1145, %v4662, 0
        %v4696 = vsel %vm1145, %v4663, 0
        %v4699 = vsel %vm1145, %v4664, 0
        %v4702 = vsel %vm1145, %v4665, 0
        %v4705 = vsel %vm1145, %v4666, 0
        %4707 = vmatpush.bf16.msra.mxu0 0
        %4708 = vmatpush.bf16.msra.mxu0 0
        %4709 = vmatpush.bf16.msra.mxu0 0
        %4710 = vmatpush.bf16.msra.mxu0 0
        %4711 = vmatpush.bf16.msra.mxu0 0
        %4712 = vmatpush.bf16.msra.mxu0 0
        %4713 = vmatpush.bf16.msra.mxu0 %v4680
        %4714 = vmatpush.bf16.msra.mxu0 %v4679
        %4715 = vmatmul.bf16.gmra.mxu0 %v4684
        %v4716 = vpop.f32.mrf.mxu0
        %v4717 = vadd.f32 0.0, %v4716
        %v4718 = vpop.f32.mrf.mxu0
        %v4719 = vadd.f32 0.0, %v4718
        %4720 = vmatmul.bf16.gmra.mxu0 %v4687
        %v4721 = vpop.f32.mrf.mxu0
        %v4722 = vadd.f32 0.0, %v4721
        %v4723 = vpop.f32.mrf.mxu0
        %v4724 = vadd.f32 0.0, %v4723
        %4725 = vmatmul.bf16.gmra.mxu0 %v4690
        %v4726 = vpop.f32.mrf.mxu0
        %v4727 = vadd.f32 0.0, %v4726
        %v4728 = vpop.f32.mrf.mxu0
        %v4729 = vadd.f32 0.0, %v4728
        %4730 = vmatmul.bf16.gmra.mxu0 %v4693
        %v4731 = vpop.f32.mrf.mxu0
        %v4732 = vadd.f32 0.0, %v4731
        %v4733 = vpop.f32.mrf.mxu0
        %v4734 = vadd.f32 0.0, %v4733
        %4735 = vmatmul.bf16.gmra.mxu0 %v4696
        %v4736 = vpop.f32.mrf.mxu0
        %v4737 = vadd.f32 0.0, %v4736
        %v4738 = vpop.f32.mrf.mxu0
        %v4739 = vadd.f32 0.0, %v4738
        %4740 = vmatmul.bf16.gmra.mxu0 %v4699
        %v4741 = vpop.f32.mrf.mxu0
        %v4742 = vadd.f32 0.0, %v4741
        %v4743 = vpop.f32.mrf.mxu0
        %v4744 = vadd.f32 0.0, %v4743
        %4745 = vmatmul.bf16.gmra.mxu0 %v4702
        %v4746 = vpop.f32.mrf.mxu0
        %v4747 = vadd.f32 0.0, %v4746
        %v4748 = vpop.f32.mrf.mxu0
        %v4749 = vadd.f32 0.0, %v4748
        %4750 = vmatmul.bf16.gmra.mxu0 %v4705
        %v4751 = vpop.f32.mrf.mxu0
        %v4752 = vadd.f32 0.0, %v4751
        %v4753 = vpop.f32.mrf.mxu0
        %v4754 = vadd.f32 0.0, %v4753
        %4755 = vdwg.mxu0
        %v4756 = vld [vmem:[%s648] sm:$0x1]
        %v4758 = vperm.slane %v4756, 0
        %v4760 = vmul.f32 %v4717, %v4758
        %v4761 = vmul.f32 %v4719, %v4758
        %v4762 = vmul.f32 %v4722, %v4758
        %v4763 = vmul.f32 %v4724, %v4758
        %v4764 = vmul.f32 %v4727, %v4758
        %v4765 = vmul.f32 %v4729, %v4758
        %v4766 = vmul.f32 %v4732, %v4758
        %v4767 = vmul.f32 %v4734, %v4758
        %v4768 = vmul.f32 %v4737, %v4758
        %v4769 = vmul.f32 %v4739, %v4758
        %v4770 = vmul.f32 %v4742, %v4758
        %v4771 = vmul.f32 %v4744, %v4758
        %v4772 = vmul.f32 %v4747, %v4758
        %v4773 = vmul.f32 %v4749, %v4758
        %v4774 = vmul.f32 %v4752, %v4758
        %v4775 = vmul.f32 %v4754, %v4758
        %v4776 = vxor.u32 %v4760, 2147483648
        %v4777 = vxor.u32 %v4761, 2147483648
        %v4778 = vxor.u32 %v4762, 2147483648
        %v4779 = vxor.u32 %v4763, 2147483648
        %v4780 = vxor.u32 %v4764, 2147483648
        %v4781 = vxor.u32 %v4765, 2147483648
        %v4782 = vxor.u32 %v4766, 2147483648
        %v4783 = vxor.u32 %v4767, 2147483648
        %v4784 = vxor.u32 %v4768, 2147483648
        %v4785 = vxor.u32 %v4769, 2147483648
        %v4786 = vxor.u32 %v4770, 2147483648
        %v4787 = vxor.u32 %v4771, 2147483648
        %v4788 = vxor.u32 %v4772, 2147483648
        %v4789 = vxor.u32 %v4773, 2147483648
        %v4790 = vxor.u32 %v4774, 2147483648
        %v4791 = vxor.u32 %v4775, 2147483648
        %v4792 = vmul.f32 %v4776, 1.442695
        %v4793 = vpow.pop %v4792
        %v4794 = vmul.f32 %v4777, 1.442695
        %v4795 = vpow.pop %v4794
        %v4796 = vmul.f32 %v4778, 1.442695
        %v4797 = vpow.pop %v4796
        %v4798 = vmul.f32 %v4779, 1.442695
        %v4799 = vpow.pop %v4798
        %v4800 = vmul.f32 %v4780, 1.442695
        %v4801 = vpow.pop %v4800
        %v4802 = vmul.f32 %v4781, 1.442695
        %v4803 = vpow.pop %v4802
        %v4804 = vmul.f32 %v4782, 1.442695
        %v4805 = vpow.pop %v4804
        %v4806 = vmul.f32 %v4783, 1.442695
        %v4807 = vpow.pop %v4806
        %v4808 = vmul.f32 %v4784, 1.442695
        %v4809 = vpow.pop %v4808
        %v4810 = vmul.f32 %v4785, 1.442695
        %v4811 = vpow.pop %v4810
        %v4812 = vmul.f32 %v4786, 1.442695
        %v4813 = vpow.pop %v4812
        %v4814 = vmul.f32 %v4787, 1.442695
        %v4815 = vpow.pop %v4814
        %v4816 = vmul.f32 %v4788, 1.442695
        %v4817 = vpow.pop %v4816
        %v4818 = vmul.f32 %v4789, 1.442695
        %v4819 = vpow.pop %v4818
        %v4820 = vmul.f32 %v4790, 1.442695
        %v4821 = vpow.pop %v4820
        %v4822 = vmul.f32 %v4791, 1.442695
        %v4823 = vpow.pop %v4822
        %v4824 = vadd.f32 %v4793, 1.0
        %v4825 = vadd.f32 %v4795, 1.0
        %v4826 = vadd.f32 %v4797, 1.0
        %v4827 = vadd.f32 %v4799, 1.0
        %v4828 = vadd.f32 %v4801, 1.0
        %v4829 = vadd.f32 %v4803, 1.0
        %v4830 = vadd.f32 %v4805, 1.0
        %v4831 = vadd.f32 %v4807, 1.0
        %v4832 = vadd.f32 %v4809, 1.0
        %v4833 = vadd.f32 %v4811, 1.0
        %v4834 = vadd.f32 %v4813, 1.0
        %v4835 = vadd.f32 %v4815, 1.0
        %v4836 = vadd.f32 %v4817, 1.0
        %v4837 = vadd.f32 %v4819, 1.0
        %v4838 = vadd.f32 %v4821, 1.0
        %v4839 = vadd.f32 %v4823, 1.0
        %v4840 = vrcp.pop %v4824
        %v4841 = vmul.f32 %v4824, %v4840
        %v4842 = vsub.f32 1.0, %v4841
        %v4843 = vmul.f32 %v4840, %v4842
        %v4844 = vadd.f32 %v4840, %v4843
        %vm4845 = vweird.f32 %v4824
        %vm4846 = vweird.f32 %v4840
        %vm4847 = vmor %vm4845, %vm4846
        %v4848 = vsel %vm4847, %v4840, %v4844
        %v4849 = vand.u32 2147483647, %v4824
        %vm4850 = vcmp.eq.f32.partialorder %v4849, 8.507059e+37
        %v4851 = vand.u32 %v4824, 2147483648
        %v4852 = vor.u32 1.1754944e-38, %v4851
        %v4853 = vsel %vm4850, %v4852, %v4848
        %v4854 = vmul.f32 1.0, %v4853
        %v4855 = vrcp.pop %v4825
        %v4856 = vmul.f32 %v4825, %v4855
        %v4857 = vsub.f32 1.0, %v4856
        %v4858 = vmul.f32 %v4855, %v4857
        %v4859 = vadd.f32 %v4855, %v4858
        %vm4860 = vweird.f32 %v4825
        %vm4861 = vweird.f32 %v4855
        %vm4862 = vmor %vm4860, %vm4861
        %v4863 = vsel %vm4862, %v4855, %v4859
        %v4864 = vand.u32 2147483647, %v4825
        %vm4865 = vcmp.eq.f32.partialorder %v4864, 8.507059e+37
        %v4866 = vand.u32 %v4825, 2147483648
        %v4867 = vor.u32 1.1754944e-38, %v4866
        %v4868 = vsel %vm4865, %v4867, %v4863
        %v4869 = vmul.f32 1.0, %v4868
        %v4870 = vrcp.pop %v4826
        %v4871 = vmul.f32 %v4826, %v4870
        %v4872 = vsub.f32 1.0, %v4871
        %v4873 = vmul.f32 %v4870, %v4872
        %v4874 = vadd.f32 %v4870, %v4873
        %vm4875 = vweird.f32 %v4826
        %vm4876 = vweird.f32 %v4870
        %vm4877 = vmor %vm4875, %vm4876
        %v4878 = vsel %vm4877, %v4870, %v4874
        %v4879 = vand.u32 2147483647, %v4826
        %vm4880 = vcmp.eq.f32.partialorder %v4879, 8.507059e+37
        %v4881 = vand.u32 %v4826, 2147483648
        %v4882 = vor.u32 1.1754944e-38, %v4881
        %v4883 = vsel %vm4880, %v4882, %v4878
        %v4884 = vmul.f32 1.0, %v4883
        %v4885 = vrcp.pop %v4827
        %v4886 = vmul.f32 %v4827, %v4885
        %v4887 = vsub.f32 1.0, %v4886
        %v4888 = vmul.f32 %v4885, %v4887
        %v4889 = vadd.f32 %v4885, %v4888
        %vm4890 = vweird.f32 %v4827
        %vm4891 = vweird.f32 %v4885
        %vm4892 = vmor %vm4890, %vm4891
        %v4893 = vsel %vm4892, %v4885, %v4889
        %v4894 = vand.u32 2147483647, %v4827
        %vm4895 = vcmp.eq.f32.partialorder %v4894, 8.507059e+37
        %v4896 = vand.u32 %v4827, 2147483648
        %v4897 = vor.u32 1.1754944e-38, %v4896
        %v4898 = vsel %vm4895, %v4897, %v4893
        %v4899 = vmul.f32 1.0, %v4898
        %v4900 = vrcp.pop %v4828
        %v4901 = vmul.f32 %v4828, %v4900
        %v4902 = vsub.f32 1.0, %v4901
        %v4903 = vmul.f32 %v4900, %v4902
        %v4904 = vadd.f32 %v4900, %v4903
        %vm4905 = vweird.f32 %v4828
        %vm4906 = vweird.f32 %v4900
        %vm4907 = vmor %vm4905, %vm4906
        %v4908 = vsel %vm4907, %v4900, %v4904
        %v4909 = vand.u32 2147483647, %v4828
        %vm4910 = vcmp.eq.f32.partialorder %v4909, 8.507059e+37
        %v4911 = vand.u32 %v4828, 2147483648
        %v4912 = vor.u32 1.1754944e-38, %v4911
        %v4913 = vsel %vm4910, %v4912, %v4908
        %v4914 = vmul.f32 1.0, %v4913
        %v4915 = vrcp.pop %v4829
        %v4916 = vmul.f32 %v4829, %v4915
        %v4917 = vsub.f32 1.0, %v4916
        %v4918 = vmul.f32 %v4915, %v4917
        %v4919 = vadd.f32 %v4915, %v4918
        %vm4920 = vweird.f32 %v4829
        %vm4921 = vweird.f32 %v4915
        %vm4922 = vmor %vm4920, %vm4921
        %v4923 = vsel %vm4922, %v4915, %v4919
        %v4924 = vand.u32 2147483647, %v4829
        %vm4925 = vcmp.eq.f32.partialorder %v4924, 8.507059e+37
        %v4926 = vand.u32 %v4829, 2147483648
        %v4927 = vor.u32 1.1754944e-38, %v4926
        %v4928 = vsel %vm4925, %v4927, %v4923
        %v4929 = vmul.f32 1.0, %v4928
        %v4930 = vrcp.pop %v4830
        %v4931 = vmul.f32 %v4830, %v4930
        %v4932 = vsub.f32 1.0, %v4931
        %v4933 = vmul.f32 %v4930, %v4932
        %v4934 = vadd.f32 %v4930, %v4933
        %vm4935 = vweird.f32 %v4830
        %vm4936 = vweird.f32 %v4930
        %vm4937 = vmor %vm4935, %vm4936
        %v4938 = vsel %vm4937, %v4930, %v4934
        %v4939 = vand.u32 2147483647, %v4830
        %vm4940 = vcmp.eq.f32.partialorder %v4939, 8.507059e+37
        %v4941 = vand.u32 %v4830, 2147483648
        %v4942 = vor.u32 1.1754944e-38, %v4941
        %v4943 = vsel %vm4940, %v4942, %v4938
        %v4944 = vmul.f32 1.0, %v4943
        %v4945 = vrcp.pop %v4831
        %v4946 = vmul.f32 %v4831, %v4945
        %v4947 = vsub.f32 1.0, %v4946
        %v4948 = vmul.f32 %v4945, %v4947
        %v4949 = vadd.f32 %v4945, %v4948
        %vm4950 = vweird.f32 %v4831
        %vm4951 = vweird.f32 %v4945
        %vm4952 = vmor %vm4950, %vm4951
        %v4953 = vsel %vm4952, %v4945, %v4949
        %v4954 = vand.u32 2147483647, %v4831
        %vm4955 = vcmp.eq.f32.partialorder %v4954, 8.507059e+37
        %v4956 = vand.u32 %v4831, 2147483648
        %v4957 = vor.u32 1.1754944e-38, %v4956
        %v4958 = vsel %vm4955, %v4957, %v4953
        %v4959 = vmul.f32 1.0, %v4958
        %v4960 = vrcp.pop %v4832
        %v4961 = vmul.f32 %v4832, %v4960
        %v4962 = vsub.f32 1.0, %v4961
        %v4963 = vmul.f32 %v4960, %v4962
        %v4964 = vadd.f32 %v4960, %v4963
        %vm4965 = vweird.f32 %v4832
        %vm4966 = vweird.f32 %v4960
        %vm4967 = vmor %vm4965, %vm4966
        %v4968 = vsel %vm4967, %v4960, %v4964
        %v4969 = vand.u32 2147483647, %v4832
        %vm4970 = vcmp.eq.f32.partialorder %v4969, 8.507059e+37
        %v4971 = vand.u32 %v4832, 2147483648
        %v4972 = vor.u32 1.1754944e-38, %v4971
        %v4973 = vsel %vm4970, %v4972, %v4968
        %v4974 = vmul.f32 1.0, %v4973
        %v4975 = vrcp.pop %v4833
        %v4976 = vmul.f32 %v4833, %v4975
        %v4977 = vsub.f32 1.0, %v4976
        %v4978 = vmul.f32 %v4975, %v4977
        %v4979 = vadd.f32 %v4975, %v4978
        %vm4980 = vweird.f32 %v4833
        %vm4981 = vweird.f32 %v4975
        %vm4982 = vmor %vm4980, %vm4981
        %v4983 = vsel %vm4982, %v4975, %v4979
        %v4984 = vand.u32 2147483647, %v4833
        %vm4985 = vcmp.eq.f32.partialorder %v4984, 8.507059e+37
        %v4986 = vand.u32 %v4833, 2147483648
        %v4987 = vor.u32 1.1754944e-38, %v4986
        %v4988 = vsel %vm4985, %v4987, %v4983
        %v4989 = vmul.f32 1.0, %v4988
        %v4990 = vrcp.pop %v4834
        %v4991 = vmul.f32 %v4834, %v4990
        %v4992 = vsub.f32 1.0, %v4991
        %v4993 = vmul.f32 %v4990, %v4992
        %v4994 = vadd.f32 %v4990, %v4993
        %vm4995 = vweird.f32 %v4834
        %vm4996 = vweird.f32 %v4990
        %vm4997 = vmor %vm4995, %vm4996
        %v4998 = vsel %vm4997, %v4990, %v4994
        %v4999 = vand.u32 2147483647, %v4834
        %vm5000 = vcmp.eq.f32.partialorder %v4999, 8.507059e+37
        %v5001 = vand.u32 %v4834, 2147483648
        %v5002 = vor.u32 1.1754944e-38, %v5001
        %v5003 = vsel %vm5000, %v5002, %v4998
        %v5004 = vmul.f32 1.0, %v5003
        %v5005 = vrcp.pop %v4835
        %v5006 = vmul.f32 %v4835, %v5005
        %v5007 = vsub.f32 1.0, %v5006
        %v5008 = vmul.f32 %v5005, %v5007
        %v5009 = vadd.f32 %v5005, %v5008
        %vm5010 = vweird.f32 %v4835
        %vm5011 = vweird.f32 %v5005
        %vm5012 = vmor %vm5010, %vm5011
        %v5013 = vsel %vm5012, %v5005, %v5009
        %v5014 = vand.u32 2147483647, %v4835
        %vm5015 = vcmp.eq.f32.partialorder %v5014, 8.507059e+37
        %v5016 = vand.u32 %v4835, 2147483648
        %v5017 = vor.u32 1.1754944e-38, %v5016
        %v5018 = vsel %vm5015, %v5017, %v5013
        %v5019 = vmul.f32 1.0, %v5018
        %v5020 = vrcp.pop %v4836
        %v5021 = vmul.f32 %v4836, %v5020
        %v5022 = vsub.f32 1.0, %v5021
        %v5023 = vmul.f32 %v5020, %v5022
        %v5024 = vadd.f32 %v5020, %v5023
        %vm5025 = vweird.f32 %v4836
        %vm5026 = vweird.f32 %v5020
        %vm5027 = vmor %vm5025, %vm5026
        %v5028 = vsel %vm5027, %v5020, %v5024
        %v5029 = vand.u32 2147483647, %v4836
        %vm5030 = vcmp.eq.f32.partialorder %v5029, 8.507059e+37
        %v5031 = vand.u32 %v4836, 2147483648
        %v5032 = vor.u32 1.1754944e-38, %v5031
        %v5033 = vsel %vm5030, %v5032, %v5028
        %v5034 = vmul.f32 1.0, %v5033
        %v5035 = vrcp.pop %v4837
        %v5036 = vmul.f32 %v4837, %v5035
        %v5037 = vsub.f32 1.0, %v5036
        %v5038 = vmul.f32 %v5035, %v5037
        %v5039 = vadd.f32 %v5035, %v5038
        %vm5040 = vweird.f32 %v4837
        %vm5041 = vweird.f32 %v5035
        %vm5042 = vmor %vm5040, %vm5041
        %v5043 = vsel %vm5042, %v5035, %v5039
        %v5044 = vand.u32 2147483647, %v4837
        %vm5045 = vcmp.eq.f32.partialorder %v5044, 8.507059e+37
        %v5046 = vand.u32 %v4837, 2147483648
        %v5047 = vor.u32 1.1754944e-38, %v5046
        %v5048 = vsel %vm5045, %v5047, %v5043
        %v5049 = vmul.f32 1.0, %v5048
        %v5050 = vrcp.pop %v4838
        %v5051 = vmul.f32 %v4838, %v5050
        %v5052 = vsub.f32 1.0, %v5051
        %v5053 = vmul.f32 %v5050, %v5052
        %v5054 = vadd.f32 %v5050, %v5053
        %vm5055 = vweird.f32 %v4838
        %vm5056 = vweird.f32 %v5050
        %vm5057 = vmor %vm5055, %vm5056
        %v5058 = vsel %vm5057, %v5050, %v5054
        %v5059 = vand.u32 2147483647, %v4838
        %vm5060 = vcmp.eq.f32.partialorder %v5059, 8.507059e+37
        %v5061 = vand.u32 %v4838, 2147483648
        %v5062 = vor.u32 1.1754944e-38, %v5061
        %v5063 = vsel %vm5060, %v5062, %v5058
        %v5064 = vmul.f32 1.0, %v5063
        %v5065 = vrcp.pop %v4839
        %v5066 = vmul.f32 %v4839, %v5065
        %v5067 = vsub.f32 1.0, %v5066
        %v5068 = vmul.f32 %v5065, %v5067
        %v5069 = vadd.f32 %v5065, %v5068
        %vm5070 = vweird.f32 %v4839
        %vm5071 = vweird.f32 %v5065
        %vm5072 = vmor %vm5070, %vm5071
        %v5073 = vsel %vm5072, %v5065, %v5069
        %v5074 = vand.u32 2147483647, %v4839
        %vm5075 = vcmp.eq.f32.partialorder %v5074, 8.507059e+37
        %v5076 = vand.u32 %v4839, 2147483648
        %v5077 = vor.u32 1.1754944e-38, %v5076
        %v5078 = vsel %vm5075, %v5077, %v5073
        %v5079 = vmul.f32 1.0, %v5078
        %v5080 = vmul.f32 %v4760, %v4854
        %v5081 = vmul.f32 %v4761, %v4869
        %v5082 = vmul.f32 %v4762, %v4884
        %v5083 = vmul.f32 %v4763, %v4899
        %v5084 = vmul.f32 %v4764, %v4914
        %v5085 = vmul.f32 %v4765, %v4929
        %v5086 = vmul.f32 %v4766, %v4944
        %v5087 = vmul.f32 %v4767, %v4959
        %v5088 = vmul.f32 %v4768, %v4974
        %v5089 = vmul.f32 %v4769, %v4989
        %v5090 = vmul.f32 %v4770, %v5004
        %v5091 = vmul.f32 %v4771, %v5019
        %v5092 = vmul.f32 %v4772, %v5034
        %v5093 = vmul.f32 %v4773, %v5049
        %v5094 = vmul.f32 %v4774, %v5064
        %v5095 = vmul.f32 %v4775, %v5079
        %5112 = vrot.lane.b32.xlu0 %v4760, 64
        %v5113 = vpop.permute.xlu0 %5112
        %5114 = vrot.lane.b32.xlu0 %v4761, 64
        %v5115 = vpop.permute.xlu0 %5114
        %5116 = vrot.lane.b32.xlu0 %v4762, 64
        %v5117 = vpop.permute.xlu0 %5116
        %5118 = vrot.lane.b32.xlu0 %v4763, 64
        %v5119 = vpop.permute.xlu0 %5118
        %5120 = vrot.lane.b32.xlu0 %v4764, 64
        %v5121 = vpop.permute.xlu0 %5120
        %5122 = vrot.lane.b32.xlu0 %v4765, 64
        %v5123 = vpop.permute.xlu0 %5122
        %5124 = vrot.lane.b32.xlu0 %v4766, 64
        %v5125 = vpop.permute.xlu0 %5124
        %5126 = vrot.lane.b32.xlu0 %v4767, 64
        %v5127 = vpop.permute.xlu0 %5126
        %5128 = vrot.lane.b32.xlu0 %v4768, 64
        %v5129 = vpop.permute.xlu0 %5128
        %5130 = vrot.lane.b32.xlu0 %v4769, 64
        %v5131 = vpop.permute.xlu0 %5130
        %5132 = vrot.lane.b32.xlu0 %v4770, 64
        %v5133 = vpop.permute.xlu0 %5132
        %5134 = vrot.lane.b32.xlu0 %v4771, 64
        %v5135 = vpop.permute.xlu0 %5134
        %5136 = vrot.lane.b32.xlu0 %v4772, 64
        %v5137 = vpop.permute.xlu0 %5136
        %5138 = vrot.lane.b32.xlu0 %v4773, 64
        %v5139 = vpop.permute.xlu0 %5138
        %5140 = vrot.lane.b32.xlu0 %v4774, 64
        %v5141 = vpop.permute.xlu0 %5140
        %5142 = vrot.lane.b32.xlu0 %v4775, 64
        %v5143 = vpop.permute.xlu0 %5142
        %v5160 = vmul.f32 %v5080, %v5113
        %v5161 = vmul.f32 %v5081, %v5115
        %v5162 = vmul.f32 %v5082, %v5117
        %v5163 = vmul.f32 %v5083, %v5119
        %v5164 = vmul.f32 %v5084, %v5121
        %v5165 = vmul.f32 %v5085, %v5123
        %v5166 = vmul.f32 %v5086, %v5125
        %v5167 = vmul.f32 %v5087, %v5127
        %v5168 = vmul.f32 %v5088, %v5129
        %v5169 = vmul.f32 %v5089, %v5131
        %v5170 = vmul.f32 %v5090, %v5133
        %v5171 = vmul.f32 %v5091, %v5135
        %v5172 = vmul.f32 %v5092, %v5137
        %v5173 = vmul.f32 %v5093, %v5139
        %v5174 = vmul.f32 %v5094, %v5141
        %v5175 = vmul.f32 %v5095, %v5143
        %v5176 = vpack.c.bf16 %v5161, %v5160
        %v5177 = vpack.c.bf16 %v5163, %v5162
        %v5178 = vpack.c.bf16 %v5165, %v5164
        %v5179 = vpack.c.bf16 %v5167, %v5166
        %v5180 = vpack.c.bf16 %v5169, %v5168
        %v5181 = vpack.c.bf16 %v5171, %v5170
        %v5182 = vpack.c.bf16 %v5173, %v5172
        %v5183 = vpack.c.bf16 %v5175, %v5174
        %v5184 = vld [vmem:[%s653] sm:$0xf]
        %v5185 = vld [vmem:[%s653 + $0x4] sm:$0xf]
        %v5186 = vld [vmem:[%s653 + $0x8] sm:$0xf]
        %v5187 = vld [vmem:[%s653 + $0xc] sm:$0xf]
        %v5188 = vld [vmem:[%s653 + $0x10] sm:$0xf]
        %v5189 = vld [vmem:[%s653 + $0x14] sm:$0xf]
        %v5190 = vld [vmem:[%s653 + $0x18] sm:$0xf]
        %v5191 = vld [vmem:[%s653 + $0x1c] sm:$0xf]
        %5200 = vrot.lane.b32.xlu0 %v5176, 64
        %v5201 = vpop.permute.xlu0 %5200
        %5202 = vrot.lane.b32.xlu0 %v5177, 64
        %v5203 = vpop.permute.xlu0 %5202
        %5204 = vrot.lane.b32.xlu0 %v5178, 64
        %v5205 = vpop.permute.xlu0 %5204
        %5206 = vrot.lane.b32.xlu0 %v5179, 64
        %v5207 = vpop.permute.xlu0 %5206
        %5208 = vrot.lane.b32.xlu0 %v5180, 64
        %v5209 = vpop.permute.xlu0 %5208
        %5210 = vrot.lane.b32.xlu0 %v5181, 64
        %v5211 = vpop.permute.xlu0 %5210
        %5212 = vrot.lane.b32.xlu0 %v5182, 64
        %v5213 = vpop.permute.xlu0 %5212
        %5214 = vrot.lane.b32.xlu0 %v5183, 64
        %v5215 = vpop.permute.xlu0 %5214
        %v5224 = vunpack.c.l.b16 %v5184
        %v5225 = vunpack.c.l.b16 %v5185
        %v5226 = vunpack.c.l.b16 %v5186
        %v5227 = vunpack.c.l.b16 %v5187
        %v5228 = vunpack.c.l.b16 %v5188
        %v5229 = vunpack.c.l.b16 %v5189
        %v5230 = vunpack.c.l.b16 %v5190
        %v5231 = vunpack.c.l.b16 %v5191
        %v5232 = vpack.c.b16 %v5225, %v5224
        %v5233 = vpack.c.b16 %v5227, %v5226
        %v5234 = vpack.c.b16 %v5229, %v5228
        %v5235 = vpack.c.b16 %v5231, %v5230
        %vm5240 = vcmask 523264
        %v5242 = vsel %vm5240, %v5201, 0
        %v5245 = vsel %vm5240, %v5203, 0
        %v5248 = vsel %vm5240, %v5205, 0
        %v5251 = vsel %vm5240, %v5207, 0
        %v5254 = vsel %vm5240, %v5209, 0
        %v5257 = vsel %vm5240, %v5211, 0
        %v5260 = vsel %vm5240, %v5213, 0
        %v5263 = vsel %vm5240, %v5215, 0
        %5265 = vmatpush.bf16.msra.mxu0 0
        %5266 = vmatpush.bf16.msra.mxu0 0
        %5267 = vmatpush.bf16.msra.mxu0 0
        %5268 = vmatpush.bf16.msra.mxu0 0
        %5269 = vmatpush.bf16.msra.mxu0 %v5235
        %5270 = vmatpush.bf16.msra.mxu0 %v5234
        %5271 = vmatpush.bf16.msra.mxu0 %v5233
        %5272 = vmatpush.bf16.msra.mxu0 %v5232
        %5273 = vmatmul.bf16.gmra.mxu0 %v5242
        %v5274 = vpop.f32.mrf.mxu0
        %v5275 = vadd.f32 0.0, %v5274
        %v5276 = vpop.f32.mrf.mxu0
        %v5277 = vadd.f32 0.0, %v5276
        %5278 = vmatmul.bf16.gmra.mxu0 %v5245
        %v5279 = vpop.f32.mrf.mxu0
        %v5280 = vadd.f32 0.0, %v5279
        %v5281 = vpop.f32.mrf.mxu0
        %v5282 = vadd.f32 0.0, %v5281
        %5283 = vmatmul.bf16.gmra.mxu0 %v5248
        %v5284 = vpop.f32.mrf.mxu0
        %v5285 = vadd.f32 0.0, %v5284
        %v5286 = vpop.f32.mrf.mxu0
        %v5287 = vadd.f32 0.0, %v5286
        %5288 = vmatmul.bf16.gmra.mxu0 %v5251
        %v5289 = vpop.f32.mrf.mxu0
        %v5290 = vadd.f32 0.0, %v5289
        %v5291 = vpop.f32.mrf.mxu0
        %v5292 = vadd.f32 0.0, %v5291
        %5293 = vmatmul.bf16.gmra.mxu0 %v5254
        %v5294 = vpop.f32.mrf.mxu0
        %v5295 = vadd.f32 0.0, %v5294
        %v5296 = vpop.f32.mrf.mxu0
        %v5297 = vadd.f32 0.0, %v5296
        %5298 = vmatmul.bf16.gmra.mxu0 %v5257
        %v5299 = vpop.f32.mrf.mxu0
        %v5300 = vadd.f32 0.0, %v5299
        %v5301 = vpop.f32.mrf.mxu0
        %v5302 = vadd.f32 0.0, %v5301
        %5303 = vmatmul.bf16.gmra.mxu0 %v5260
        %v5304 = vpop.f32.mrf.mxu0
        %v5305 = vadd.f32 0.0, %v5304
        %v5306 = vpop.f32.mrf.mxu0
        %v5307 = vadd.f32 0.0, %v5306
        %5308 = vmatmul.bf16.gmra.mxu0 %v5263
        %v5309 = vpop.f32.mrf.mxu0
        %v5310 = vadd.f32 0.0, %v5309
        %v5311 = vpop.f32.mrf.mxu0
        %v5312 = vadd.f32 0.0, %v5311
        %5313 = vdwg.mxu0
        %v5314 = vmul.f32 %v5275, %v5275
        %v5315 = vmul.f32 %v5277, %v5277
        %v5316 = vmul.f32 %v5280, %v5280
        %v5317 = vmul.f32 %v5282, %v5282
        %v5318 = vmul.f32 %v5285, %v5285
        %v5319 = vmul.f32 %v5287, %v5287
        %v5320 = vmul.f32 %v5290, %v5290
        %v5321 = vmul.f32 %v5292, %v5292
        %v5322 = vmul.f32 %v5295, %v5295
        %v5323 = vmul.f32 %v5297, %v5297
        %v5324 = vmul.f32 %v5300, %v5300
        %v5325 = vmul.f32 %v5302, %v5302
        %v5326 = vmul.f32 %v5305, %v5305
        %v5327 = vmul.f32 %v5307, %v5307
        %v5328 = vmul.f32 %v5310, %v5310
        %v5329 = vmul.f32 %v5312, %v5312
        %v5330 = vsel %vm1145, %v5314, 0.0
        %5331 = vadd.xlane.f32.xlu0 %v5330
        %v5332 = vpop.xlane.xlu0 %5331
        %v5333 = vsel %vm1145, %v5315, 0.0
        %5334 = vadd.xlane.f32.xlu0 %v5333
        %v5335 = vpop.xlane.xlu0 %5334
        %v5336 = vsel %vm1145, %v5316, 0.0
        %5337 = vadd.xlane.f32.xlu0 %v5336
        %v5338 = vpop.xlane.xlu0 %5337
        %v5339 = vsel %vm1145, %v5317, 0.0
        %5340 = vadd.xlane.f32.xlu0 %v5339
        %v5341 = vpop.xlane.xlu0 %5340
        %v5342 = vsel %vm1145, %v5318, 0.0
        %5343 = vadd.xlane.f32.xlu0 %v5342
        %v5344 = vpop.xlane.xlu0 %5343
        %v5345 = vsel %vm1145, %v5319, 0.0
        %5346 = vadd.xlane.f32.xlu0 %v5345
        %v5347 = vpop.xlane.xlu0 %5346
        %v5348 = vsel %vm1145, %v5320, 0.0
        %5349 = vadd.xlane.f32.xlu0 %v5348
        %v5350 = vpop.xlane.xlu0 %5349
        %v5351 = vsel %vm1145, %v5321, 0.0
        %5352 = vadd.xlane.f32.xlu0 %v5351
        %v5353 = vpop.xlane.xlu0 %5352
        %v5354 = vsel %vm1145, %v5322, 0.0
        %5355 = vadd.xlane.f32.xlu0 %v5354
        %v5356 = vpop.xlane.xlu0 %5355
        %v5357 = vsel %vm1145, %v5323, 0.0
        %5358 = vadd.xlane.f32.xlu0 %v5357
        %v5359 = vpop.xlane.xlu0 %5358
        %v5360 = vsel %vm1145, %v5324, 0.0
        %5361 = vadd.xlane.f32.xlu0 %v5360
        %v5362 = vpop.xlane.xlu0 %5361
        %v5363 = vsel %vm1145, %v5325, 0.0
        %5364 = vadd.xlane.f32.xlu0 %v5363
        %v5365 = vpop.xlane.xlu0 %5364
        %v5366 = vsel %vm1145, %v5326, 0.0
        %5367 = vadd.xlane.f32.xlu0 %v5366
        %v5368 = vpop.xlane.xlu0 %5367
        %v5369 = vsel %vm1145, %v5327, 0.0
        %5370 = vadd.xlane.f32.xlu0 %v5369
        %v5371 = vpop.xlane.xlu0 %5370
        %v5372 = vsel %vm1145, %v5328, 0.0
        %5373 = vadd.xlane.f32.xlu0 %v5372
        %v5374 = vpop.xlane.xlu0 %5373
        %v5375 = vsel %vm1145, %v5329, 0.0
        %5376 = vadd.xlane.f32.xlu0 %v5375
        %v5377 = vpop.xlane.xlu0 %5376
        %v5378 = vmax.f32 %v5332, 1e-24
        %v5379 = vmax.f32 %v5335, 1e-24
        %v5380 = vmax.f32 %v5338, 1e-24
        %v5381 = vmax.f32 %v5341, 1e-24
        %v5382 = vmax.f32 %v5344, 1e-24
        %v5383 = vmax.f32 %v5347, 1e-24
        %v5384 = vmax.f32 %v5350, 1e-24
        %v5385 = vmax.f32 %v5353, 1e-24
        %v5386 = vmax.f32 %v5356, 1e-24
        %v5387 = vmax.f32 %v5359, 1e-24
        %v5388 = vmax.f32 %v5362, 1e-24
        %v5389 = vmax.f32 %v5365, 1e-24
        %v5390 = vmax.f32 %v5368, 1e-24
        %v5391 = vmax.f32 %v5371, 1e-24
        %v5392 = vmax.f32 %v5374, 1e-24
        %v5393 = vmax.f32 %v5377, 1e-24
        %v5394 = vrsqrt.pop %v5378
        %v5395 = vmul.f32 %v5394, %v5378
        %v5396 = vmul.f32 %v5395, %v5394
        %v5397 = vmul.f32 0.5, %v5396
        %v5398 = vsub.f32 1.5, %v5397
        %v5399 = vmul.f32 %v5394, %v5398
        %vm5400 = vweird.f32 %v5378
        %vm5401 = vweird.f32 %v5394
        %vm5402 = vmor %vm5400, %vm5401
        %v5403 = vsel %vm5402, %v5394, %v5399
        %v5404 = vrsqrt.pop %v5379
        %v5405 = vmul.f32 %v5404, %v5379
        %v5406 = vmul.f32 %v5405, %v5404
        %v5407 = vmul.f32 0.5, %v5406
        %v5408 = vsub.f32 1.5, %v5407
        %v5409 = vmul.f32 %v5404, %v5408
        %vm5410 = vweird.f32 %v5379
        %vm5411 = vweird.f32 %v5404
        %vm5412 = vmor %vm5410, %vm5411
        %v5413 = vsel %vm5412, %v5404, %v5409
        %v5414 = vrsqrt.pop %v5380
        %v5415 = vmul.f32 %v5414, %v5380
        %v5416 = vmul.f32 %v5415, %v5414
        %v5417 = vmul.f32 0.5, %v5416
        %v5418 = vsub.f32 1.5, %v5417
        %v5419 = vmul.f32 %v5414, %v5418
        %vm5420 = vweird.f32 %v5380
        %vm5421 = vweird.f32 %v5414
        %vm5422 = vmor %vm5420, %vm5421
        %v5423 = vsel %vm5422, %v5414, %v5419
        %v5424 = vrsqrt.pop %v5381
        %v5425 = vmul.f32 %v5424, %v5381
        %v5426 = vmul.f32 %v5425, %v5424
        %v5427 = vmul.f32 0.5, %v5426
        %v5428 = vsub.f32 1.5, %v5427
        %v5429 = vmul.f32 %v5424, %v5428
        %vm5430 = vweird.f32 %v5381
        %vm5431 = vweird.f32 %v5424
        %vm5432 = vmor %vm5430, %vm5431
        %v5433 = vsel %vm5432, %v5424, %v5429
        %v5434 = vrsqrt.pop %v5382
        %v5435 = vmul.f32 %v5434, %v5382
        %v5436 = vmul.f32 %v5435, %v5434
        %v5437 = vmul.f32 0.5, %v5436
        %v5438 = vsub.f32 1.5, %v5437
        %v5439 = vmul.f32 %v5434, %v5438
        %vm5440 = vweird.f32 %v5382
        %vm5441 = vweird.f32 %v5434
        %vm5442 = vmor %vm5440, %vm5441
        %v5443 = vsel %vm5442, %v5434, %v5439
        %v5444 = vrsqrt.pop %v5383
        %v5445 = vmul.f32 %v5444, %v5383
        %v5446 = vmul.f32 %v5445, %v5444
        %v5447 = vmul.f32 0.5, %v5446
        %v5448 = vsub.f32 1.5, %v5447
        %v5449 = vmul.f32 %v5444, %v5448
        %vm5450 = vweird.f32 %v5383
        %vm5451 = vweird.f32 %v5444
        %vm5452 = vmor %vm5450, %vm5451
        %v5453 = vsel %vm5452, %v5444, %v5449
        %v5454 = vrsqrt.pop %v5384
        %v5455 = vmul.f32 %v5454, %v5384
        %v5456 = vmul.f32 %v5455, %v5454
        %v5457 = vmul.f32 0.5, %v5456
        %v5458 = vsub.f32 1.5, %v5457
        %v5459 = vmul.f32 %v5454, %v5458
        %vm5460 = vweird.f32 %v5384
        %vm5461 = vweird.f32 %v5454
        %vm5462 = vmor %vm5460, %vm5461
        %v5463 = vsel %vm5462, %v5454, %v5459
        %v5464 = vrsqrt.pop %v5385
        %v5465 = vmul.f32 %v5464, %v5385
        %v5466 = vmul.f32 %v5465, %v5464
        %v5467 = vmul.f32 0.5, %v5466
        %v5468 = vsub.f32 1.5, %v5467
        %v5469 = vmul.f32 %v5464, %v5468
        %vm5470 = vweird.f32 %v5385
        %vm5471 = vweird.f32 %v5464
        %vm5472 = vmor %vm5470, %vm5471
        %v5473 = vsel %vm5472, %v5464, %v5469
        %v5474 = vrsqrt.pop %v5386
        %v5475 = vmul.f32 %v5474, %v5386
        %v5476 = vmul.f32 %v5475, %v5474
        %v5477 = vmul.f32 0.5, %v5476
        %v5478 = vsub.f32 1.5, %v5477
        %v5479 = vmul.f32 %v5474, %v5478
        %vm5480 = vweird.f32 %v5386
        %vm5481 = vweird.f32 %v5474
        %vm5482 = vmor %vm5480, %vm5481
        %v5483 = vsel %vm5482, %v5474, %v5479
        %v5484 = vrsqrt.pop %v5387
        %v5485 = vmul.f32 %v5484, %v5387
        %v5486 = vmul.f32 %v5485, %v5484
        %v5487 = vmul.f32 0.5, %v5486
        %v5488 = vsub.f32 1.5, %v5487
        %v5489 = vmul.f32 %v5484, %v5488
        %vm5490 = vweird.f32 %v5387
        %vm5491 = vweird.f32 %v5484
        %vm5492 = vmor %vm5490, %vm5491
        %v5493 = vsel %vm5492, %v5484, %v5489
        %v5494 = vrsqrt.pop %v5388
        %v5495 = vmul.f32 %v5494, %v5388
        %v5496 = vmul.f32 %v5495, %v5494
        %v5497 = vmul.f32 0.5, %v5496
        %v5498 = vsub.f32 1.5, %v5497
        %v5499 = vmul.f32 %v5494, %v5498
        %vm5500 = vweird.f32 %v5388
        %vm5501 = vweird.f32 %v5494
        %vm5502 = vmor %vm5500, %vm5501
        %v5503 = vsel %vm5502, %v5494, %v5499
        %v5504 = vrsqrt.pop %v5389
        %v5505 = vmul.f32 %v5504, %v5389
        %v5506 = vmul.f32 %v5505, %v5504
        %v5507 = vmul.f32 0.5, %v5506
        %v5508 = vsub.f32 1.5, %v5507
        %v5509 = vmul.f32 %v5504, %v5508
        %vm5510 = vweird.f32 %v5389
        %vm5511 = vweird.f32 %v5504
        %vm5512 = vmor %vm5510, %vm5511
        %v5513 = vsel %vm5512, %v5504, %v5509
        %v5514 = vrsqrt.pop %v5390
        %v5515 = vmul.f32 %v5514, %v5390
        %v5516 = vmul.f32 %v5515, %v5514
        %v5517 = vmul.f32 0.5, %v5516
        %v5518 = vsub.f32 1.5, %v5517
        %v5519 = vmul.f32 %v5514, %v5518
        %vm5520 = vweird.f32 %v5390
        %vm5521 = vweird.f32 %v5514
        %vm5522 = vmor %vm5520, %vm5521
        %v5523 = vsel %vm5522, %v5514, %v5519
        %v5524 = vrsqrt.pop %v5391
        %v5525 = vmul.f32 %v5524, %v5391
        %v5526 = vmul.f32 %v5525, %v5524
        %v5527 = vmul.f32 0.5, %v5526
        %v5528 = vsub.f32 1.5, %v5527
        %v5529 = vmul.f32 %v5524, %v5528
        %vm5530 = vweird.f32 %v5391
        %vm5531 = vweird.f32 %v5524
        %vm5532 = vmor %vm5530, %vm5531
        %v5533 = vsel %vm5532, %v5524, %v5529
        %v5534 = vrsqrt.pop %v5392
        %v5535 = vmul.f32 %v5534, %v5392
        %v5536 = vmul.f32 %v5535, %v5534
        %v5537 = vmul.f32 0.5, %v5536
        %v5538 = vsub.f32 1.5, %v5537
        %v5539 = vmul.f32 %v5534, %v5538
        %vm5540 = vweird.f32 %v5392
        %vm5541 = vweird.f32 %v5534
        %vm5542 = vmor %vm5540, %vm5541
        %v5543 = vsel %vm5542, %v5534, %v5539
        %v5544 = vrsqrt.pop %v5393
        %v5545 = vmul.f32 %v5544, %v5393
        %v5546 = vmul.f32 %v5545, %v5544
        %v5547 = vmul.f32 0.5, %v5546
        %v5548 = vsub.f32 1.5, %v5547
        %v5549 = vmul.f32 %v5544, %v5548
        %vm5550 = vweird.f32 %v5393
        %vm5551 = vweird.f32 %v5544
        %vm5552 = vmor %vm5550, %vm5551
        %v5553 = vsel %vm5552, %v5544, %v5549
        %v5554 = vmul.f32 %v5275, %v5403
        %v5555 = vmul.f32 %v5277, %v5413
        %v5556 = vmul.f32 %v5280, %v5423
        %v5557 = vmul.f32 %v5282, %v5433
        %v5558 = vmul.f32 %v5285, %v5443
        %v5559 = vmul.f32 %v5287, %v5453
        %v5560 = vmul.f32 %v5290, %v5463
        %v5561 = vmul.f32 %v5292, %v5473
        %v5562 = vmul.f32 %v5295, %v5483
        %v5563 = vmul.f32 %v5297, %v5493
        %v5564 = vmul.f32 %v5300, %v5503
        %v5565 = vmul.f32 %v5302, %v5513
        %v5566 = vmul.f32 %v5305, %v5523
        %v5567 = vmul.f32 %v5307, %v5533
        %v5568 = vmul.f32 %v5310, %v5543
        %v5569 = vmul.f32 %v5312, %v5553
        %v5570 = vld [vmem:[%s656] sm:$0x1]
        %v5571 = vsub.f32 %v5554, %v4643
        %v5572 = vsub.f32 %v5555, %v4644
        %v5573 = vsub.f32 %v5556, %v4645
        %v5574 = vsub.f32 %v5557, %v4646
        %v5575 = vsub.f32 %v5558, %v4647
        %v5576 = vsub.f32 %v5559, %v4648
        %v5577 = vsub.f32 %v5560, %v4649
        %v5578 = vsub.f32 %v5561, %v4650
        %v5579 = vsub.f32 %v5562, %v4651
        %v5580 = vsub.f32 %v5563, %v4652
        %v5581 = vsub.f32 %v5564, %v4653
        %v5582 = vsub.f32 %v5565, %v4654
        %v5583 = vsub.f32 %v5566, %v4655
        %v5584 = vsub.f32 %v5567, %v4656
        %v5585 = vsub.f32 %v5568, %v4657
        %v5586 = vsub.f32 %v5569, %v4658
        %v5588 = vperm.slane %v5570, 0
        %v5590 = vmul.f32 %v5588, %v5571
        %v5591 = vmul.f32 %v5588, %v5572
        %v5592 = vmul.f32 %v5588, %v5573
        %v5593 = vmul.f32 %v5588, %v5574
        %v5594 = vmul.f32 %v5588, %v5575
        %v5595 = vmul.f32 %v5588, %v5576
        %v5596 = vmul.f32 %v5588, %v5577
        %v5597 = vmul.f32 %v5588, %v5578
        %v5598 = vmul.f32 %v5588, %v5579
        %v5599 = vmul.f32 %v5588, %v5580
        %v5600 = vmul.f32 %v5588, %v5581
        %v5601 = vmul.f32 %v5588, %v5582
        %v5602 = vmul.f32 %v5588, %v5583
        %v5603 = vmul.f32 %v5588, %v5584
        %v5604 = vmul.f32 %v5588, %v5585
        %v5605 = vmul.f32 %v5588, %v5586
        %v5606 = vadd.f32 %v4643, %v5590
        %v5607 = vadd.f32 %v4644, %v5591
        %v5608 = vadd.f32 %v4645, %v5592
        %v5609 = vadd.f32 %v4646, %v5593
        %v5610 = vadd.f32 %v4647, %v5594
        %v5611 = vadd.f32 %v4648, %v5595
        %v5612 = vadd.f32 %v4649, %v5596
        %v5613 = vadd.f32 %v4650, %v5597
        %v5614 = vadd.f32 %v4651, %v5598
        %v5615 = vadd.f32 %v4652, %v5599
        %v5616 = vadd.f32 %v4653, %v5600
        %v5617 = vadd.f32 %v4654, %v5601
        %v5618 = vadd.f32 %v4655, %v5602
        %v5619 = vadd.f32 %v4656, %v5603
        %v5620 = vadd.f32 %v4657, %v5604
        %v5621 = vadd.f32 %v4658, %v5605
        %v5622 = vmul.f32 %v5606, %v5606
        %v5623 = vmul.f32 %v5607, %v5607
        %v5624 = vmul.f32 %v5608, %v5608
        %v5625 = vmul.f32 %v5609, %v5609
        %v5626 = vmul.f32 %v5610, %v5610
        %v5627 = vmul.f32 %v5611, %v5611
        %v5628 = vmul.f32 %v5612, %v5612
        %v5629 = vmul.f32 %v5613, %v5613
        %v5630 = vmul.f32 %v5614, %v5614
        %v5631 = vmul.f32 %v5615, %v5615
        %v5632 = vmul.f32 %v5616, %v5616
        %v5633 = vmul.f32 %v5617, %v5617
        %v5634 = vmul.f32 %v5618, %v5618
        %v5635 = vmul.f32 %v5619, %v5619
        %v5636 = vmul.f32 %v5620, %v5620
        %v5637 = vmul.f32 %v5621, %v5621
        %v5638 = vsel %vm1145, %v5622, 0.0
        %5639 = vadd.xlane.f32.xlu0 %v5638
        %v5640 = vpop.xlane.xlu0 %5639
        %v5641 = vsel %vm1145, %v5623, 0.0
        %5642 = vadd.xlane.f32.xlu0 %v5641
        %v5643 = vpop.xlane.xlu0 %5642
        %v5644 = vsel %vm1145, %v5624, 0.0
        %5645 = vadd.xlane.f32.xlu0 %v5644
        %v5646 = vpop.xlane.xlu0 %5645
        %v5647 = vsel %vm1145, %v5625, 0.0
        %5648 = vadd.xlane.f32.xlu0 %v5647
        %v5649 = vpop.xlane.xlu0 %5648
        %v5650 = vsel %vm1145, %v5626, 0.0
        %5651 = vadd.xlane.f32.xlu0 %v5650
        %v5652 = vpop.xlane.xlu0 %5651
        %v5653 = vsel %vm1145, %v5627, 0.0
        %5654 = vadd.xlane.f32.xlu0 %v5653
        %v5655 = vpop.xlane.xlu0 %5654
        %v5656 = vsel %vm1145, %v5628, 0.0
        %5657 = vadd.xlane.f32.xlu0 %v5656
        %v5658 = vpop.xlane.xlu0 %5657
        %v5659 = vsel %vm1145, %v5629, 0.0
        %5660 = vadd.xlane.f32.xlu0 %v5659
        %v5661 = vpop.xlane.xlu0 %5660
        %v5662 = vsel %vm1145, %v5630, 0.0
        %5663 = vadd.xlane.f32.xlu0 %v5662
        %v5664 = vpop.xlane.xlu0 %5663
        %v5665 = vsel %vm1145, %v5631, 0.0
        %5666 = vadd.xlane.f32.xlu0 %v5665
        %v5667 = vpop.xlane.xlu0 %5666
        %v5668 = vsel %vm1145, %v5632, 0.0
        %5669 = vadd.xlane.f32.xlu0 %v5668
        %v5670 = vpop.xlane.xlu0 %5669
        %v5671 = vsel %vm1145, %v5633, 0.0
        %5672 = vadd.xlane.f32.xlu0 %v5671
        %v5673 = vpop.xlane.xlu0 %5672
        %v5674 = vsel %vm1145, %v5634, 0.0
        %5675 = vadd.xlane.f32.xlu0 %v5674
        %v5676 = vpop.xlane.xlu0 %5675
        %v5677 = vsel %vm1145, %v5635, 0.0
        %5678 = vadd.xlane.f32.xlu0 %v5677
        %v5679 = vpop.xlane.xlu0 %5678
        %v5680 = vsel %vm1145, %v5636, 0.0
        %5681 = vadd.xlane.f32.xlu0 %v5680
        %v5682 = vpop.xlane.xlu0 %5681
        %v5683 = vsel %vm1145, %v5637, 0.0
        %5684 = vadd.xlane.f32.xlu0 %v5683
        %v5685 = vpop.xlane.xlu0 %5684
        %v5686 = vmax.f32 %v5640, 1e-24
        %v5687 = vmax.f32 %v5643, 1e-24
        %v5688 = vmax.f32 %v5646, 1e-24
        %v5689 = vmax.f32 %v5649, 1e-24
        %v5690 = vmax.f32 %v5652, 1e-24
        %v5691 = vmax.f32 %v5655, 1e-24
        %v5692 = vmax.f32 %v5658, 1e-24
        %v5693 = vmax.f32 %v5661, 1e-24
        %v5694 = vmax.f32 %v5664, 1e-24
        %v5695 = vmax.f32 %v5667, 1e-24
        %v5696 = vmax.f32 %v5670, 1e-24
        %v5697 = vmax.f32 %v5673, 1e-24
        %v5698 = vmax.f32 %v5676, 1e-24
        %v5699 = vmax.f32 %v5679, 1e-24
        %v5700 = vmax.f32 %v5682, 1e-24
        %v5701 = vmax.f32 %v5685, 1e-24
        %v5702 = vrsqrt.pop %v5686
        %v5703 = vmul.f32 %v5702, %v5686
        %v5704 = vmul.f32 %v5703, %v5702
        %v5705 = vmul.f32 0.5, %v5704
        %v5706 = vsub.f32 1.5, %v5705
        %v5707 = vmul.f32 %v5702, %v5706
        %vm5708 = vweird.f32 %v5686
        %vm5709 = vweird.f32 %v5702
        %vm5710 = vmor %vm5708, %vm5709
        %v5711 = vsel %vm5710, %v5702, %v5707
        %v5712 = vrsqrt.pop %v5687
        %v5713 = vmul.f32 %v5712, %v5687
        %v5714 = vmul.f32 %v5713, %v5712
        %v5715 = vmul.f32 0.5, %v5714
        %v5716 = vsub.f32 1.5, %v5715
        %v5717 = vmul.f32 %v5712, %v5716
        %vm5718 = vweird.f32 %v5687
        %vm5719 = vweird.f32 %v5712
        %vm5720 = vmor %vm5718, %vm5719
        %v5721 = vsel %vm5720, %v5712, %v5717
        %v5722 = vrsqrt.pop %v5688
        %v5723 = vmul.f32 %v5722, %v5688
        %v5724 = vmul.f32 %v5723, %v5722
        %v5725 = vmul.f32 0.5, %v5724
        %v5726 = vsub.f32 1.5, %v5725
        %v5727 = vmul.f32 %v5722, %v5726
        %vm5728 = vweird.f32 %v5688
        %vm5729 = vweird.f32 %v5722
        %vm5730 = vmor %vm5728, %vm5729
        %v5731 = vsel %vm5730, %v5722, %v5727
        %v5732 = vrsqrt.pop %v5689
        %v5733 = vmul.f32 %v5732, %v5689
        %v5734 = vmul.f32 %v5733, %v5732
        %v5735 = vmul.f32 0.5, %v5734
        %v5736 = vsub.f32 1.5, %v5735
        %v5737 = vmul.f32 %v5732, %v5736
        %vm5738 = vweird.f32 %v5689
        %vm5739 = vweird.f32 %v5732
        %vm5740 = vmor %vm5738, %vm5739
        %v5741 = vsel %vm5740, %v5732, %v5737
        %v5742 = vrsqrt.pop %v5690
        %v5743 = vmul.f32 %v5742, %v5690
        %v5744 = vmul.f32 %v5743, %v5742
        %v5745 = vmul.f32 0.5, %v5744
        %v5746 = vsub.f32 1.5, %v5745
        %v5747 = vmul.f32 %v5742, %v5746
        %vm5748 = vweird.f32 %v5690
        %vm5749 = vweird.f32 %v5742
        %vm5750 = vmor %vm5748, %vm5749
        %v5751 = vsel %vm5750, %v5742, %v5747
        %v5752 = vrsqrt.pop %v5691
        %v5753 = vmul.f32 %v5752, %v5691
        %v5754 = vmul.f32 %v5753, %v5752
        %v5755 = vmul.f32 0.5, %v5754
        %v5756 = vsub.f32 1.5, %v5755
        %v5757 = vmul.f32 %v5752, %v5756
        %vm5758 = vweird.f32 %v5691
        %vm5759 = vweird.f32 %v5752
        %vm5760 = vmor %vm5758, %vm5759
        %v5761 = vsel %vm5760, %v5752, %v5757
        %v5762 = vrsqrt.pop %v5692
        %v5763 = vmul.f32 %v5762, %v5692
        %v5764 = vmul.f32 %v5763, %v5762
        %v5765 = vmul.f32 0.5, %v5764
        %v5766 = vsub.f32 1.5, %v5765
        %v5767 = vmul.f32 %v5762, %v5766
        %vm5768 = vweird.f32 %v5692
        %vm5769 = vweird.f32 %v5762
        %vm5770 = vmor %vm5768, %vm5769
        %v5771 = vsel %vm5770, %v5762, %v5767
        %v5772 = vrsqrt.pop %v5693
        %v5773 = vmul.f32 %v5772, %v5693
        %v5774 = vmul.f32 %v5773, %v5772
        %v5775 = vmul.f32 0.5, %v5774
        %v5776 = vsub.f32 1.5, %v5775
        %v5777 = vmul.f32 %v5772, %v5776
        %vm5778 = vweird.f32 %v5693
        %vm5779 = vweird.f32 %v5772
        %vm5780 = vmor %vm5778, %vm5779
        %v5781 = vsel %vm5780, %v5772, %v5777
        %v5782 = vrsqrt.pop %v5694
        %v5783 = vmul.f32 %v5782, %v5694
        %v5784 = vmul.f32 %v5783, %v5782
        %v5785 = vmul.f32 0.5, %v5784
        %v5786 = vsub.f32 1.5, %v5785
        %v5787 = vmul.f32 %v5782, %v5786
        %vm5788 = vweird.f32 %v5694
        %vm5789 = vweird.f32 %v5782
        %vm5790 = vmor %vm5788, %vm5789
        %v5791 = vsel %vm5790, %v5782, %v5787
        %v5792 = vrsqrt.pop %v5695
        %v5793 = vmul.f32 %v5792, %v5695
        %v5794 = vmul.f32 %v5793, %v5792
        %v5795 = vmul.f32 0.5, %v5794
        %v5796 = vsub.f32 1.5, %v5795
        %v5797 = vmul.f32 %v5792, %v5796
        %vm5798 = vweird.f32 %v5695
        %vm5799 = vweird.f32 %v5792
        %vm5800 = vmor %vm5798, %vm5799
        %v5801 = vsel %vm5800, %v5792, %v5797
        %v5802 = vrsqrt.pop %v5696
        %v5803 = vmul.f32 %v5802, %v5696
        %v5804 = vmul.f32 %v5803, %v5802
        %v5805 = vmul.f32 0.5, %v5804
        %v5806 = vsub.f32 1.5, %v5805
        %v5807 = vmul.f32 %v5802, %v5806
        %vm5808 = vweird.f32 %v5696
        %vm5809 = vweird.f32 %v5802
        %vm5810 = vmor %vm5808, %vm5809
        %v5811 = vsel %vm5810, %v5802, %v5807
        %v5812 = vrsqrt.pop %v5697
        %v5813 = vmul.f32 %v5812, %v5697
        %v5814 = vmul.f32 %v5813, %v5812
        %v5815 = vmul.f32 0.5, %v5814
        %v5816 = vsub.f32 1.5, %v5815
        %v5817 = vmul.f32 %v5812, %v5816
        %vm5818 = vweird.f32 %v5697
        %vm5819 = vweird.f32 %v5812
        %vm5820 = vmor %vm5818, %vm5819
        %v5821 = vsel %vm5820, %v5812, %v5817
        %v5822 = vrsqrt.pop %v5698
        %v5823 = vmul.f32 %v5822, %v5698
        %v5824 = vmul.f32 %v5823, %v5822
        %v5825 = vmul.f32 0.5, %v5824
        %v5826 = vsub.f32 1.5, %v5825
        %v5827 = vmul.f32 %v5822, %v5826
        %vm5828 = vweird.f32 %v5698
        %vm5829 = vweird.f32 %v5822
        %vm5830 = vmor %vm5828, %vm5829
        %v5831 = vsel %vm5830, %v5822, %v5827
        %v5832 = vrsqrt.pop %v5699
        %v5833 = vmul.f32 %v5832, %v5699
        %v5834 = vmul.f32 %v5833, %v5832
        %v5835 = vmul.f32 0.5, %v5834
        %v5836 = vsub.f32 1.5, %v5835
        %v5837 = vmul.f32 %v5832, %v5836
        %vm5838 = vweird.f32 %v5699
        %vm5839 = vweird.f32 %v5832
        %vm5840 = vmor %vm5838, %vm5839
        %v5841 = vsel %vm5840, %v5832, %v5837
        %v5842 = vrsqrt.pop %v5700
        %v5843 = vmul.f32 %v5842, %v5700
        %v5844 = vmul.f32 %v5843, %v5842
        %v5845 = vmul.f32 0.5, %v5844
        %v5846 = vsub.f32 1.5, %v5845
        %v5847 = vmul.f32 %v5842, %v5846
        %vm5848 = vweird.f32 %v5700
        %vm5849 = vweird.f32 %v5842
        %vm5850 = vmor %vm5848, %vm5849
        %v5851 = vsel %vm5850, %v5842, %v5847
        %v5852 = vrsqrt.pop %v5701
        %v5853 = vmul.f32 %v5852, %v5701
        %v5854 = vmul.f32 %v5853, %v5852
        %v5855 = vmul.f32 0.5, %v5854
        %v5856 = vsub.f32 1.5, %v5855
        %v5857 = vmul.f32 %v5852, %v5856
        %vm5858 = vweird.f32 %v5701
        %vm5859 = vweird.f32 %v5852
        %vm5860 = vmor %vm5858, %vm5859
        %v5861 = vsel %vm5860, %v5852, %v5857
        %v5862 = vmul.f32 %v5606, %v5711
        %v5863 = vmul.f32 %v5607, %v5721
        %v5864 = vmul.f32 %v5608, %v5731
        %v5865 = vmul.f32 %v5609, %v5741
        %v5866 = vmul.f32 %v5610, %v5751
        %v5867 = vmul.f32 %v5611, %v5761
        %v5868 = vmul.f32 %v5612, %v5771
        %v5869 = vmul.f32 %v5613, %v5781
        %v5870 = vmul.f32 %v5614, %v5791
        %v5871 = vmul.f32 %v5615, %v5801
        %v5872 = vmul.f32 %v5616, %v5811
        %v5873 = vmul.f32 %v5617, %v5821
        %v5874 = vmul.f32 %v5618, %v5831
        %v5875 = vmul.f32 %v5619, %v5841
        %v5876 = vmul.f32 %v5620, %v5851
        %v5877 = vmul.f32 %v5621, %v5861
        %5878 = vst.msk [vmem:[#allocation2] sm:$0xff] %vm1145, %v5862
        %5879 = vst.msk [vmem:[#allocation2 + $0x8] sm:$0xff] %vm1145, %v5863
        %5880 = vst.msk [vmem:[#allocation2 + $0x10] sm:$0xff] %vm1145, %v5864
        %5881 = vst.msk [vmem:[#allocation2 + $0x18] sm:$0xff] %vm1145, %v5865
        %5882 = vst.msk [vmem:[#allocation2 + $0x20] sm:$0xff] %vm1145, %v5866
        %5883 = vst.msk [vmem:[#allocation2 + $0x28] sm:$0xff] %vm1145, %v5867
        %5884 = vst.msk [vmem:[#allocation2 + $0x30] sm:$0xff] %vm1145, %v5868
        %5885 = vst.msk [vmem:[#allocation2 + $0x38] sm:$0xff] %vm1145, %v5869
        %5886 = vst.msk [vmem:[#allocation2 + $0x40] sm:$0xff] %vm1145, %v5870
        %5887 = vst.msk [vmem:[#allocation2 + $0x48] sm:$0xff] %vm1145, %v5871
        %5888 = vst.msk [vmem:[#allocation2 + $0x50] sm:$0xff] %vm1145, %v5872
        %5889 = vst.msk [vmem:[#allocation2 + $0x58] sm:$0xff] %vm1145, %v5873
        %5890 = vst.msk [vmem:[#allocation2 + $0x60] sm:$0xff] %vm1145, %v5874
        %5891 = vst.msk [vmem:[#allocation2 + $0x68] sm:$0xff] %vm1145, %v5875
        %5892 = vst.msk [vmem:[#allocation2 + $0x70] sm:$0xff] %vm1145, %v5876
        %5893 = vst.msk [vmem:[#allocation2 + $0x78] sm:$0xff] %vm1145, %v5877
        %p5894 = scmp.eq.s32.totalorder %s34, 1
        // Predicated region
        $region85: #{_lambda_.1} parent=79 // pred_check
          %p5895 = pneg %p5894
        $region86: #{_lambda_.1} parent=79 // pred_check_branch
          %5897 = sbr.rel (%p5895) target = $region88
        $region87: #{_lambda_.1} parent=79 // pred_region
          %v5898 = vld [vmem:[%s12] sm:$0xff]
          %5899 = vmatpush.msra.mxu0 %v5877
          %5900 = vmatpush.msra.mxu0 %v5876
          %5901 = vmatpush.msra.mxu0 %v5875
          %5902 = vmatpush.msra.mxu0 %v5874
          %5903 = vmatpush.msra.mxu0 %v5873
          %5904 = vmatpush.msra.mxu0 %v5872
          %5905 = vmatpush.msra.mxu0 %v5871
          %5906 = vmatpush.msra.mxu0 %v5870
          %5907 = vmatpush.msra.mxu0 %v5869
          %5908 = vmatpush.msra.mxu0 %v5868
          %5909 = vmatpush.msra.mxu0 %v5867
          %5910 = vmatpush.msra.mxu0 %v5866
          %5911 = vmatpush.msra.mxu0 %v5865
          %5912 = vmatpush.msra.mxu0 %v5864
          %5913 = vmatpush.msra.mxu0 %v5863
          %5914 = vmatpush.msra.mxu0 %v5862
          %5915 = vmatmul.f32.gmra.mxu0 %v5898
          %v5916 = vpop.f32.mrf.mxu0
          %v5917 = vadd.f32 0.0, %v5916
          %5918 = vdwg.mxu0
          %v5919 = vpack.c.bf16 %v5917, %v5917
          %v5920 = vld [vmem:[%s13] sm:$0xf]
          %v5921 = vld [vmem:[%s13 + $0x4] sm:$0xf]
          %v5922 = vld [vmem:[%s13 + $0x8] sm:$0xf]
          %v5923 = vld [vmem:[%s13 + $0xc] sm:$0xf]
          %v5928 = vunpack.c.l.b16 %v5920
          %v5929 = vunpack.c.l.b16 %v5921
          %v5930 = vunpack.c.l.b16 %v5922
          %v5931 = vunpack.c.l.b16 %v5923
          %v5932 = vpack.c.b16 %v5929, %v5928
          %v5933 = vpack.c.b16 %v5931, %v5930
          %v5937 = vsel %vm1145, %v5919, 0
          %5939 = vmatpush.bf16.msra.mxu0 0
          %5940 = vmatpush.bf16.msra.mxu0 0
          %5941 = vmatpush.bf16.msra.mxu0 0
          %5942 = vmatpush.bf16.msra.mxu0 0
          %5943 = vmatpush.bf16.msra.mxu0 0
          %5944 = vmatpush.bf16.msra.mxu0 0
          %5945 = vmatpush.bf16.msra.mxu0 %v5933
          %5946 = vmatpush.bf16.msra.mxu0 %v5932
          %5947 = vmatmul.bf16.gmra.mxu0 %v5937
          %v5948 = vpop.f32.mrf.mxu0
          %v5949 = vadd.f32 0.0, %v5948
          %v5950 = vpop.f32.mrf.mxu0
          %5951 = vdwg.mxu0
          %v5952 = vld [vmem:[%s14] sm:$0x1]
          %v5954 = vperm.slane %v5952, 0
          %v5956 = vmul.f32 %v5949, %v5954
          %5957 = vst [vmem:[%s615] sm:$0xff] %v5956
        $region88: #{_lambda_.1} parent=79 // pred_fallthru
          _
        %s5958 = sand.u32 %s414, 1
        %s5959 = scalar_lea.sflag [#allocation4], %s5958
        %s5960 = sand.u32 %s414, 1
        %s5961 = smul.addr %s5960, 8
        %s5962 = scalar_lea.vmem [#allocation3], %s5961
        // Predicated region
        $region89: #{_lambda_.1} parent=79 // pred_check
          %p5963 = pneg %p424
        $region90: #{_lambda_.1} parent=79 // pred_check_branch
          %5965 = sbr.rel (%p5963) target = $region92
        $region91: #{_lambda_.1} parent=79 // pred_region
          %5967 = vsyncadd %s5959, 0
          %s5968 = smul.addr %s33, 8
          %s5969 = scalar_lea.hbm %s15, %s5968
          %s5971 = sshll.u32 %s5962, 4
          %s5972 = int_to_ptr.vmem [resolvable:$true] %s5971
          %s5973 = sshll.u32 %s5969, 4
          %s5974 = int_to_ptr.hbm [resolvable:$true] %s5973
          %5976 = dma.vmem_to_hbm [thread:$0]  %s5972, 128, %s5974, %s5959
        $region92: #{_lambda_.1} parent=79 // pred_fallthru
          _
      $region80: #{_lambda_.1} parent=5 // pred_fallthru
        _
      %p5977 = scmp.le.s32.totalorder 2, %s24
      // Predicated region
      $region93: #{_lambda_.1} parent=5 // pred_check
        %p5978 = pneg %p5977
      $region94: #{_lambda_.1} parent=5 // pred_check_branch
        %5980 = sbr.rel (%p5978) target = $region96
      $region95: #{_lambda_.1} parent=5 // pred_region
        %s5981 = ssub.s32 %s24, 2
        // Predicated region
        $region97: #{_lambda_.1} parent=95 // pred_check
          %p5982 = pneg %p430
        $region98: #{_lambda_.1} parent=95 // pred_check_branch
          %5984 = sbr.rel (%p5982) target = $region100
        $region99: #{_lambda_.1} parent=95 // pred_region
          %s5985 = sand.u32 %s415, 1
          %s5986 = scalar_lea.sflag [#allocation4], %s5985
          %s5987 = sand.u32 %s415, 1
          %s5988 = smul.addr %s5987, 8
          %s5989 = scalar_lea.vmem [#allocation3], %s5988
          %5991 = dma.done %s5986, 128
        $region100: #{_lambda_.1} parent=95 // pred_fallthru
          _
      $region96: #{_lambda_.1} parent=5 // pred_fallthru
        _
    $region6: #{_lambda_.1} parent=1 // loop_footer
      %s28 = sadd.s32 1, %s24
    $region7: #{_lambda_.1} parent=1 // loop_footer_branch
      %23 = sbr.rel target = $region3
    $region8: #{_lambda_.1} parent=1 // loop_exit
      _
    %5992 = vsyncpa [#allocation4], 1
    %s5993 = scalar_lea.sflag [#allocation4], 1
    %5994 = vsyncpa %s5993, 1

</llo_original>
